<compile_context>
chip_gen: v7x
topology: tpu7x:2x2x1
jax: 0.10.0
libtpu: 0.0.40
codegen_flags: <defaults>
</compile_context>

<pallas_src>
import jax
import jax.numpy as jnp
from jax.experimental import pallas as pl
from jax.experimental.pallas import tpu as pltpu


# ----------------------------------------------------------------------------
# Single fused kernel: all GRU layers (both directions) + head + loss + emb
# ----------------------------------------------------------------------------
# Packed weight layout (built once in init_params):
#   w_ih : (L, Din, 6H)  columns interleaved as [r_f r_b z_f z_b n_f n_b]
#   w_hh : (L, 2H, 6H)   block structured: rows 0:H feed fwd columns,
#                        rows H:2H feed bwd columns (zeros elsewhere)
#   b_x  : (L, 1, 6H)    b_ih(+ b_hh for r,z) in the same column layout
#   b_hn : (L, 1, 2H)    hidden n-gate bias [b_hn_f | b_hn_b] (applied per step)
#   w1t  : (2H, hidden)  FFNNe1 weight, pre-transposed
#   w2t  : (hidden, C)   FFNNe2 weight, pre-transposed
def fused_forward_kernel(x_ref, w_ih_ref, w_hh_ref, bx_ref, bhn_ref,
                         w1_ref, b1_ref, w2_ref, b2_ref, y_ref, emb_w_ref,
                         loss_ref, emb_out_ref):
    S, _ = x_ref.shape
    L = w_ih_ref.shape[0]
    H2 = w_hh_ref.shape[1]            # 2*H  ([h_fwd | h_bwd])
    H6 = w_hh_ref.shape[2]            # 6*H  (interleaved gate columns)
    H = H2 // 2
    H4 = 4 * H

    # Lane masks selecting forward-direction columns (built once, reused).
    lane6 = jax.lax.broadcasted_iota(jnp.int32, (S, H6), 1)
    fwd_cols6 = ((lane6 < H)
                 | ((lane6 >= 2 * H) & (lane6 < 3 * H))
                 | ((lane6 >= 4 * H) & (lane6 < 5 * H)))
    lane2 = jax.lax.broadcasted_iota(jnp.int32, (S, H2), 1)
    fwd_cols2 = lane2 < H

    def reverse_rows(a):
        # Static sublane reversal (S is small & static); off the hot chain.
        n = a.shape[0]
        return jnp.concatenate([a[n - 1 - t:n - t, :] for t in range(n)],
                               axis=0)

    x_l = x_ref[...].astype(jnp.float32)                      # (S, 2H)

    for layer in range(L):                                    # static unroll
        w_hh = w_hh_ref[layer]                                # (2H, 6H)
        b_hn = bhn_ref[layer]                                 # (1, 2H)

        # One fused input projection for all 6 gates of both directions.
        gx = jnp.dot(x_l, w_ih_ref[layer],
                     preferred_element_type=jnp.float32) + bx_ref[layer]  # (S,6H)

        # Hoisted direction select: row t carries fwd gates from time t and
        # bwd gates from time S-1-t -> the recurrence only slices a row.
        xg_all = jnp.where(fwd_cols6, gx, reverse_rows(gx))              # (S,6H)

        h = jnp.zeros((1, H2), jnp.float32)                   # h0 = 0 (PyTorch)
        h_steps = []                                          # stays in vregs

        for t in range(S):                                    # fully unrolled
            xg = xg_all[t:t + 1, :]                                       # (1,6H)
            # Single MXU call per step for r/z/n of BOTH directions.
            # TODO(synk): bundle-check whether w_hh is re-pushed each step; if
            # so, switch to pltpu.matmul_push_rhs once per layer + acc/pop.
            hg = jnp.dot(h, w_hh, preferred_element_type=jnp.float32)     # (1,6H)

            rz = jax.nn.sigmoid(xg[:, :H4] + hg[:, :H4])                  # (1,4H)
            r = rz[:, :H2]
            z = rz[:, H2:]
            n = jnp.tanh(xg[:, H4:] + r * (hg[:, H4:] + b_hn))            # (1,2H)
            h = (1.0 - z) * n + z * h                                     # (1,2H)
            h_steps.append(h)

        # Rebuild the time-ordered bidirectional output (fwd first == torch):
        # row t of h_all = [h_fwd(t) | h_bwd(S-1-t)]; reverse rows to realign
        # the backward half, then lane-select once.
        h_all = jnp.concatenate(h_steps, axis=0)                          # (S,2H)
        x_l = jnp.where(fwd_cols2, h_all, reverse_rows(h_all))            # (S,2H)

    rep = x_l

    # Head: FFNNe2(ReLU(FFNNe1(rep)))
    hid = jnp.maximum(
        jnp.dot(rep, w1_ref[...], preferred_element_type=jnp.float32)
        + b1_ref[...], 0.0)
    scores = jnp.dot(hid, w2_ref[...],
                     preferred_element_type=jnp.float32) + b2_ref[...]    # (S,C)

    y = y_ref[...]                                            # (S, 1) int32
    C = scores.shape[1]
    n_emb = emb_w_ref.shape[0]

    # Cross-entropy (mean reduction) with stable log-sum-exp.
    onehot_c = (jax.lax.broadcasted_iota(jnp.int32, (S, C), 1) == y
                ).astype(jnp.float32)                         # (S, C)
    m = jnp.max(scores, axis=1, keepdims=True)
    lse = m + jnp.log(jnp.sum(jnp.exp(scores - m), axis=1, keepdims=True))
    picked = jnp.sum(scores * onehot_c, axis=1, keepdims=True)
    loss_ref[...] = jnp.mean(lse - picked, keepdims=True)     # (1, 1)

    # Label-embedding lookup via one-hot matmul; reuse the CE one-hot when the
    # class count equals the embedding-table size (both 2 here).
    if n_emb == C:
        onehot_e = onehot_c
    else:
        onehot_e = (jax.lax.broadcasted_iota(jnp.int32, (S, n_emb), 1) == y
                    ).astype(jnp.float32)
    emb_out_ref[...] = jnp.dot(onehot_e, emb_w_ref[...],
                               preferred_element_type=jnp.float32)


# ----------------------------------------------------------------------------
# Forward wrapper (one pallas_call for the whole module)
# ----------------------------------------------------------------------------
@jax.jit
def cl_specific_rnn_forward(x, y, params):
    # TODO(synk): nn.Dropout in train mode is stochastic; implemented here as
    # eval-mode identity.
    S = x.shape[0]
    E = params["emb"].shape[1]
    y2d = y.reshape(-1, 1).astype(jnp.int32)

    loss, cl_embeddings = pl.pallas_call(
        fused_forward_kernel,
        out_shape=(jax.ShapeDtypeStruct((1, 1), jnp.float32),
                   jax.ShapeDtypeStruct((S, E), jnp.float32)),
        in_specs=[pl.BlockSpec(memory_space=pltpu.MemorySpace.VMEM)] * 11,
        out_specs=(pl.BlockSpec(memory_space=pltpu.MemorySpace.VMEM),
                   pl.BlockSpec(memory_space=pltpu.MemorySpace.VMEM)),
    )(x, params["w_ih"], params["w_hh"], params["b_x"], params["b_hn"],
      params["w1t"], params["b1"], params["w2t"], params["b2"], y2d,
      params["emb"])
    return {"loss": loss[0, 0]}, cl_embeddings


# ----------------------------------------------------------------------------
# Deterministic synthetic parameter init + packing into the kernel layout
# ----------------------------------------------------------------------------
def init_params(key, shared_layer_size, num_outputs, hidden_dim, num_layers,
                label_embeddings_size):
    H = shared_layer_size
    Din = 2 * shared_layer_size          # GRU input size for every layer
    stdv = 1.0 / (float(H) ** 0.5)

    def u(k, shape, scale):
        return jax.random.uniform(k, shape, jnp.float32, -scale, scale)

    keys = iter(jax.random.split(key, 8 * num_layers + 8))

    w_ih_layers, w_hh_layers, bx_layers, bhn_layers = [], [], [], []
    zH = jnp.zeros((H, H), jnp.float32)
    for _ in range(num_layers):
        # Raw PyTorch-style per-gate weights, gate order [r, z, n].
        w_ih_f = u(next(keys), (3, H, Din), stdv)
        w_hh_f = u(next(keys), (3, H, H), stdv)
        b_ih_f = u(next(keys), (3, 1, H), stdv)
        b_hh_f = u(next(keys), (3, 1, H), stdv)
        w_ih_b = u(next(keys), (3, H, Din), stdv)
        w_hh_b = u(next(keys), (3, H, H), stdv)
        b_ih_b = u(next(keys), (3, 1, H), stdv)
        b_hh_b = u(next(keys), (3, 1, H), stdv)

        # Pack into the interleaved [r_f r_b z_f z_b n_f n_b] column layout.
        w_ih_p = jnp.concatenate(
            [w_ih_f[0].T, w_ih_b[0].T,
             w_ih_f[1].T, w_ih_b[1].T,
             w_ih_f[2].T, w_ih_b[2].T], axis=1)                     # (Din, 6H)
        top = jnp.concatenate(
            [w_hh_f[0].T, zH, w_hh_f[1].T, zH, w_hh_f[2].T, zH], axis=1)
        bot = jnp.concatenate(
            [zH, w_hh_b[0].T, zH, w_hh_b[1].T, zH, w_hh_b[2].T], axis=1)
        w_hh_p = jnp.concatenate([top, bot], axis=0)                # (2H, 6H)
        b_x = jnp.concatenate(
            [b_ih_f[0] + b_hh_f[0], b_ih_b[0] + b_hh_b[0],          # r (+hh bias)
             b_ih_f[1] + b_hh_f[1], b_ih_b[1] + b_hh_b[1],          # z (+hh bias)
             b_ih_f[2],             b_ih_b[2]], axis=1)             # n (ih only)
        b_hn = jnp.concatenate([b_hh_f[2], b_hh_b[2]], axis=1)      # (1, 2H)

        w_ih_layers.append(w_ih_p)
        w_hh_layers.append(w_hh_p)
        bx_layers.append(b_x)
        bhn_layers.append(b_hn)

    s1 = 1.0 / (float(2 * H) ** 0.5)
    s2 = 1.0 / (float(hidden_dim) ** 0.5)
    w1 = u(next(keys), (hidden_dim, 2 * H), s1)
    b1 = u(next(keys), (1, hidden_dim), s1)
    w2 = u(next(keys), (num_outputs, hidden_dim), s2)
    b2 = u(next(keys), (1, num_outputs), s2)
    # xavier_uniform over the (2, E) embedding table (padding row overwritten
    # by xavier init, exactly as in the PyTorch __init__).
    emb = u(next(keys), (2, label_embeddings_size),
            (6.0 / (2 + label_embeddings_size)) ** 0.5)

    return {
        "w_ih": jnp.stack(w_ih_layers),     # (L, Din, 6H)
        "w_hh": jnp.stack(w_hh_layers),     # (L, 2H, 6H)
        "b_x": jnp.stack(bx_layers),        # (L, 1, 6H)
        "b_hn": jnp.stack(bhn_layers),      # (L, 1, 2H)
        "w1t": w1.T, "b1": b1,              # (2H, hidden), (1, hidden)
        "w2t": w2.T, "b2": b2,              # (hidden, C), (1, C)
        "emb": emb,                         # (2, E)
    }


if __name__ == "__main__":
    shared_layer_size = 32
    num_outputs = 2
    hidden_dim = 32
    num_layers = 2
    label_embeddings_size = 8
    S = 8  # sequence length (unbatched, time-major)

    root = jax.random.PRNGKey(0)
    k_params, k_x, k_y = jax.random.split(root, 3)

    params = init_params(k_params, shared_layer_size, num_outputs, hidden_dim,
                         num_layers, label_embeddings_size)
    x = jax.random.normal(k_x, (S, 2 * shared_layer_size), jnp.float32)
    Y = jax.random.randint(k_y, (S,), 0, 2, dtype=jnp.int32)

    out = cl_specific_rnn_forward(x, Y, params)
    jax.block_until_ready(out)

    loss_dict, cl_emb = out
    assert loss_dict["loss"].shape == ()
    assert cl_emb.shape == (S, label_embeddings_size)
    print("KERNEL_OK")
</pallas_src>

<mosaic_0001>
module attributes {stable_mosaic.version = 11 : i64} {
  func.func @fused_forward_kernel(%arg0: memref<8x64xf32, #tpu.memory_space<vmem>>, %arg1: memref<2x64x192xf32, #tpu.memory_space<vmem>>, %arg2: memref<2x64x192xf32, #tpu.memory_space<vmem>>, %arg3: memref<2x1x192xf32, #tpu.memory_space<vmem>>, %arg4: memref<2x1x64xf32, #tpu.memory_space<vmem>>, %arg5: memref<64x32xf32, #tpu.memory_space<vmem>>, %arg6: memref<1x32xf32, #tpu.memory_space<vmem>>, %arg7: memref<32x2xf32, #tpu.memory_space<vmem>>, %arg8: memref<1x2xf32, #tpu.memory_space<vmem>>, %arg9: memref<8x1xi32, #tpu.memory_space<vmem>>, %arg10: memref<2x8xf32, #tpu.memory_space<vmem>>, %arg11: memref<1x1xf32, #tpu.memory_space<vmem>>, %arg12: memref<8x8xf32, #tpu.memory_space<vmem>>) attributes {dimension_semantics = [], scalar_prefetch = 0 : i64, scratch_operands = 0 : i64, tpu.core_type = #tpu.core_type<tc>} {
    %0 = tpu.iota {dimensions = array<i32: 1>} : vector<8x192xi32>
    %c32_i32 = arith.constant 32 : i32
    %1 = vector.broadcast %c32_i32 : i32 to vector<8x192xi32>
    %2 = arith.cmpi slt, %0, %1 : vector<8x192xi32>
    %c64_i32 = arith.constant 64 : i32
    %3 = vector.broadcast %c64_i32 : i32 to vector<8x192xi32>
    %4 = arith.cmpi sge, %0, %3 : vector<8x192xi32>
    %c96_i32 = arith.constant 96 : i32
    %5 = vector.broadcast %c96_i32 : i32 to vector<8x192xi32>
    %6 = arith.cmpi slt, %0, %5 : vector<8x192xi32>
    %7 = arith.andi %4, %6 : vector<8x192xi1>
    %8 = arith.ori %2, %7 : vector<8x192xi1>
    %c128_i32 = arith.constant 128 : i32
    %9 = vector.broadcast %c128_i32 : i32 to vector<8x192xi32>
    %10 = arith.cmpi sge, %0, %9 : vector<8x192xi32>
    %c160_i32 = arith.constant 160 : i32
    %11 = vector.broadcast %c160_i32 : i32 to vector<8x192xi32>
    %12 = arith.cmpi slt, %0, %11 : vector<8x192xi32>
    %13 = arith.andi %10, %12 : vector<8x192xi1>
    %14 = arith.ori %8, %13 : vector<8x192xi1>
    %15 = tpu.iota {dimensions = array<i32: 1>} : vector<8x64xi32>
    %c32_i32_0 = arith.constant 32 : i32
    %16 = vector.broadcast %c32_i32_0 : i32 to vector<8x64xi32>
    %17 = arith.cmpi slt, %15, %16 : vector<8x64xi32>
    %c0 = arith.constant 0 : index
    %c0_1 = arith.constant 0 : index
    %18 = vector.load %arg0[%c0, %c0_1] : memref<8x64xf32, #tpu.memory_space<vmem>>, vector<8x64xf32>
    %c0_2 = arith.constant 0 : index
    %c0_3 = arith.constant 0 : index
    %c0_4 = arith.constant 0 : index
    %19 = vector.load %arg2[%c0_2, %c0_3, %c0_4] : memref<2x64x192xf32, #tpu.memory_space<vmem>>, vector<1x64x192xf32>
    %20 = vector.shape_cast %19 : vector<1x64x192xf32> to vector<64x192xf32>
    %c0_5 = arith.constant 0 : index
    %c0_6 = arith.constant 0 : index
    %c0_7 = arith.constant 0 : index
    %21 = vector.load %arg4[%c0_5, %c0_6, %c0_7] : memref<2x1x64xf32, #tpu.memory_space<vmem>>, vector<1x1x64xf32>
    %22 = vector.shape_cast %21 : vector<1x1x64xf32> to vector<1x64xf32>
    %c0_8 = arith.constant 0 : index
    %c0_9 = arith.constant 0 : index
    %c0_10 = arith.constant 0 : index
    %23 = vector.load %arg1[%c0_8, %c0_9, %c0_10] : memref<2x64x192xf32, #tpu.memory_space<vmem>>, vector<1x64x192xf32>
    %24 = vector.shape_cast %23 : vector<1x64x192xf32> to vector<64x192xf32>
    %cst = arith.constant dense<0.000000e+00> : vector<8x192xf32>
    %25 = tpu.matmul %18, %24, %cst {dimension_numbers = #tpu.dot_dimension_numbers<[1], [0], [0], [1], [0, 0, 1, 1], [], []>} : vector<8x64xf32>, vector<64x192xf32>, vector<8x192xf32> -> vector<8x192xf32>
    %c0_11 = arith.constant 0 : index
    %c0_12 = arith.constant 0 : index
    %c0_13 = arith.constant 0 : index
    %26 = vector.load %arg3[%c0_11, %c0_12, %c0_13] : memref<2x1x192xf32, #tpu.memory_space<vmem>>, vector<1x1x192xf32>
    %27 = vector.shape_cast %26 : vector<1x1x192xf32> to vector<1x192xf32>
    %28 = vector.broadcast %27 : vector<1x192xf32> to vector<8x192xf32>
    %29 = arith.addf %25, %28 : vector<8x192xf32>
    %30 = vector.extract_strided_slice %29 {offsets = [7, 0], sizes = [1, 192], strides = [1, 1]} : vector<8x192xf32> to vector<1x192xf32>
    %31 = vector.extract_strided_slice %29 {offsets = [6, 0], sizes = [1, 192], strides = [1, 1]} : vector<8x192xf32> to vector<1x192xf32>
    %32 = vector.extract_strided_slice %29 {offsets = [5, 0], sizes = [1, 192], strides = [1, 1]} : vector<8x192xf32> to vector<1x192xf32>
    %33 = vector.extract_strided_slice %29 {offsets = [4, 0], sizes = [1, 192], strides = [1, 1]} : vector<8x192xf32> to vector<1x192xf32>
    %34 = vector.extract_strided_slice %29 {offsets = [3, 0], sizes = [1, 192], strides = [1, 1]} : vector<8x192xf32> to vector<1x192xf32>
    %35 = vector.extract_strided_slice %29 {offsets = [2, 0], sizes = [1, 192], strides = [1, 1]} : vector<8x192xf32> to vector<1x192xf32>
    %36 = vector.extract_strided_slice %29 {offsets = [1, 0], sizes = [1, 192], strides = [1, 1]} : vector<8x192xf32> to vector<1x192xf32>
    %37 = vector.extract_strided_slice %29 {offsets = [0, 0], sizes = [1, 192], strides = [1, 1]} : vector<8x192xf32> to vector<1x192xf32>
    %38 = tpu.concatenate %30, %31, %32, %33, %34, %35, %36, %37 in 0 : vector<1x192xf32>, vector<1x192xf32>, vector<1x192xf32>, vector<1x192xf32>, vector<1x192xf32>, vector<1x192xf32>, vector<1x192xf32>, vector<1x192xf32> -> vector<8x192xf32>
    %39 = arith.select %14, %29, %38 : vector<8x192xi1>, vector<8x192xf32>
    %cst_14 = arith.constant 0.000000e+00 : f32
    %40 = vector.broadcast %cst_14 : f32 to vector<1x64xf32>
    %41 = vector.extract_strided_slice %39 {offsets = [0, 0], sizes = [1, 192], strides = [1, 1]} : vector<8x192xf32> to vector<1x192xf32>
    %cst_15 = arith.constant dense<0.000000e+00> : vector<1x192xf32>
    %42 = tpu.matmul %40, %20, %cst_15 {dimension_numbers = #tpu.dot_dimension_numbers<[1], [0], [0], [1], [0, 0, 1, 1], [], []>} : vector<1x64xf32>, vector<64x192xf32>, vector<1x192xf32> -> vector<1x192xf32>
    %43 = vector.extract_strided_slice %41 {offsets = [0, 0], sizes = [1, 128], strides = [1, 1]} : vector<1x192xf32> to vector<1x128xf32>
    %44 = vector.extract_strided_slice %42 {offsets = [0, 0], sizes = [1, 128], strides = [1, 1]} : vector<1x192xf32> to vector<1x128xf32>
    %45 = arith.addf %43, %44 : vector<1x128xf32>
    %46 = arith.negf %45 : vector<1x128xf32>
    %47 = math.exp %46 : vector<1x128xf32>
    %cst_16 = arith.constant 1.000000e+00 : f32
    %48 = vector.broadcast %cst_16 : f32 to vector<1x128xf32>
    %49 = arith.addf %48, %47 : vector<1x128xf32>
    %50 = arith.divf %48, %49 : vector<1x128xf32>
    %51 = vector.extract_strided_slice %50 {offsets = [0, 0], sizes = [1, 64], strides = [1, 1]} : vector<1x128xf32> to vector<1x64xf32>
    %52 = vector.extract_strided_slice %50 {offsets = [0, 64], sizes = [1, 64], strides = [1, 1]} : vector<1x128xf32> to vector<1x64xf32>
    %53 = vector.extract_strided_slice %41 {offsets = [0, 128], sizes = [1, 64], strides = [1, 1]} : vector<1x192xf32> to vector<1x64xf32>
    %54 = vector.extract_strided_slice %42 {offsets = [0, 128], sizes = [1, 64], strides = [1, 1]} : vector<1x192xf32> to vector<1x64xf32>
    %55 = arith.addf %54, %22 : vector<1x64xf32>
    %56 = arith.mulf %51, %55 : vector<1x64xf32>
    %57 = arith.addf %53, %56 : vector<1x64xf32>
    %58 = math.tanh %57 : vector<1x64xf32>
    %cst_17 = arith.constant 1.000000e+00 : f32
    %59 = vector.broadcast %cst_17 : f32 to vector<1x64xf32>
    %60 = arith.subf %59, %52 : vector<1x64xf32>
    %61 = arith.mulf %60, %58 : vector<1x64xf32>
    %62 = arith.mulf %52, %40 : vector<1x64xf32>
    %63 = arith.addf %61, %62 : vector<1x64xf32>
    %64 = vector.extract_strided_slice %39 {offsets = [1, 0], sizes = [1, 192], strides = [1, 1]} : vector<8x192xf32> to vector<1x192xf32>
    %cst_18 = arith.constant dense<0.000000e+00> : vector<1x192xf32>
    %65 = tpu.matmul %63, %20, %cst_18 {dimension_numbers = #tpu.dot_dimension_numbers<[1], [0], [0], [1], [0, 0, 1, 1], [], []>} : vector<1x64xf32>, vector<64x192xf32>, vector<1x192xf32> -> vector<1x192xf32>
    %66 = vector.extract_strided_slice %64 {offsets = [0, 0], sizes = [1, 128], strides = [1, 1]} : vector<1x192xf32> to vector<1x128xf32>
    %67 = vector.extract_strided_slice %65 {offsets = [0, 0], sizes = [1, 128], strides = [1, 1]} : vector<1x192xf32> to vector<1x128xf32>
    %68 = arith.addf %66, %67 : vector<1x128xf32>
    %69 = arith.negf %68 : vector<1x128xf32>
    %70 = math.exp %69 : vector<1x128xf32>
    %cst_19 = arith.constant 1.000000e+00 : f32
    %71 = vector.broadcast %cst_19 : f32 to vector<1x128xf32>
    %72 = arith.addf %71, %70 : vector<1x128xf32>
    %73 = arith.divf %71, %72 : vector<1x128xf32>
    %74 = vector.extract_strided_slice %73 {offsets = [0, 0], sizes = [1, 64], strides = [1, 1]} : vector<1x128xf32> to vector<1x64xf32>
    %75 = vector.extract_strided_slice %73 {offsets = [0, 64], sizes = [1, 64], strides = [1, 1]} : vector<1x128xf32> to vector<1x64xf32>
    %76 = vector.extract_strided_slice %64 {offsets = [0, 128], sizes = [1, 64], strides = [1, 1]} : vector<1x192xf32> to vector<1x64xf32>
    %77 = vector.extract_strided_slice %65 {offsets = [0, 128], sizes = [1, 64], strides = [1, 1]} : vector<1x192xf32> to vector<1x64xf32>
    %78 = arith.addf %77, %22 : vector<1x64xf32>
    %79 = arith.mulf %74, %78 : vector<1x64xf32>
    %80 = arith.addf %76, %79 : vector<1x64xf32>
    %81 = math.tanh %80 : vector<1x64xf32>
    %cst_20 = arith.constant 1.000000e+00 : f32
    %82 = vector.broadcast %cst_20 : f32 to vector<1x64xf32>
    %83 = arith.subf %82, %75 : vector<1x64xf32>
    %84 = arith.mulf %83, %81 : vector<1x64xf32>
    %85 = arith.mulf %75, %63 : vector<1x64xf32>
    %86 = arith.addf %84, %85 : vector<1x64xf32>
    %87 = vector.extract_strided_slice %39 {offsets = [2, 0], sizes = [1, 192], strides = [1, 1]} : vector<8x192xf32> to vector<1x192xf32>
    %cst_21 = arith.constant dense<0.000000e+00> : vector<1x192xf32>
    %88 = tpu.matmul %86, %20, %cst_21 {dimension_numbers = #tpu.dot_dimension_numbers<[1], [0], [0], [1], [0, 0, 1, 1], [], []>} : vector<1x64xf32>, vector<64x192xf32>, vector<1x192xf32> -> vector<1x192xf32>
    %89 = vector.extract_strided_slice %87 {offsets = [0, 0], sizes = [1, 128], strides = [1, 1]} : vector<1x192xf32> to vector<1x128xf32>
    %90 = vector.extract_strided_slice %88 {offsets = [0, 0], sizes = [1, 128], strides = [1, 1]} : vector<1x192xf32> to vector<1x128xf32>
    %91 = arith.addf %89, %90 : vector<1x128xf32>
    %92 = arith.negf %91 : vector<1x128xf32>
    %93 = math.exp %92 : vector<1x128xf32>
    %cst_22 = arith.constant 1.000000e+00 : f32
    %94 = vector.broadcast %cst_22 : f32 to vector<1x128xf32>
    %95 = arith.addf %94, %93 : vector<1x128xf32>
    %96 = arith.divf %94, %95 : vector<1x128xf32>
    %97 = vector.extract_strided_slice %96 {offsets = [0, 0], sizes = [1, 64], strides = [1, 1]} : vector<1x128xf32> to vector<1x64xf32>
    %98 = vector.extract_strided_slice %96 {offsets = [0, 64], sizes = [1, 64], strides = [1, 1]} : vector<1x128xf32> to vector<1x64xf32>
    %99 = vector.extract_strided_slice %87 {offsets = [0, 128], sizes = [1, 64], strides = [1, 1]} : vector<1x192xf32> to vector<1x64xf32>
    %100 = vector.extract_strided_slice %88 {offsets = [0, 128], sizes = [1, 64], strides = [1, 1]} : vector<1x192xf32> to vector<1x64xf32>
    %101 = arith.addf %100, %22 : vector<1x64xf32>
    %102 = arith.mulf %97, %101 : vector<1x64xf32>
    %103 = arith.addf %99, %102 : vector<1x64xf32>
    %104 = math.tanh %103 : vector<1x64xf32>
    %cst_23 = arith.constant 1.000000e+00 : f32
    %105 = vector.broadcast %cst_23 : f32 to vector<1x64xf32>
    %106 = arith.subf %105, %98 : vector<1x64xf32>
    %107 = arith.mulf %106, %104 : vector<1x64xf32>
    %108 = arith.mulf %98, %86 : vector<1x64xf32>
    %109 = arith.addf %107, %108 : vector<1x64xf32>
    %110 = vector.extract_strided_slice %39 {offsets = [3, 0], sizes = [1, 192], strides = [1, 1]} : vector<8x192xf32> to vector<1x192xf32>
    %cst_24 = arith.constant dense<0.000000e+00> : vector<1x192xf32>
    %111 = tpu.matmul %109, %20, %cst_24 {dimension_numbers = #tpu.dot_dimension_numbers<[1], [0], [0], [1], [0, 0, 1, 1], [], []>} : vector<1x64xf32>, vector<64x192xf32>, vector<1x192xf32> -> vector<1x192xf32>
    %112 = vector.extract_strided_slice %110 {offsets = [0, 0], sizes = [1, 128], strides = [1, 1]} : vector<1x192xf32> to vector<1x128xf32>
    %113 = vector.extract_strided_slice %111 {offsets = [0, 0], sizes = [1, 128], strides = [1, 1]} : vector<1x192xf32> to vector<1x128xf32>
    %114 = arith.addf %112, %113 : vector<1x128xf32>
    %115 = arith.negf %114 : vector<1x128xf32>
    %116 = math.exp %115 : vector<1x128xf32>
    %cst_25 = arith.constant 1.000000e+00 : f32
    %117 = vector.broadcast %cst_25 : f32 to vector<1x128xf32>
    %118 = arith.addf %117, %116 : vector<1x128xf32>
    %119 = arith.divf %117, %118 : vector<1x128xf32>
    %120 = vector.extract_strided_slice %119 {offsets = [0, 0], sizes = [1, 64], strides = [1, 1]} : vector<1x128xf32> to vector<1x64xf32>
    %121 = vector.extract_strided_slice %119 {offsets = [0, 64], sizes = [1, 64], strides = [1, 1]} : vector<1x128xf32> to vector<1x64xf32>
    %122 = vector.extract_strided_slice %110 {offsets = [0, 128], sizes = [1, 64], strides = [1, 1]} : vector<1x192xf32> to vector<1x64xf32>
    %123 = vector.extract_strided_slice %111 {offsets = [0, 128], sizes = [1, 64], strides = [1, 1]} : vector<1x192xf32> to vector<1x64xf32>
    %124 = arith.addf %123, %22 : vector<1x64xf32>
    %125 = arith.mulf %120, %124 : vector<1x64xf32>
    %126 = arith.addf %122, %125 : vector<1x64xf32>
    %127 = math.tanh %126 : vector<1x64xf32>
    %cst_26 = arith.constant 1.000000e+00 : f32
    %128 = vector.broadcast %cst_26 : f32 to vector<1x64xf32>
    %129 = arith.subf %128, %121 : vector<1x64xf32>
    %130 = arith.mulf %129, %127 : vector<1x64xf32>
    %131 = arith.mulf %121, %109 : vector<1x64xf32>
    %132 = arith.addf %130, %131 : vector<1x64xf32>
    %133 = vector.extract_strided_slice %39 {offsets = [4, 0], sizes = [1, 192], strides = [1, 1]} : vector<8x192xf32> to vector<1x192xf32>
    %cst_27 = arith.constant dense<0.000000e+00> : vector<1x192xf32>
    %134 = tpu.matmul %132, %20, %cst_27 {dimension_numbers = #tpu.dot_dimension_numbers<[1], [0], [0], [1], [0, 0, 1, 1], [], []>} : vector<1x64xf32>, vector<64x192xf32>, vector<1x192xf32> -> vector<1x192xf32>
    %135 = vector.extract_strided_slice %133 {offsets = [0, 0], sizes = [1, 128], strides = [1, 1]} : vector<1x192xf32> to vector<1x128xf32>
    %136 = vector.extract_strided_slice %134 {offsets = [0, 0], sizes = [1, 128], strides = [1, 1]} : vector<1x192xf32> to vector<1x128xf32>
    %137 = arith.addf %135, %136 : vector<1x128xf32>
    %138 = arith.negf %137 : vector<1x128xf32>
    %139 = math.exp %138 : vector<1x128xf32>
    %cst_28 = arith.constant 1.000000e+00 : f32
    %140 = vector.broadcast %cst_28 : f32 to vector<1x128xf32>
    %141 = arith.addf %140, %139 : vector<1x128xf32>
    %142 = arith.divf %140, %141 : vector<1x128xf32>
    %143 = vector.extract_strided_slice %142 {offsets = [0, 0], sizes = [1, 64], strides = [1, 1]} : vector<1x128xf32> to vector<1x64xf32>
    %144 = vector.extract_strided_slice %142 {offsets = [0, 64], sizes = [1, 64], strides = [1, 1]} : vector<1x128xf32> to vector<1x64xf32>
    %145 = vector.extract_strided_slice %133 {offsets = [0, 128], sizes = [1, 64], strides = [1, 1]} : vector<1x192xf32> to vector<1x64xf32>
    %146 = vector.extract_strided_slice %134 {offsets = [0, 128], sizes = [1, 64], strides = [1, 1]} : vector<1x192xf32> to vector<1x64xf32>
    %147 = arith.addf %146, %22 : vector<1x64xf32>
    %148 = arith.mulf %143, %147 : vector<1x64xf32>
    %149 = arith.addf %145, %148 : vector<1x64xf32>
    %150 = math.tanh %149 : vector<1x64xf32>
    %cst_29 = arith.constant 1.000000e+00 : f32
    %151 = vector.broadcast %cst_29 : f32 to vector<1x64xf32>
    %152 = arith.subf %151, %144 : vector<1x64xf32>
    %153 = arith.mulf %152, %150 : vector<1x64xf32>
    %154 = arith.mulf %144, %132 : vector<1x64xf32>
    %155 = arith.addf %153, %154 : vector<1x64xf32>
    %156 = vector.extract_strided_slice %39 {offsets = [5, 0], sizes = [1, 192], strides = [1, 1]} : vector<8x192xf32> to vector<1x192xf32>
    %cst_30 = arith.constant dense<0.000000e+00> : vector<1x192xf32>
    %157 = tpu.matmul %155, %20, %cst_30 {dimension_numbers = #tpu.dot_dimension_numbers<[1], [0], [0], [1], [0, 0, 1, 1], [], []>} : vector<1x64xf32>, vector<64x192xf32>, vector<1x192xf32> -> vector<1x192xf32>
    %158 = vector.extract_strided_slice %156 {offsets = [0, 0], sizes = [1, 128], strides = [1, 1]} : vector<1x192xf32> to vector<1x128xf32>
    %159 = vector.extract_strided_slice %157 {offsets = [0, 0], sizes = [1, 128], strides = [1, 1]} : vector<1x192xf32> to vector<1x128xf32>
    %160 = arith.addf %158, %159 : vector<1x128xf32>
    %161 = arith.negf %160 : vector<1x128xf32>
    %162 = math.exp %161 : vector<1x128xf32>
    %cst_31 = arith.constant 1.000000e+00 : f32
    %163 = vector.broadcast %cst_31 : f32 to vector<1x128xf32>
    %164 = arith.addf %163, %162 : vector<1x128xf32>
    %165 = arith.divf %163, %164 : vector<1x128xf32>
    %166 = vector.extract_strided_slice %165 {offsets = [0, 0], sizes = [1, 64], strides = [1, 1]} : vector<1x128xf32> to vector<1x64xf32>
    %167 = vector.extract_strided_slice %165 {offsets = [0, 64], sizes = [1, 64], strides = [1, 1]} : vector<1x128xf32> to vector<1x64xf32>
    %168 = vector.extract_strided_slice %156 {offsets = [0, 128], sizes = [1, 64], strides = [1, 1]} : vector<1x192xf32> to vector<1x64xf32>
    %169 = vector.extract_strided_slice %157 {offsets = [0, 128], sizes = [1, 64], strides = [1, 1]} : vector<1x192xf32> to vector<1x64xf32>
    %170 = arith.addf %169, %22 : vector<1x64xf32>
    %171 = arith.mulf %166, %170 : vector<1x64xf32>
    %172 = arith.addf %168, %171 : vector<1x64xf32>
    %173 = math.tanh %172 : vector<1x64xf32>
    %cst_32 = arith.constant 1.000000e+00 : f32
    %174 = vector.broadcast %cst_32 : f32 to vector<1x64xf32>
    %175 = arith.subf %174, %167 : vector<1x64xf32>
    %176 = arith.mulf %175, %173 : vector<1x64xf32>
    %177 = arith.mulf %167, %155 : vector<1x64xf32>
    %178 = arith.addf %176, %177 : vector<1x64xf32>
    %179 = vector.extract_strided_slice %39 {offsets = [6, 0], sizes = [1, 192], strides = [1, 1]} : vector<8x192xf32> to vector<1x192xf32>
    %cst_33 = arith.constant dense<0.000000e+00> : vector<1x192xf32>
    %180 = tpu.matmul %178, %20, %cst_33 {dimension_numbers = #tpu.dot_dimension_numbers<[1], [0], [0], [1], [0, 0, 1, 1], [], []>} : vector<1x64xf32>, vector<64x192xf32>, vector<1x192xf32> -> vector<1x192xf32>
    %181 = vector.extract_strided_slice %179 {offsets = [0, 0], sizes = [1, 128], strides = [1, 1]} : vector<1x192xf32> to vector<1x128xf32>
    %182 = vector.extract_strided_slice %180 {offsets = [0, 0], sizes = [1, 128], strides = [1, 1]} : vector<1x192xf32> to vector<1x128xf32>
    %183 = arith.addf %181, %182 : vector<1x128xf32>
    %184 = arith.negf %183 : vector<1x128xf32>
    %185 = math.exp %184 : vector<1x128xf32>
    %cst_34 = arith.constant 1.000000e+00 : f32
    %186 = vector.broadcast %cst_34 : f32 to vector<1x128xf32>
    %187 = arith.addf %186, %185 : vector<1x128xf32>
    %188 = arith.divf %186, %187 : vector<1x128xf32>
    %189 = vector.extract_strided_slice %188 {offsets = [0, 0], sizes = [1, 64], strides = [1, 1]} : vector<1x128xf32> to vector<1x64xf32>
    %190 = vector.extract_strided_slice %188 {offsets = [0, 64], sizes = [1, 64], strides = [1, 1]} : vector<1x128xf32> to vector<1x64xf32>
    %191 = vector.extract_strided_slice %179 {offsets = [0, 128], sizes = [1, 64], strides = [1, 1]} : vector<1x192xf32> to vector<1x64xf32>
    %192 = vector.extract_strided_slice %180 {offsets = [0, 128], sizes = [1, 64], strides = [1, 1]} : vector<1x192xf32> to vector<1x64xf32>
    %193 = arith.addf %192, %22 : vector<1x64xf32>
    %194 = arith.mulf %189, %193 : vector<1x64xf32>
    %195 = arith.addf %191, %194 : vector<1x64xf32>
    %196 = math.tanh %195 : vector<1x64xf32>
    %cst_35 = arith.constant 1.000000e+00 : f32
    %197 = vector.broadcast %cst_35 : f32 to vector<1x64xf32>
    %198 = arith.subf %197, %190 : vector<1x64xf32>
    %199 = arith.mulf %198, %196 : vector<1x64xf32>
    %200 = arith.mulf %190, %178 : vector<1x64xf32>
    %201 = arith.addf %199, %200 : vector<1x64xf32>
    %202 = vector.extract_strided_slice %39 {offsets = [7, 0], sizes = [1, 192], strides = [1, 1]} : vector<8x192xf32> to vector<1x192xf32>
    %cst_36 = arith.constant dense<0.000000e+00> : vector<1x192xf32>
    %203 = tpu.matmul %201, %20, %cst_36 {dimension_numbers = #tpu.dot_dimension_numbers<[1], [0], [0], [1], [0, 0, 1, 1], [], []>} : vector<1x64xf32>, vector<64x192xf32>, vector<1x192xf32> -> vector<1x192xf32>
    %204 = vector.extract_strided_slice %202 {offsets = [0, 0], sizes = [1, 128], strides = [1, 1]} : vector<1x192xf32> to vector<1x128xf32>
    %205 = vector.extract_strided_slice %203 {offsets = [0, 0], sizes = [1, 128], strides = [1, 1]} : vector<1x192xf32> to vector<1x128xf32>
    %206 = arith.addf %204, %205 : vector<1x128xf32>
    %207 = arith.negf %206 : vector<1x128xf32>
    %208 = math.exp %207 : vector<1x128xf32>
    %cst_37 = arith.constant 1.000000e+00 : f32
    %209 = vector.broadcast %cst_37 : f32 to vector<1x128xf32>
    %210 = arith.addf %209, %208 : vector<1x128xf32>
    %211 = arith.divf %209, %210 : vector<1x128xf32>
    %212 = vector.extract_strided_slice %211 {offsets = [0, 0], sizes = [1, 64], strides = [1, 1]} : vector<1x128xf32> to vector<1x64xf32>
    %213 = vector.extract_strided_slice %211 {offsets = [0, 64], sizes = [1, 64], strides = [1, 1]} : vector<1x128xf32> to vector<1x64xf32>
    %214 = vector.extract_strided_slice %202 {offsets = [0, 128], sizes = [1, 64], strides = [1, 1]} : vector<1x192xf32> to vector<1x64xf32>
    %215 = vector.extract_strided_slice %203 {offsets = [0, 128], sizes = [1, 64], strides = [1, 1]} : vector<1x192xf32> to vector<1x64xf32>
    %216 = arith.addf %215, %22 : vector<1x64xf32>
    %217 = arith.mulf %212, %216 : vector<1x64xf32>
    %218 = arith.addf %214, %217 : vector<1x64xf32>
    %219 = math.tanh %218 : vector<1x64xf32>
    %cst_38 = arith.constant 1.000000e+00 : f32
    %220 = vector.broadcast %cst_38 : f32 to vector<1x64xf32>
    %221 = arith.subf %220, %213 : vector<1x64xf32>
    %222 = arith.mulf %221, %219 : vector<1x64xf32>
    %223 = arith.mulf %213, %201 : vector<1x64xf32>
    %224 = arith.addf %222, %223 : vector<1x64xf32>
    %225 = tpu.concatenate %63, %86, %109, %132, %155, %178, %201, %224 in 0 : vector<1x64xf32>, vector<1x64xf32>, vector<1x64xf32>, vector<1x64xf32>, vector<1x64xf32>, vector<1x64xf32>, vector<1x64xf32>, vector<1x64xf32> -> vector<8x64xf32>
    %226 = vector.extract_strided_slice %225 {offsets = [7, 0], sizes = [1, 64], strides = [1, 1]} : vector<8x64xf32> to vector<1x64xf32>
    %227 = vector.extract_strided_slice %225 {offsets = [6, 0], sizes = [1, 64], strides = [1, 1]} : vector<8x64xf32> to vector<1x64xf32>
    %228 = vector.extract_strided_slice %225 {offsets = [5, 0], sizes = [1, 64], strides = [1, 1]} : vector<8x64xf32> to vector<1x64xf32>
    %229 = vector.extract_strided_slice %225 {offsets = [4, 0], sizes = [1, 64], strides = [1, 1]} : vector<8x64xf32> to vector<1x64xf32>
    %230 = vector.extract_strided_slice %225 {offsets = [3, 0], sizes = [1, 64], strides = [1, 1]} : vector<8x64xf32> to vector<1x64xf32>
    %231 = vector.extract_strided_slice %225 {offsets = [2, 0], sizes = [1, 64], strides = [1, 1]} : vector<8x64xf32> to vector<1x64xf32>
    %232 = vector.extract_strided_slice %225 {offsets = [1, 0], sizes = [1, 64], strides = [1, 1]} : vector<8x64xf32> to vector<1x64xf32>
    %233 = vector.extract_strided_slice %225 {offsets = [0, 0], sizes = [1, 64], strides = [1, 1]} : vector<8x64xf32> to vector<1x64xf32>
    %234 = tpu.concatenate %226, %227, %228, %229, %230, %231, %232, %233 in 0 : vector<1x64xf32>, vector<1x64xf32>, vector<1x64xf32>, vector<1x64xf32>, vector<1x64xf32>, vector<1x64xf32>, vector<1x64xf32>, vector<1x64xf32> -> vector<8x64xf32>
    %235 = arith.select %17, %225, %234 : vector<8x64xi1>, vector<8x64xf32>
    %c1 = arith.constant 1 : index
    %c0_39 = arith.constant 0 : index
    %c0_40 = arith.constant 0 : index
    %236 = vector.load %arg2[%c1, %c0_39, %c0_40] : memref<2x64x192xf32, #tpu.memory_space<vmem>>, vector<1x64x192xf32>
    %237 = vector.shape_cast %236 : vector<1x64x192xf32> to vector<64x192xf32>
    %c1_41 = arith.constant 1 : index
    %c0_42 = arith.constant 0 : index
    %c0_43 = arith.constant 0 : index
    %238 = vector.load %arg4[%c1_41, %c0_42, %c0_43] : memref<2x1x64xf32, #tpu.memory_space<vmem>>, vector<1x1x64xf32>
    %239 = vector.shape_cast %238 : vector<1x1x64xf32> to vector<1x64xf32>
    %c1_44 = arith.constant 1 : index
    %c0_45 = arith.constant 0 : index
    %c0_46 = arith.constant 0 : index
    %240 = vector.load %arg1[%c1_44, %c0_45, %c0_46] : memref<2x64x192xf32, #tpu.memory_space<vmem>>, vector<1x64x192xf32>
    %241 = vector.shape_cast %240 : vector<1x64x192xf32> to vector<64x192xf32>
    %cst_47 = arith.constant dense<0.000000e+00> : vector<8x192xf32>
    %242 = tpu.matmul %235, %241, %cst_47 {dimension_numbers = #tpu.dot_dimension_numbers<[1], [0], [0], [1], [0, 0, 1, 1], [], []>} : vector<8x64xf32>, vector<64x192xf32>, vector<8x192xf32> -> vector<8x192xf32>
    %c1_48 = arith.constant 1 : index
    %c0_49 = arith.constant 0 : index
    %c0_50 = arith.constant 0 : index
    %243 = vector.load %arg3[%c1_48, %c0_49, %c0_50] : memref<2x1x192xf32, #tpu.memory_space<vmem>>, vector<1x1x192xf32>
    %244 = vector.shape_cast %243 : vector<1x1x192xf32> to vector<1x192xf32>
    %245 = vector.broadcast %244 : vector<1x192xf32> to vector<8x192xf32>
    %246 = arith.addf %242, %245 : vector<8x192xf32>
    %247 = vector.extract_strided_slice %246 {offsets = [7, 0], sizes = [1, 192], strides = [1, 1]} : vector<8x192xf32> to vector<1x192xf32>
    %248 = vector.extract_strided_slice %246 {offsets = [6, 0], sizes = [1, 192], strides = [1, 1]} : vector<8x192xf32> to vector<1x192xf32>
    %249 = vector.extract_strided_slice %246 {offsets = [5, 0], sizes = [1, 192], strides = [1, 1]} : vector<8x192xf32> to vector<1x192xf32>
    %250 = vector.extract_strided_slice %246 {offsets = [4, 0], sizes = [1, 192], strides = [1, 1]} : vector<8x192xf32> to vector<1x192xf32>
    %251 = vector.extract_strided_slice %246 {offsets = [3, 0], sizes = [1, 192], strides = [1, 1]} : vector<8x192xf32> to vector<1x192xf32>
    %252 = vector.extract_strided_slice %246 {offsets = [2, 0], sizes = [1, 192], strides = [1, 1]} : vector<8x192xf32> to vector<1x192xf32>
    %253 = vector.extract_strided_slice %246 {offsets = [1, 0], sizes = [1, 192], strides = [1, 1]} : vector<8x192xf32> to vector<1x192xf32>
    %254 = vector.extract_strided_slice %246 {offsets = [0, 0], sizes = [1, 192], strides = [1, 1]} : vector<8x192xf32> to vector<1x192xf32>
    %255 = tpu.concatenate %247, %248, %249, %250, %251, %252, %253, %254 in 0 : vector<1x192xf32>, vector<1x192xf32>, vector<1x192xf32>, vector<1x192xf32>, vector<1x192xf32>, vector<1x192xf32>, vector<1x192xf32>, vector<1x192xf32> -> vector<8x192xf32>
    %256 = arith.select %14, %246, %255 : vector<8x192xi1>, vector<8x192xf32>
    %cst_51 = arith.constant 0.000000e+00 : f32
    %257 = vector.broadcast %cst_51 : f32 to vector<1x64xf32>
    %258 = vector.extract_strided_slice %256 {offsets = [0, 0], sizes = [1, 192], strides = [1, 1]} : vector<8x192xf32> to vector<1x192xf32>
    %cst_52 = arith.constant dense<0.000000e+00> : vector<1x192xf32>
    %259 = tpu.matmul %257, %237, %cst_52 {dimension_numbers = #tpu.dot_dimension_numbers<[1], [0], [0], [1], [0, 0, 1, 1], [], []>} : vector<1x64xf32>, vector<64x192xf32>, vector<1x192xf32> -> vector<1x192xf32>
    %260 = vector.extract_strided_slice %258 {offsets = [0, 0], sizes = [1, 128], strides = [1, 1]} : vector<1x192xf32> to vector<1x128xf32>
    %261 = vector.extract_strided_slice %259 {offsets = [0, 0], sizes = [1, 128], strides = [1, 1]} : vector<1x192xf32> to vector<1x128xf32>
    %262 = arith.addf %260, %261 : vector<1x128xf32>
    %263 = arith.negf %262 : vector<1x128xf32>
    %264 = math.exp %263 : vector<1x128xf32>
    %cst_53 = arith.constant 1.000000e+00 : f32
    %265 = vector.broadcast %cst_53 : f32 to vector<1x128xf32>
    %266 = arith.addf %265, %264 : vector<1x128xf32>
    %267 = arith.divf %265, %266 : vector<1x128xf32>
    %268 = vector.extract_strided_slice %267 {offsets = [0, 0], sizes = [1, 64], strides = [1, 1]} : vector<1x128xf32> to vector<1x64xf32>
    %269 = vector.extract_strided_slice %267 {offsets = [0, 64], sizes = [1, 64], strides = [1, 1]} : vector<1x128xf32> to vector<1x64xf32>
    %270 = vector.extract_strided_slice %258 {offsets = [0, 128], sizes = [1, 64], strides = [1, 1]} : vector<1x192xf32> to vector<1x64xf32>
    %271 = vector.extract_strided_slice %259 {offsets = [0, 128], sizes = [1, 64], strides = [1, 1]} : vector<1x192xf32> to vector<1x64xf32>
    %272 = arith.addf %271, %239 : vector<1x64xf32>
    %273 = arith.mulf %268, %272 : vector<1x64xf32>
    %274 = arith.addf %270, %273 : vector<1x64xf32>
    %275 = math.tanh %274 : vector<1x64xf32>
    %cst_54 = arith.constant 1.000000e+00 : f32
    %276 = vector.broadcast %cst_54 : f32 to vector<1x64xf32>
    %277 = arith.subf %276, %269 : vector<1x64xf32>
    %278 = arith.mulf %277, %275 : vector<1x64xf32>
    %279 = arith.mulf %269, %257 : vector<1x64xf32>
    %280 = arith.addf %278, %279 : vector<1x64xf32>
    %281 = vector.extract_strided_slice %256 {offsets = [1, 0], sizes = [1, 192], strides = [1, 1]} : vector<8x192xf32> to vector<1x192xf32>
    %cst_55 = arith.constant dense<0.000000e+00> : vector<1x192xf32>
    %282 = tpu.matmul %280, %237, %cst_55 {dimension_numbers = #tpu.dot_dimension_numbers<[1], [0], [0], [1], [0, 0, 1, 1], [], []>} : vector<1x64xf32>, vector<64x192xf32>, vector<1x192xf32> -> vector<1x192xf32>
    %283 = vector.extract_strided_slice %281 {offsets = [0, 0], sizes = [1, 128], strides = [1, 1]} : vector<1x192xf32> to vector<1x128xf32>
    %284 = vector.extract_strided_slice %282 {offsets = [0, 0], sizes = [1, 128], strides = [1, 1]} : vector<1x192xf32> to vector<1x128xf32>
    %285 = arith.addf %283, %284 : vector<1x128xf32>
    %286 = arith.negf %285 : vector<1x128xf32>
    %287 = math.exp %286 : vector<1x128xf32>
    %cst_56 = arith.constant 1.000000e+00 : f32
    %288 = vector.broadcast %cst_56 : f32 to vector<1x128xf32>
    %289 = arith.addf %288, %287 : vector<1x128xf32>
    %290 = arith.divf %288, %289 : vector<1x128xf32>
    %291 = vector.extract_strided_slice %290 {offsets = [0, 0], sizes = [1, 64], strides = [1, 1]} : vector<1x128xf32> to vector<1x64xf32>
    %292 = vector.extract_strided_slice %290 {offsets = [0, 64], sizes = [1, 64], strides = [1, 1]} : vector<1x128xf32> to vector<1x64xf32>
    %293 = vector.extract_strided_slice %281 {offsets = [0, 128], sizes = [1, 64], strides = [1, 1]} : vector<1x192xf32> to vector<1x64xf32>
    %294 = vector.extract_strided_slice %282 {offsets = [0, 128], sizes = [1, 64], strides = [1, 1]} : vector<1x192xf32> to vector<1x64xf32>
    %295 = arith.addf %294, %239 : vector<1x64xf32>
    %296 = arith.mulf %291, %295 : vector<1x64xf32>
    %297 = arith.addf %293, %296 : vector<1x64xf32>
    %298 = math.tanh %297 : vector<1x64xf32>
    %cst_57 = arith.constant 1.000000e+00 : f32
    %299 = vector.broadcast %cst_57 : f32 to vector<1x64xf32>
    %300 = arith.subf %299, %292 : vector<1x64xf32>
    %301 = arith.mulf %300, %298 : vector<1x64xf32>
    %302 = arith.mulf %292, %280 : vector<1x64xf32>
    %303 = arith.addf %301, %302 : vector<1x64xf32>
    %304 = vector.extract_strided_slice %256 {offsets = [2, 0], sizes = [1, 192], strides = [1, 1]} : vector<8x192xf32> to vector<1x192xf32>
    %cst_58 = arith.constant dense<0.000000e+00> : vector<1x192xf32>
    %305 = tpu.matmul %303, %237, %cst_58 {dimension_numbers = #tpu.dot_dimension_numbers<[1], [0], [0], [1], [0, 0, 1, 1], [], []>} : vector<1x64xf32>, vector<64x192xf32>, vector<1x192xf32> -> vector<1x192xf32>
    %306 = vector.extract_strided_slice %304 {offsets = [0, 0], sizes = [1, 128], strides = [1, 1]} : vector<1x192xf32> to vector<1x128xf32>
    %307 = vector.extract_strided_slice %305 {offsets = [0, 0], sizes = [1, 128], strides = [1, 1]} : vector<1x192xf32> to vector<1x128xf32>
    %308 = arith.addf %306, %307 : vector<1x128xf32>
    %309 = arith.negf %308 : vector<1x128xf32>
    %310 = math.exp %309 : vector<1x128xf32>
    %cst_59 = arith.constant 1.000000e+00 : f32
    %311 = vector.broadcast %cst_59 : f32 to vector<1x128xf32>
    %312 = arith.addf %311, %310 : vector<1x128xf32>
    %313 = arith.divf %311, %312 : vector<1x128xf32>
    %314 = vector.extract_strided_slice %313 {offsets = [0, 0], sizes = [1, 64], strides = [1, 1]} : vector<1x128xf32> to vector<1x64xf32>
    %315 = vector.extract_strided_slice %313 {offsets = [0, 64], sizes = [1, 64], strides = [1, 1]} : vector<1x128xf32> to vector<1x64xf32>
    %316 = vector.extract_strided_slice %304 {offsets = [0, 128], sizes = [1, 64], strides = [1, 1]} : vector<1x192xf32> to vector<1x64xf32>
    %317 = vector.extract_strided_slice %305 {offsets = [0, 128], sizes = [1, 64], strides = [1, 1]} : vector<1x192xf32> to vector<1x64xf32>
    %318 = arith.addf %317, %239 : vector<1x64xf32>
    %319 = arith.mulf %314, %318 : vector<1x64xf32>
    %320 = arith.addf %316, %319 : vector<1x64xf32>
    %321 = math.tanh %320 : vector<1x64xf32>
    %cst_60 = arith.constant 1.000000e+00 : f32
    %322 = vector.broadcast %cst_60 : f32 to vector<1x64xf32>
    %323 = arith.subf %322, %315 : vector<1x64xf32>
    %324 = arith.mulf %323, %321 : vector<1x64xf32>
    %325 = arith.mulf %315, %303 : vector<1x64xf32>
    %326 = arith.addf %324, %325 : vector<1x64xf32>
    %327 = vector.extract_strided_slice %256 {offsets = [3, 0], sizes = [1, 192], strides = [1, 1]} : vector<8x192xf32> to vector<1x192xf32>
    %cst_61 = arith.constant dense<0.000000e+00> : vector<1x192xf32>
    %328 = tpu.matmul %326, %237, %cst_61 {dimension_numbers = #tpu.dot_dimension_numbers<[1], [0], [0], [1], [0, 0, 1, 1], [], []>} : vector<1x64xf32>, vector<64x192xf32>, vector<1x192xf32> -> vector<1x192xf32>
    %329 = vector.extract_strided_slice %327 {offsets = [0, 0], sizes = [1, 128], strides = [1, 1]} : vector<1x192xf32> to vector<1x128xf32>
    %330 = vector.extract_strided_slice %328 {offsets = [0, 0], sizes = [1, 128], strides = [1, 1]} : vector<1x192xf32> to vector<1x128xf32>
    %331 = arith.addf %329, %330 : vector<1x128xf32>
    %332 = arith.negf %331 : vector<1x128xf32>
    %333 = math.exp %332 : vector<1x128xf32>
    %cst_62 = arith.constant 1.000000e+00 : f32
    %334 = vector.broadcast %cst_62 : f32 to vector<1x128xf32>
    %335 = arith.addf %334, %333 : vector<1x128xf32>
    %336 = arith.divf %334, %335 : vector<1x128xf32>
    %337 = vector.extract_strided_slice %336 {offsets = [0, 0], sizes = [1, 64], strides = [1, 1]} : vector<1x128xf32> to vector<1x64xf32>
    %338 = vector.extract_strided_slice %336 {offsets = [0, 64], sizes = [1, 64], strides = [1, 1]} : vector<1x128xf32> to vector<1x64xf32>
    %339 = vector.extract_strided_slice %327 {offsets = [0, 128], sizes = [1, 64], strides = [1, 1]} : vector<1x192xf32> to vector<1x64xf32>
    %340 = vector.extract_strided_slice %328 {offsets = [0, 128], sizes = [1, 64], strides = [1, 1]} : vector<1x192xf32> to vector<1x64xf32>
    %341 = arith.addf %340, %239 : vector<1x64xf32>
    %342 = arith.mulf %337, %341 : vector<1x64xf32>
    %343 = arith.addf %339, %342 : vector<1x64xf32>
    %344 = math.tanh %343 : vector<1x64xf32>
    %cst_63 = arith.constant 1.000000e+00 : f32
    %345 = vector.broadcast %cst_63 : f32 to vector<1x64xf32>
    %346 = arith.subf %345, %338 : vector<1x64xf32>
    %347 = arith.mulf %346, %344 : vector<1x64xf32>
    %348 = arith.mulf %338, %326 : vector<1x64xf32>
    %349 = arith.addf %347, %348 : vector<1x64xf32>
    %350 = vector.extract_strided_slice %256 {offsets = [4, 0], sizes = [1, 192], strides = [1, 1]} : vector<8x192xf32> to vector<1x192xf32>
    %cst_64 = arith.constant dense<0.000000e+00> : vector<1x192xf32>
    %351 = tpu.matmul %349, %237, %cst_64 {dimension_numbers = #tpu.dot_dimension_numbers<[1], [0], [0], [1], [0, 0, 1, 1], [], []>} : vector<1x64xf32>, vector<64x192xf32>, vector<1x192xf32> -> vector<1x192xf32>
    %352 = vector.extract_strided_slice %350 {offsets = [0, 0], sizes = [1, 128], strides = [1, 1]} : vector<1x192xf32> to vector<1x128xf32>
    %353 = vector.extract_strided_slice %351 {offsets = [0, 0], sizes = [1, 128], strides = [1, 1]} : vector<1x192xf32> to vector<1x128xf32>
    %354 = arith.addf %352, %353 : vector<1x128xf32>
    %355 = arith.negf %354 : vector<1x128xf32>
    %356 = math.exp %355 : vector<1x128xf32>
    %cst_65 = arith.constant 1.000000e+00 : f32
    %357 = vector.broadcast %cst_65 : f32 to vector<1x128xf32>
    %358 = arith.addf %357, %356 : vector<1x128xf32>
    %359 = arith.divf %357, %358 : vector<1x128xf32>
    %360 = vector.extract_strided_slice %359 {offsets = [0, 0], sizes = [1, 64], strides = [1, 1]} : vector<1x128xf32> to vector<1x64xf32>
    %361 = vector.extract_strided_slice %359 {offsets = [0, 64], sizes = [1, 64], strides = [1, 1]} : vector<1x128xf32> to vector<1x64xf32>
    %362 = vector.extract_strided_slice %350 {offsets = [0, 128], sizes = [1, 64], strides = [1, 1]} : vector<1x192xf32> to vector<1x64xf32>
    %363 = vector.extract_strided_slice %351 {offsets = [0, 128], sizes = [1, 64], strides = [1, 1]} : vector<1x192xf32> to vector<1x64xf32>
    %364 = arith.addf %363, %239 : vector<1x64xf32>
    %365 = arith.mulf %360, %364 : vector<1x64xf32>
    %366 = arith.addf %362, %365 : vector<1x64xf32>
    %367 = math.tanh %366 : vector<1x64xf32>
    %cst_66 = arith.constant 1.000000e+00 : f32
    %368 = vector.broadcast %cst_66 : f32 to vector<1x64xf32>
    %369 = arith.subf %368, %361 : vector<1x64xf32>
    %370 = arith.mulf %369, %367 : vector<1x64xf32>
    %371 = arith.mulf %361, %349 : vector<1x64xf32>
    %372 = arith.addf %370, %371 : vector<1x64xf32>
    %373 = vector.extract_strided_slice %256 {offsets = [5, 0], sizes = [1, 192], strides = [1, 1]} : vector<8x192xf32> to vector<1x192xf32>
    %cst_67 = arith.constant dense<0.000000e+00> : vector<1x192xf32>
    %374 = tpu.matmul %372, %237, %cst_67 {dimension_numbers = #tpu.dot_dimension_numbers<[1], [0], [0], [1], [0, 0, 1, 1], [], []>} : vector<1x64xf32>, vector<64x192xf32>, vector<1x192xf32> -> vector<1x192xf32>
    %375 = vector.extract_strided_slice %373 {offsets = [0, 0], sizes = [1, 128], strides = [1, 1]} : vector<1x192xf32> to vector<1x128xf32>
    %376 = vector.extract_strided_slice %374 {offsets = [0, 0], sizes = [1, 128], strides = [1, 1]} : vector<1x192xf32> to vector<1x128xf32>
    %377 = arith.addf %375, %376 : vector<1x128xf32>
    %378 = arith.negf %377 : vector<1x128xf32>
    %379 = math.exp %378 : vector<1x128xf32>
    %cst_68 = arith.constant 1.000000e+00 : f32
    %380 = vector.broadcast %cst_68 : f32 to vector<1x128xf32>
    %381 = arith.addf %380, %379 : vector<1x128xf32>
    %382 = arith.divf %380, %381 : vector<1x128xf32>
    %383 = vector.extract_strided_slice %382 {offsets = [0, 0], sizes = [1, 64], strides = [1, 1]} : vector<1x128xf32> to vector<1x64xf32>
    %384 = vector.extract_strided_slice %382 {offsets = [0, 64], sizes = [1, 64], strides = [1, 1]} : vector<1x128xf32> to vector<1x64xf32>
    %385 = vector.extract_strided_slice %373 {offsets = [0, 128], sizes = [1, 64], strides = [1, 1]} : vector<1x192xf32> to vector<1x64xf32>
    %386 = vector.extract_strided_slice %374 {offsets = [0, 128], sizes = [1, 64], strides = [1, 1]} : vector<1x192xf32> to vector<1x64xf32>
    %387 = arith.addf %386, %239 : vector<1x64xf32>
    %388 = arith.mulf %383, %387 : vector<1x64xf32>
    %389 = arith.addf %385, %388 : vector<1x64xf32>
    %390 = math.tanh %389 : vector<1x64xf32>
    %cst_69 = arith.constant 1.000000e+00 : f32
    %391 = vector.broadcast %cst_69 : f32 to vector<1x64xf32>
    %392 = arith.subf %391, %384 : vector<1x64xf32>
    %393 = arith.mulf %392, %390 : vector<1x64xf32>
    %394 = arith.mulf %384, %372 : vector<1x64xf32>
    %395 = arith.addf %393, %394 : vector<1x64xf32>
    %396 = vector.extract_strided_slice %256 {offsets = [6, 0], sizes = [1, 192], strides = [1, 1]} : vector<8x192xf32> to vector<1x192xf32>
    %cst_70 = arith.constant dense<0.000000e+00> : vector<1x192xf32>
    %397 = tpu.matmul %395, %237, %cst_70 {dimension_numbers = #tpu.dot_dimension_numbers<[1], [0], [0], [1], [0, 0, 1, 1], [], []>} : vector<1x64xf32>, vector<64x192xf32>, vector<1x192xf32> -> vector<1x192xf32>
    %398 = vector.extract_strided_slice %396 {offsets = [0, 0], sizes = [1, 128], strides = [1, 1]} : vector<1x192xf32> to vector<1x128xf32>
    %399 = vector.extract_strided_slice %397 {offsets = [0, 0], sizes = [1, 128], strides = [1, 1]} : vector<1x192xf32> to vector<1x128xf32>
    %400 = arith.addf %398, %399 : vector<1x128xf32>
    %401 = arith.negf %400 : vector<1x128xf32>
    %402 = math.exp %401 : vector<1x128xf32>
    %cst_71 = arith.constant 1.000000e+00 : f32
    %403 = vector.broadcast %cst_71 : f32 to vector<1x128xf32>
    %404 = arith.addf %403, %402 : vector<1x128xf32>
    %405 = arith.divf %403, %404 : vector<1x128xf32>
    %406 = vector.extract_strided_slice %405 {offsets = [0, 0], sizes = [1, 64], strides = [1, 1]} : vector<1x128xf32> to vector<1x64xf32>
    %407 = vector.extract_strided_slice %405 {offsets = [0, 64], sizes = [1, 64], strides = [1, 1]} : vector<1x128xf32> to vector<1x64xf32>
    %408 = vector.extract_strided_slice %396 {offsets = [0, 128], sizes = [1, 64], strides = [1, 1]} : vector<1x192xf32> to vector<1x64xf32>
    %409 = vector.extract_strided_slice %397 {offsets = [0, 128], sizes = [1, 64], strides = [1, 1]} : vector<1x192xf32> to vector<1x64xf32>
    %410 = arith.addf %409, %239 : vector<1x64xf32>
    %411 = arith.mulf %406, %410 : vector<1x64xf32>
    %412 = arith.addf %408, %411 : vector<1x64xf32>
    %413 = math.tanh %412 : vector<1x64xf32>
    %cst_72 = arith.constant 1.000000e+00 : f32
    %414 = vector.broadcast %cst_72 : f32 to vector<1x64xf32>
    %415 = arith.subf %414, %407 : vector<1x64xf32>
    %416 = arith.mulf %415, %413 : vector<1x64xf32>
    %417 = arith.mulf %407, %395 : vector<1x64xf32>
    %418 = arith.addf %416, %417 : vector<1x64xf32>
    %419 = vector.extract_strided_slice %256 {offsets = [7, 0], sizes = [1, 192], strides = [1, 1]} : vector<8x192xf32> to vector<1x192xf32>
    %cst_73 = arith.constant dense<0.000000e+00> : vector<1x192xf32>
    %420 = tpu.matmul %418, %237, %cst_73 {dimension_numbers = #tpu.dot_dimension_numbers<[1], [0], [0], [1], [0, 0, 1, 1], [], []>} : vector<1x64xf32>, vector<64x192xf32>, vector<1x192xf32> -> vector<1x192xf32>
    %421 = vector.extract_strided_slice %419 {offsets = [0, 0], sizes = [1, 128], strides = [1, 1]} : vector<1x192xf32> to vector<1x128xf32>
    %422 = vector.extract_strided_slice %420 {offsets = [0, 0], sizes = [1, 128], strides = [1, 1]} : vector<1x192xf32> to vector<1x128xf32>
    %423 = arith.addf %421, %422 : vector<1x128xf32>
    %424 = arith.negf %423 : vector<1x128xf32>
    %425 = math.exp %424 : vector<1x128xf32>
    %cst_74 = arith.constant 1.000000e+00 : f32
    %426 = vector.broadcast %cst_74 : f32 to vector<1x128xf32>
    %427 = arith.addf %426, %425 : vector<1x128xf32>
    %428 = arith.divf %426, %427 : vector<1x128xf32>
    %429 = vector.extract_strided_slice %428 {offsets = [0, 0], sizes = [1, 64], strides = [1, 1]} : vector<1x128xf32> to vector<1x64xf32>
    %430 = vector.extract_strided_slice %428 {offsets = [0, 64], sizes = [1, 64], strides = [1, 1]} : vector<1x128xf32> to vector<1x64xf32>
    %431 = vector.extract_strided_slice %419 {offsets = [0, 128], sizes = [1, 64], strides = [1, 1]} : vector<1x192xf32> to vector<1x64xf32>
    %432 = vector.extract_strided_slice %420 {offsets = [0, 128], sizes = [1, 64], strides = [1, 1]} : vector<1x192xf32> to vector<1x64xf32>
    %433 = arith.addf %432, %239 : vector<1x64xf32>
    %434 = arith.mulf %429, %433 : vector<1x64xf32>
    %435 = arith.addf %431, %434 : vector<1x64xf32>
    %436 = math.tanh %435 : vector<1x64xf32>
    %cst_75 = arith.constant 1.000000e+00 : f32
    %437 = vector.broadcast %cst_75 : f32 to vector<1x64xf32>
    %438 = arith.subf %437, %430 : vector<1x64xf32>
    %439 = arith.mulf %438, %436 : vector<1x64xf32>
    %440 = arith.mulf %430, %418 : vector<1x64xf32>
    %441 = arith.addf %439, %440 : vector<1x64xf32>
    %442 = tpu.concatenate %280, %303, %326, %349, %372, %395, %418, %441 in 0 : vector<1x64xf32>, vector<1x64xf32>, vector<1x64xf32>, vector<1x64xf32>, vector<1x64xf32>, vector<1x64xf32>, vector<1x64xf32>, vector<1x64xf32> -> vector<8x64xf32>
    %443 = vector.extract_strided_slice %442 {offsets = [7, 0], sizes = [1, 64], strides = [1, 1]} : vector<8x64xf32> to vector<1x64xf32>
    %444 = vector.extract_strided_slice %442 {offsets = [6, 0], sizes = [1, 64], strides = [1, 1]} : vector<8x64xf32> to vector<1x64xf32>
    %445 = vector.extract_strided_slice %442 {offsets = [5, 0], sizes = [1, 64], strides = [1, 1]} : vector<8x64xf32> to vector<1x64xf32>
    %446 = vector.extract_strided_slice %442 {offsets = [4, 0], sizes = [1, 64], strides = [1, 1]} : vector<8x64xf32> to vector<1x64xf32>
    %447 = vector.extract_strided_slice %442 {offsets = [3, 0], sizes = [1, 64], strides = [1, 1]} : vector<8x64xf32> to vector<1x64xf32>
    %448 = vector.extract_strided_slice %442 {offsets = [2, 0], sizes = [1, 64], strides = [1, 1]} : vector<8x64xf32> to vector<1x64xf32>
    %449 = vector.extract_strided_slice %442 {offsets = [1, 0], sizes = [1, 64], strides = [1, 1]} : vector<8x64xf32> to vector<1x64xf32>
    %450 = vector.extract_strided_slice %442 {offsets = [0, 0], sizes = [1, 64], strides = [1, 1]} : vector<8x64xf32> to vector<1x64xf32>
    %451 = tpu.concatenate %443, %444, %445, %446, %447, %448, %449, %450 in 0 : vector<1x64xf32>, vector<1x64xf32>, vector<1x64xf32>, vector<1x64xf32>, vector<1x64xf32>, vector<1x64xf32>, vector<1x64xf32>, vector<1x64xf32> -> vector<8x64xf32>
    %452 = arith.select %17, %442, %451 : vector<8x64xi1>, vector<8x64xf32>
    %c0_76 = arith.constant 0 : index
    %c0_77 = arith.constant 0 : index
    %453 = vector.load %arg5[%c0_76, %c0_77] : memref<64x32xf32, #tpu.memory_space<vmem>>, vector<64x32xf32>
    %cst_78 = arith.constant dense<0.000000e+00> : vector<8x32xf32>
    %454 = tpu.matmul %452, %453, %cst_78 {dimension_numbers = #tpu.dot_dimension_numbers<[1], [0], [0], [1], [0, 0, 1, 1], [], []>} : vector<8x64xf32>, vector<64x32xf32>, vector<8x32xf32> -> vector<8x32xf32>
    %c0_79 = arith.constant 0 : index
    %c0_80 = arith.constant 0 : index
    %455 = vector.load %arg6[%c0_79, %c0_80] : memref<1x32xf32, #tpu.memory_space<vmem>>, vector<1x32xf32>
    %456 = vector.broadcast %455 : vector<1x32xf32> to vector<8x32xf32>
    %457 = arith.addf %454, %456 : vector<8x32xf32>
    %cst_81 = arith.constant 0.000000e+00 : f32
    %458 = vector.broadcast %cst_81 : f32 to vector<8x32xf32>
    %459 = arith.maximumf %457, %458 : vector<8x32xf32>
    %c0_82 = arith.constant 0 : index
    %c0_83 = arith.constant 0 : index
    %460 = vector.load %arg7[%c0_82, %c0_83] : memref<32x2xf32, #tpu.memory_space<vmem>>, vector<32x2xf32>
    %cst_84 = arith.constant dense<0.000000e+00> : vector<8x2xf32>
    %461 = tpu.matmul %459, %460, %cst_84 {dimension_numbers = #tpu.dot_dimension_numbers<[1], [0], [0], [1], [0, 0, 1, 1], [], []>} : vector<8x32xf32>, vector<32x2xf32>, vector<8x2xf32> -> vector<8x2xf32>
    %c0_85 = arith.constant 0 : index
    %c0_86 = arith.constant 0 : index
    %462 = vector.load %arg8[%c0_85, %c0_86] : memref<1x2xf32, #tpu.memory_space<vmem>>, vector<1x2xf32>
    %463 = vector.broadcast %462 : vector<1x2xf32> to vector<8x2xf32>
    %464 = arith.addf %461, %463 : vector<8x2xf32>
    %c0_87 = arith.constant 0 : index
    %c0_88 = arith.constant 0 : index
    %465 = vector.load %arg9[%c0_87, %c0_88] : memref<8x1xi32, #tpu.memory_space<vmem>>, vector<8x1xi32>
    %466 = tpu.iota {dimensions = array<i32: 1>} : vector<8x2xi32>
    %467 = vector.broadcast %465 : vector<8x1xi32> to vector<8x2xi32>
    %468 = arith.cmpi eq, %466, %467 : vector<8x2xi32>
    %469 = arith.extui %468 : vector<8x2xi1> to vector<8x2xi32>
    %470 = arith.sitofp %469 : vector<8x2xi32> to vector<8x2xf32>
    %cst_89 = arith.constant dense<0xFF800000> : vector<8xf32>
    %471 = vector.multi_reduction <maximumf>, %464, %cst_89 [1] : vector<8x2xf32> to vector<8xf32>
    %472 = vector.shape_cast %471 : vector<8xf32> to vector<8x1xf32>
    %473 = vector.broadcast %472 : vector<8x1xf32> to vector<8x2xf32>
    %474 = arith.subf %464, %473 : vector<8x2xf32>
    %475 = math.exp %474 : vector<8x2xf32>
    %cst_90 = arith.constant dense<0.000000e+00> : vector<8xf32>
    %476 = vector.multi_reduction <add>, %475, %cst_90 [1] : vector<8x2xf32> to vector<8xf32>
    %477 = vector.shape_cast %476 : vector<8xf32> to vector<8x1xf32>
    %478 = math.log %477 : vector<8x1xf32>
    %479 = arith.addf %472, %478 : vector<8x1xf32>
    %480 = arith.mulf %464, %470 : vector<8x2xf32>
    %cst_91 = arith.constant dense<0.000000e+00> : vector<8xf32>
    %481 = vector.multi_reduction <add>, %480, %cst_91 [1] : vector<8x2xf32> to vector<8xf32>
    %482 = vector.shape_cast %481 : vector<8xf32> to vector<8x1xf32>
    %483 = arith.subf %479, %482 : vector<8x1xf32>
    %484 = vector.shape_cast %483 : vector<8x1xf32> to vector<1x8x1xf32>
    %cst_92 = arith.constant dense<0.000000e+00> : vector<1xf32>
    %485 = vector.multi_reduction <add>, %484, %cst_92 [1, 2] : vector<1x8x1xf32> to vector<1xf32>
    %486 = vector.shape_cast %485 : vector<1xf32> to vector<1x1x1xf32>
    %487 = vector.extract %486[0, 0, 0] : f32 from vector<1x1x1xf32>
    %488 = vector.broadcast %487 : f32 to vector<1x1xf32>
    %cst_93 = arith.constant 8.000000e+00 : f32
    %489 = vector.broadcast %cst_93 : f32 to vector<1x1xf32>
    %490 = arith.divf %488, %489 : vector<1x1xf32>
    %c0_94 = arith.constant 0 : index
    %c0_95 = arith.constant 0 : index
    %491 = vector.load %arg11[%c0_94, %c0_95] : memref<1x1xf32, #tpu.memory_space<vmem>>, vector<1x1xf32>
    tpu.vector_store %arg11[%c0_94, %c0_95], %490 {strides = array<i32>} : memref<1x1xf32, #tpu.memory_space<vmem>>, vector<1x1xf32>,
    %c0_96 = arith.constant 0 : index
    %c0_97 = arith.constant 0 : index
    %492 = vector.load %arg10[%c0_96, %c0_97] : memref<2x8xf32, #tpu.memory_space<vmem>>, vector<2x8xf32>
    %cst_98 = arith.constant dense<0.000000e+00> : vector<8x8xf32>
    %493 = tpu.matmul %470, %492, %cst_98 {dimension_numbers = #tpu.dot_dimension_numbers<[1], [0], [0], [1], [0, 0, 1, 1], [], []>} : vector<8x2xf32>, vector<2x8xf32>, vector<8x8xf32> -> vector<8x8xf32>
    %c0_99 = arith.constant 0 : index
    %c0_100 = arith.constant 0 : index
    %494 = vector.load %arg12[%c0_99, %c0_100] : memref<8x8xf32, #tpu.memory_space<vmem>>, vector<8x8xf32>
    tpu.vector_store %arg12[%c0_99, %c0_100], %493 {strides = array<i32>} : memref<8x8xf32, #tpu.memory_space<vmem>>, vector<8x8xf32>,
    return
  }
}

</mosaic_0001>

<llo_original>
// kernel: cl_specific_rnn_forward.1
$region0: #{cl_specific_rnn_forward.1}
  #allocation0 [shape = 'u32[]', space=smem, size = 0x4, offset = 0x4, fixed_abs, tag = 'smem constant byte address 0x4 - core index']
  #allocation1 [shape = 'u32[144,128]{1,0:T(1,128)}', space=vmem, size = 0x12000, scoped, tag = 'internal scratch']
  %s0 = inlined_call_operand.vmem [shape: f32[8,64], index: 0, kind: input, shape index: {}]
  %s1 = inlined_call_operand.hbm [shape: f32[2,64,192], index: 1, kind: input, shape index: {}]
  %s2 = inlined_call_operand.hbm [shape: f32[2,64,192], index: 2, kind: input, shape index: {}]
  %s3 = inlined_call_operand.vmem [shape: f32[2,1,192], index: 3, kind: input, shape index: {}]
  %s4 = inlined_call_operand.vmem [shape: f32[2,1,64], index: 4, kind: input, shape index: {}]
  %s5 = inlined_call_operand.vmem [shape: f32[64,32], index: 5, kind: input, shape index: {}]
  %s6 = inlined_call_operand.vmem [shape: f32[1,32], index: 6, kind: input, shape index: {}]
  %s7 = inlined_call_operand.vmem [shape: f32[32,2], index: 7, kind: input, shape index: {}]
  %s8 = inlined_call_operand.vmem [shape: f32[1,2], index: 8, kind: input, shape index: {}]
  %s9 = inlined_call_operand.vmem [shape: s32[8,1], index: 9, kind: input, shape index: {}]
  %s10 = inlined_call_operand.vmem [shape: f32[2,8], index: 10, kind: input, shape index: {}]
  %s11 = inlined_call_operand.hbm [shape: f32[1,1], index: 11, kind: output, shape index: {0}]
  %s12 = inlined_call_operand.hbm [shape: f32[8,8], index: 12, kind: output, shape index: {1}]
  %13 = xla_tuple %s11, %s12
  %s14 = sld [smem:[#allocation0]]
  $region70: #{cl_specific_rnn_forward.1} parent=0
    _
  %s16 = ssub.s32 1, %s14
  %s17 = scalar_select 0, %s16, %s14
  $region1: #{cl_specific_rnn_forward.1} parent=0
    #allocation2 [shape = 'u8[131072]{0}', space=vmem, size = 0x20000, scoped, tag = 'input window, operand 1, single buffered']
    #allocation3 [shape = 's32[1]{0}', space=sflag, size = 0x4, scoped, tag = 'scoped memory for cl_specific_rnn_forward.1']
    #allocation4 [shape = 's32[1]{0}', space=sflag, size = 0x4, scoped, tag = 'scoped memory for cl_specific_rnn_forward.1']
    #allocation5 [shape = 'u8[131072]{0}', space=vmem, size = 0x20000, scoped, tag = 'input window, operand 2, single buffered']
    #allocation6 [shape = 's32[1]{0}', space=sflag, size = 0x4, scoped, tag = 'scoped memory for cl_specific_rnn_forward.1']
    #allocation7 [shape = 'u8[512]{0}', space=vmem, size = 0x400, scoped, tag = 'output window, operand 0, single buffered']
    #allocation8 [shape = 'u8[4096]{0}', space=vmem, size = 0x1000, scoped, tag = 'output window, operand 1, single buffered']
    #allocation9 [shape = 's32[1]{0}', space=sflag, size = 0x4, scoped, tag = 'scoped memory for cl_specific_rnn_forward.1']
    %18 = vsyncpa [#allocation3], 0
    %19 = vsyncpa [#allocation6], 0
    %20 = vsyncpa [#allocation4], 0
    %21 = vsyncpa [#allocation9], 0
    // Predicated region
    $region2: #{cl_specific_rnn_forward.1} parent=1 // pred_check
      _
    $region3: #{cl_specific_rnn_forward.1} parent=1 // pred_check_branch
      %23 = sbr.rel (0) target = $region5
    $region4: #{cl_specific_rnn_forward.1} parent=1 // pred_region
      _
    $region5: #{cl_specific_rnn_forward.1} parent=1 // pred_fallthru
      _
    // Predicated region
    $region6: #{cl_specific_rnn_forward.1} parent=1 // pred_check
      _
    $region7: #{cl_specific_rnn_forward.1} parent=1 // pred_check_branch
      %25 = sbr.rel (0) target = $region9
    $region8: #{cl_specific_rnn_forward.1} parent=1 // pred_region
      %s27 = ssub.s32 4096, 4096
      %28 = vsyncadd [#allocation3], %s27
      %s29 = sshll.u32 [#allocation2], 4
      %s30 = int_to_ptr.vmem [resolvable:$true] %s29
      %35 = dma.hbm_to_vmem [thread:$0]  %s1, 4096, %s30, [#allocation3], 256, 256, 16
    $region9: #{cl_specific_rnn_forward.1} parent=1 // pred_fallthru
      _
    // Predicated region
    $region10: #{cl_specific_rnn_forward.1} parent=1 // pred_check
      _
    $region11: #{cl_specific_rnn_forward.1} parent=1 // pred_check_branch
      %37 = sbr.rel (0) target = $region13
    $region12: #{cl_specific_rnn_forward.1} parent=1 // pred_region
      %s39 = ssub.s32 4096, 4096
      %40 = vsyncadd [#allocation6], %s39
      %s41 = sshll.u32 [#allocation5], 4
      %s42 = int_to_ptr.vmem [resolvable:$true] %s41
      %47 = dma.hbm_to_vmem [thread:$0]  %s2, 4096, %s42, [#allocation6], 256, 256, 16
    $region13: #{cl_specific_rnn_forward.1} parent=1 // pred_fallthru
      _
    // Predicated region
    $region14: #{cl_specific_rnn_forward.1} parent=1 // pred_check
      _
    $region15: #{cl_specific_rnn_forward.1} parent=1 // pred_check_branch
      %49 = sbr.rel (0) target = $region17
    $region16: #{cl_specific_rnn_forward.1} parent=1 // pred_region
      _
    $region17: #{cl_specific_rnn_forward.1} parent=1 // pred_fallthru
      _
    // Predicated region
    $region18: #{cl_specific_rnn_forward.1} parent=1 // pred_check
      _
    $region19: #{cl_specific_rnn_forward.1} parent=1 // pred_check_branch
      %51 = sbr.rel (0) target = $region21
    $region20: #{cl_specific_rnn_forward.1} parent=1 // pred_region
      _
    $region21: #{cl_specific_rnn_forward.1} parent=1 // pred_fallthru
      _
    // Predicated region
    $region22: #{cl_specific_rnn_forward.1} parent=1 // pred_check
      _
    $region23: #{cl_specific_rnn_forward.1} parent=1 // pred_check_branch
      %53 = sbr.rel (0) target = $region25
    $region24: #{cl_specific_rnn_forward.1} parent=1 // pred_region
      _
    $region25: #{cl_specific_rnn_forward.1} parent=1 // pred_fallthru
      _
    // Predicated region
    $region26: #{cl_specific_rnn_forward.1} parent=1 // pred_check
      _
    $region27: #{cl_specific_rnn_forward.1} parent=1 // pred_check_branch
      %55 = sbr.rel (0) target = $region29
    $region28: #{cl_specific_rnn_forward.1} parent=1 // pred_region
      _
    $region29: #{cl_specific_rnn_forward.1} parent=1 // pred_fallthru
      _
    // Predicated region
    $region30: #{cl_specific_rnn_forward.1} parent=1 // pred_check
      _
    $region31: #{cl_specific_rnn_forward.1} parent=1 // pred_check_branch
      %57 = sbr.rel (0) target = $region33
    $region32: #{cl_specific_rnn_forward.1} parent=1 // pred_region
      _
    $region33: #{cl_specific_rnn_forward.1} parent=1 // pred_fallthru
      _
    // Predicated region
    $region34: #{cl_specific_rnn_forward.1} parent=1 // pred_check
      _
    $region35: #{cl_specific_rnn_forward.1} parent=1 // pred_check_branch
      %59 = sbr.rel (0) target = $region37
    $region36: #{cl_specific_rnn_forward.1} parent=1 // pred_region
      _
    $region37: #{cl_specific_rnn_forward.1} parent=1 // pred_fallthru
      _
    // Predicated region
    $region38: #{cl_specific_rnn_forward.1} parent=1 // pred_check
      _
    $region39: #{cl_specific_rnn_forward.1} parent=1 // pred_check_branch
      %61 = sbr.rel (0) target = $region41
    $region40: #{cl_specific_rnn_forward.1} parent=1 // pred_region
      _
    $region41: #{cl_specific_rnn_forward.1} parent=1 // pred_fallthru
      _
    // Predicated region
    $region42: #{cl_specific_rnn_forward.1} parent=1 // pred_check
      _
    $region43: #{cl_specific_rnn_forward.1} parent=1 // pred_check_branch
      %63 = sbr.rel (0) target = $region45
    $region44: #{cl_specific_rnn_forward.1} parent=1 // pred_region
      _
    $region45: #{cl_specific_rnn_forward.1} parent=1 // pred_fallthru
      _
    // Predicated region
    $region46: #{cl_specific_rnn_forward.1} parent=1 // pred_check
      _
    $region47: #{cl_specific_rnn_forward.1} parent=1 // pred_check_branch
      %65 = sbr.rel (0) target = $region49
    $region48: #{cl_specific_rnn_forward.1} parent=1 // pred_region
      %66 = dma.done [#allocation3], 4096
    $region49: #{cl_specific_rnn_forward.1} parent=1 // pred_fallthru
      _
    // Predicated region
    $region50: #{cl_specific_rnn_forward.1} parent=1 // pred_check
      _
    $region51: #{cl_specific_rnn_forward.1} parent=1 // pred_check_branch
      %68 = sbr.rel (0) target = $region53
    $region52: #{cl_specific_rnn_forward.1} parent=1 // pred_region
      %69 = dma.done [#allocation6], 4096
    $region53: #{cl_specific_rnn_forward.1} parent=1 // pred_fallthru
      _
    %v70 = vlaneseq
    %v71 = vand.u32 %v70, 127
    %v72 = vadd.s32 %v71, 128
    %vm73 = vcmp.lt.s32.totalorder %v71, 32
    %vm74 = vcmp.lt.s32.totalorder %v72, 32
    %vm75 = vcmp.ge.s32.totalorder %v71, 64
    %vm76 = vcmp.ge.s32.totalorder %v72, 64
    %vm77 = vcmp.lt.s32.totalorder %v71, 96
    %vm78 = vcmp.lt.s32.totalorder %v72, 96
    %vm79 = vmand %vm75, %vm77
    %vm80 = vmand %vm76, %vm78
    %vm81 = vmor %vm73, %vm79
    %vm82 = vmor %vm74, %vm80
    %vm83 = vcmp.ge.s32.totalorder %v71, 128
    %vm84 = vcmp.ge.s32.totalorder %v72, 128
    %vm85 = vcmp.lt.s32.totalorder %v71, 160
    %vm86 = vcmp.lt.s32.totalorder %v72, 160
    %vm87 = vmand %vm83, %vm85
    %vm88 = vmand %vm84, %vm86
    %vm89 = vmor %vm81, %vm87
    %vm90 = vmor %vm82, %vm88
    %v91 = vld [vmem:[%s0] sm:$0xff]
    %v92 = vld [vmem:[#allocation5] sm:$0xff]
    %v93 = vld [vmem:[#allocation5 + $0x8] sm:$0xff]
    %v94 = vld [vmem:[#allocation5 + $0x10] sm:$0xff]
    %v95 = vld [vmem:[#allocation5 + $0x18] sm:$0xff]
    %v96 = vld [vmem:[#allocation5 + $0x20] sm:$0xff]
    %v97 = vld [vmem:[#allocation5 + $0x28] sm:$0xff]
    %v98 = vld [vmem:[#allocation5 + $0x30] sm:$0xff]
    %v99 = vld [vmem:[#allocation5 + $0x38] sm:$0xff]
    %v100 = vld [vmem:[#allocation5 + $0x40] sm:$0xff]
    %v101 = vld [vmem:[#allocation5 + $0x48] sm:$0xff]
    %v102 = vld [vmem:[#allocation5 + $0x50] sm:$0xff]
    %v103 = vld [vmem:[#allocation5 + $0x58] sm:$0xff]
    %v104 = vld [vmem:[#allocation5 + $0x60] sm:$0xff]
    %v105 = vld [vmem:[#allocation5 + $0x68] sm:$0xff]
    %v106 = vld [vmem:[#allocation5 + $0x70] sm:$0xff]
    %v107 = vld [vmem:[#allocation5 + $0x78] sm:$0xff]
    %v108 = vld [vmem:[%s4] sm:$0x1]
    %v109 = vld [vmem:[#allocation2] sm:$0xff]
    %v110 = vld [vmem:[#allocation2 + $0x8] sm:$0xff]
    %v111 = vld [vmem:[#allocation2 + $0x10] sm:$0xff]
    %v112 = vld [vmem:[#allocation2 + $0x18] sm:$0xff]
    %v113 = vld [vmem:[#allocation2 + $0x20] sm:$0xff]
    %v114 = vld [vmem:[#allocation2 + $0x28] sm:$0xff]
    %v115 = vld [vmem:[#allocation2 + $0x30] sm:$0xff]
    %v116 = vld [vmem:[#allocation2 + $0x38] sm:$0xff]
    %v117 = vld [vmem:[#allocation2 + $0x40] sm:$0xff]
    %v118 = vld [vmem:[#allocation2 + $0x48] sm:$0xff]
    %v119 = vld [vmem:[#allocation2 + $0x50] sm:$0xff]
    %v120 = vld [vmem:[#allocation2 + $0x58] sm:$0xff]
    %v121 = vld [vmem:[#allocation2 + $0x60] sm:$0xff]
    %v122 = vld [vmem:[#allocation2 + $0x68] sm:$0xff]
    %v123 = vld [vmem:[#allocation2 + $0x70] sm:$0xff]
    %v124 = vld [vmem:[#allocation2 + $0x78] sm:$0xff]
    %v125 = vld [vmem:[%s3] sm:$0x3]
    %v127 = vlaneseq
    %v128 = vshrl.u32 %v127, 7
    %v129 = vsub.s32 0, %v128
    %v130 = vrot.slane %v125, %v129
    %v131 = vlaneseq
    %v132 = vshrl.u32 %v131, 7
    %v133 = vsub.s32 1, %v132
    %v134 = vrot.slane %v125, %v133
    %vm137 = vcmask 523264
    %v139 = vsel %vm137, %v91, 0
    %141 = vmatprep.subr.mxu0 %v110
    %142 = vmatpush1.msra.mxu0 %v109
    %143 = vmatprep.subr.mxu0 %v112
    %144 = vmatpush1.msra.mxu0 %v111
    %145 = vmatprep.subr.mxu0 %v114
    %146 = vmatpush1.msra.mxu0 %v113
    %147 = vmatprep.subr.mxu0 %v116
    %148 = vmatpush1.msra.mxu0 %v115
    %149 = vmatprep.subr.mxu0 %v118
    %150 = vmatpush1.msra.mxu0 %v117
    %151 = vmatprep.subr.mxu0 %v120
    %152 = vmatpush1.msra.mxu0 %v119
    %153 = vmatprep.subr.mxu0 %v122
    %154 = vmatpush1.msra.mxu0 %v121
    %155 = vmatprep.subr.mxu0 %v124
    %156 = vmatpush1.msra.mxu0 %v123
    %157 = vmatprep.subr.mxu0 0.0
    %158 = vmatpush1.msra.mxu0 0.0
    %159 = vmatprep.subr.mxu0 0.0
    %160 = vmatpush1.msra.mxu0 0.0
    %161 = vmatprep.subr.mxu0 0.0
    %162 = vmatpush1.msra.mxu0 0.0
    %163 = vmatprep.subr.mxu0 0.0
    %164 = vmatpush1.msra.mxu0 0.0
    %165 = vmatprep.subr.mxu0 0.0
    %166 = vmatpush1.msra.mxu0 0.0
    %167 = vmatprep.subr.mxu0 0.0
    %168 = vmatpush1.msra.mxu0 0.0
    %169 = vmatprep.subr.mxu0 0.0
    %170 = vmatpush1.msra.mxu0 0.0
    %171 = vmatprep.subr.mxu0 0.0
    %172 = vmatpush1.msra.mxu0 0.0
    %173 = vmatprep.subr.mxu0 0.0
    %174 = vmatpush1.msra.mxu0 0.0
    %175 = vmatprep.subr.mxu0 0.0
    %176 = vmatpush1.msra.mxu0 0.0
    %177 = vmatprep.subr.mxu0 0.0
    %178 = vmatpush1.msra.mxu0 0.0
    %179 = vmatprep.subr.mxu0 0.0
    %180 = vmatpush1.msra.mxu0 0.0
    %181 = vmatprep.subr.mxu0 0.0
    %182 = vmatpush1.msra.mxu0 0.0
    %183 = vmatprep.subr.mxu0 0.0
    %184 = vmatpush1.msra.mxu0 0.0
    %185 = vmatprep.subr.mxu0 0.0
    %186 = vmatpush1.msra.mxu0 0.0
    %187 = vmatprep.subr.mxu0 0.0
    %188 = vmatpush1.msra.mxu0 0.0
    %189 = vmatprep.subr.mxu0 0.0
    %190 = vmatpush1.msra.mxu0 0.0
    %191 = vmatprep.subr.mxu0 0.0
    %192 = vmatpush1.msra.mxu0 0.0
    %193 = vmatprep.subr.mxu0 0.0
    %194 = vmatpush1.msra.mxu0 0.0
    %195 = vmatprep.subr.mxu0 0.0
    %196 = vmatpush1.msra.mxu0 0.0
    %197 = vmatprep.subr.mxu0 0.0
    %198 = vmatpush1.msra.mxu0 0.0
    %199 = vmatprep.subr.mxu0 0.0
    %200 = vmatpush1.msra.mxu0 0.0
    %201 = vmatprep.subr.mxu0 0.0
    %202 = vmatpush1.msra.mxu0 0.0
    %203 = vmatprep.subr.mxu0 0.0
    %204 = vmatpush1.msra.mxu0 0.0
    %205 = vmatprep.mubr.f32.mxu0 0.0
    %206 = vmatmul.mubr.f32.gmra.mrb[0].mxu0 %v139
    %v207 = vpop.f32.mrb[0].mxu0
    %v208 = vadd.f32 %v130, %v207
    %v209 = vpop.f32.mrb[0].mxu0
    %v210 = vadd.f32 %v134, %v209
    %211 = vdwg.mxu0
    %v214 = vrot.slane %v208, 7
    %v215 = vrot.slane %v210, 7
    %v218 = vrot.slane %v208, 5
    %v219 = vrot.slane %v210, 5
    %v222 = vrot.slane %v208, 3
    %v223 = vrot.slane %v210, 3
    %v226 = vrot.slane %v208, 1
    %v227 = vrot.slane %v210, 1
    %vm230 = vcmask 1040384
    %v231 = vsel %vm230, %v214, %v218
    %v232 = vsel %vm230, %v215, %v219
    %vm233 = vcmask 1041408
    %v234 = vsel %vm233, %v231, %v222
    %v235 = vsel %vm233, %v232, %v223
    %vm236 = vcmask 1042432
    %v237 = vsel %vm236, %v234, %v226
    %v238 = vsel %vm236, %v235, %v227
    %vm239 = vcmask 1043456
    %v240 = vsel %vm239, %v237, %v214
    %v241 = vsel %vm239, %v238, %v215
    %vm242 = vcmask 1044480
    %v243 = vsel %vm242, %v240, %v218
    %v244 = vsel %vm242, %v241, %v219
    %vm245 = vcmask 1045504
    %v246 = vsel %vm245, %v243, %v222
    %v247 = vsel %vm245, %v244, %v223
    %vm248 = vcmask 1046528
    %v249 = vsel %vm248, %v246, %v226
    %v250 = vsel %vm248, %v247, %v227
    %v251 = vsel %vm89, %v208, %v249
    %v252 = vsel %vm90, %v210, %v250
    %v254 = vsel %vm137, 0.0, 0
    %256 = vmatprep.subr.mxu0 %v93
    %257 = vmatpush1.msra.mxu0 %v92
    %258 = vmatprep.subr.mxu0 %v95
    %259 = vmatpush1.msra.mxu0 %v94
    %260 = vmatprep.subr.mxu0 %v97
    %261 = vmatpush1.msra.mxu0 %v96
    %262 = vmatprep.subr.mxu0 %v99
    %263 = vmatpush1.msra.mxu0 %v98
    %264 = vmatprep.subr.mxu0 %v101
    %265 = vmatpush1.msra.mxu0 %v100
    %266 = vmatprep.subr.mxu0 %v103
    %267 = vmatpush1.msra.mxu0 %v102
    %268 = vmatprep.subr.mxu0 %v105
    %269 = vmatpush1.msra.mxu0 %v104
    %270 = vmatprep.subr.mxu0 %v107
    %271 = vmatpush1.msra.mxu0 %v106
    %272 = vmatprep.subr.mxu0 0.0
    %273 = vmatpush1.msra.mxu0 0.0
    %274 = vmatprep.subr.mxu0 0.0
    %275 = vmatpush1.msra.mxu0 0.0
    %276 = vmatprep.subr.mxu0 0.0
    %277 = vmatpush1.msra.mxu0 0.0
    %278 = vmatprep.subr.mxu0 0.0
    %279 = vmatpush1.msra.mxu0 0.0
    %280 = vmatprep.subr.mxu0 0.0
    %281 = vmatpush1.msra.mxu0 0.0
    %282 = vmatprep.subr.mxu0 0.0
    %283 = vmatpush1.msra.mxu0 0.0
    %284 = vmatprep.subr.mxu0 0.0
    %285 = vmatpush1.msra.mxu0 0.0
    %286 = vmatprep.subr.mxu0 0.0
    %287 = vmatpush1.msra.mxu0 0.0
    %288 = vmatprep.subr.mxu0 0.0
    %289 = vmatpush1.msra.mxu0 0.0
    %290 = vmatprep.subr.mxu0 0.0
    %291 = vmatpush1.msra.mxu0 0.0
    %292 = vmatprep.subr.mxu0 0.0
    %293 = vmatpush1.msra.mxu0 0.0
    %294 = vmatprep.subr.mxu0 0.0
    %295 = vmatpush1.msra.mxu0 0.0
    %296 = vmatprep.subr.mxu0 0.0
    %297 = vmatpush1.msra.mxu0 0.0
    %298 = vmatprep.subr.mxu0 0.0
    %299 = vmatpush1.msra.mxu0 0.0
    %300 = vmatprep.subr.mxu0 0.0
    %301 = vmatpush1.msra.mxu0 0.0
    %302 = vmatprep.subr.mxu0 0.0
    %303 = vmatpush1.msra.mxu0 0.0
    %304 = vmatprep.subr.mxu0 0.0
    %305 = vmatpush1.msra.mxu0 0.0
    %306 = vmatprep.subr.mxu0 0.0
    %307 = vmatpush1.msra.mxu0 0.0
    %308 = vmatprep.subr.mxu0 0.0
    %309 = vmatpush1.msra.mxu0 0.0
    %310 = vmatprep.subr.mxu0 0.0
    %311 = vmatpush1.msra.mxu0 0.0
    %312 = vmatprep.subr.mxu0 0.0
    %313 = vmatpush1.msra.mxu0 0.0
    %314 = vmatprep.subr.mxu0 0.0
    %315 = vmatpush1.msra.mxu0 0.0
    %316 = vmatprep.subr.mxu0 0.0
    %317 = vmatpush1.msra.mxu0 0.0
    %318 = vmatprep.subr.mxu0 0.0
    %319 = vmatpush1.msra.mxu0 0.0
    %320 = vmatprep.mubr.f32.mxu0 0.0
    %321 = vmatmul.mubr.f32.gmra.mrb[0].mxu0 %v254
    %v322 = vpop.f32.mrb[0].mxu0
    %v323 = vadd.f32 0.0, %v322
    %v324 = vpop.f32.mrb[0].mxu0
    %v325 = vadd.f32 0.0, %v324
    %326 = vdwg.mxu0
    %v327 = vadd.f32 %v251, %v323
    %v328 = vxor.u32 %v327, 2147483648
    %v329 = vmul.f32 %v328, 1.442695
    %v330 = vpow.pop %v329
    %v331 = vadd.f32 %v330, 1.0
    %v332 = vrcp.pop %v331
    %v333 = vmul.f32 1.0, %v332
    %v334 = vadd.f32 %v325, %v108
    %v335 = vmul.f32 %v333, %v334
    %v336 = vadd.f32 %v252, %v335
    %v337 = vtanh.pop %v336
    %v338 = vsub.f32 1.0, %v333
    %340 = vrot.lane.b32.xlu0 %v337, 64
    %v341 = vpop.permute.xlu0 %340
    %v343 = vmul.f32 %v338, %v341
    %v344 = vmul.f32 %v333, 0.0
    %v345 = vadd.f32 %v343, %v344
    %347 = vrot.lane.b32.xlu0 %v345, 64
    %v348 = vpop.permute.xlu0 %347
    %v349 = vsel %vm137, %v348, 0
    %351 = vmatprep.subr.mxu0 %v93
    %352 = vmatpush1.msra.mxu0 %v92
    %353 = vmatprep.subr.mxu0 %v95
    %354 = vmatpush1.msra.mxu0 %v94
    %355 = vmatprep.subr.mxu0 %v97
    %356 = vmatpush1.msra.mxu0 %v96
    %357 = vmatprep.subr.mxu0 %v99
    %358 = vmatpush1.msra.mxu0 %v98
    %359 = vmatprep.subr.mxu0 %v101
    %360 = vmatpush1.msra.mxu0 %v100
    %361 = vmatprep.subr.mxu0 %v103
    %362 = vmatpush1.msra.mxu0 %v102
    %363 = vmatprep.subr.mxu0 %v105
    %364 = vmatpush1.msra.mxu0 %v104
    %365 = vmatprep.subr.mxu0 %v107
    %366 = vmatpush1.msra.mxu0 %v106
    %367 = vmatprep.subr.mxu0 0.0
    %368 = vmatpush1.msra.mxu0 0.0
    %369 = vmatprep.subr.mxu0 0.0
    %370 = vmatpush1.msra.mxu0 0.0
    %371 = vmatprep.subr.mxu0 0.0
    %372 = vmatpush1.msra.mxu0 0.0
    %373 = vmatprep.subr.mxu0 0.0
    %374 = vmatpush1.msra.mxu0 0.0
    %375 = vmatprep.subr.mxu0 0.0
    %376 = vmatpush1.msra.mxu0 0.0
    %377 = vmatprep.subr.mxu0 0.0
    %378 = vmatpush1.msra.mxu0 0.0
    %379 = vmatprep.subr.mxu0 0.0
    %380 = vmatpush1.msra.mxu0 0.0
    %381 = vmatprep.subr.mxu0 0.0
    %382 = vmatpush1.msra.mxu0 0.0
    %383 = vmatprep.subr.mxu0 0.0
    %384 = vmatpush1.msra.mxu0 0.0
    %385 = vmatprep.subr.mxu0 0.0
    %386 = vmatpush1.msra.mxu0 0.0
    %387 = vmatprep.subr.mxu0 0.0
    %388 = vmatpush1.msra.mxu0 0.0
    %389 = vmatprep.subr.mxu0 0.0
    %390 = vmatpush1.msra.mxu0 0.0
    %391 = vmatprep.subr.mxu0 0.0
    %392 = vmatpush1.msra.mxu0 0.0
    %393 = vmatprep.subr.mxu0 0.0
    %394 = vmatpush1.msra.mxu0 0.0
    %395 = vmatprep.subr.mxu0 0.0
    %396 = vmatpush1.msra.mxu0 0.0
    %397 = vmatprep.subr.mxu0 0.0
    %398 = vmatpush1.msra.mxu0 0.0
    %399 = vmatprep.subr.mxu0 0.0
    %400 = vmatpush1.msra.mxu0 0.0
    %401 = vmatprep.subr.mxu0 0.0
    %402 = vmatpush1.msra.mxu0 0.0
    %403 = vmatprep.subr.mxu0 0.0
    %404 = vmatpush1.msra.mxu0 0.0
    %405 = vmatprep.subr.mxu0 0.0
    %406 = vmatpush1.msra.mxu0 0.0
    %407 = vmatprep.subr.mxu0 0.0
    %408 = vmatpush1.msra.mxu0 0.0
    %409 = vmatprep.subr.mxu0 0.0
    %410 = vmatpush1.msra.mxu0 0.0
    %411 = vmatprep.subr.mxu0 0.0
    %412 = vmatpush1.msra.mxu0 0.0
    %413 = vmatprep.subr.mxu0 0.0
    %414 = vmatpush1.msra.mxu0 0.0
    %415 = vmatprep.mubr.f32.mxu0 0.0
    %416 = vmatmul.mubr.f32.gmra.mrb[0].mxu0 %v349
    %v417 = vpop.f32.mrb[0].mxu0
    %v418 = vadd.f32 0.0, %v417
    %v419 = vpop.f32.mrb[0].mxu0
    %v420 = vadd.f32 0.0, %v419
    %421 = vdwg.mxu0
    %v423 = vrot.slane %v418, 7
    %v425 = vadd.f32 %v251, %v423
    %v426 = vxor.u32 %v425, 2147483648
    %v427 = vmul.f32 %v426, 1.442695
    %v428 = vpow.pop %v427
    %v429 = vadd.f32 %v428, 1.0
    %v430 = vrcp.pop %v429
    %v431 = vmul.f32 1.0, %v430
    %v432 = vadd.f32 %v420, %v108
    %v434 = vrot.slane %v432, 7
    %v436 = vmul.f32 %v431, %v434
    %v437 = vadd.f32 %v252, %v436
    %v438 = vtanh.pop %v437
    %v439 = vsub.f32 1.0, %v431
    %441 = vrot.lane.b32.xlu0 %v438, 64
    %v442 = vpop.permute.xlu0 %441
    %v444 = vmul.f32 %v439, %v442
    %v445 = vrot.slane %v345, 7
    %v447 = vmul.f32 %v431, %v445
    %v448 = vadd.f32 %v444, %v447
    %v450 = vrot.slane %v448, 1
    %451 = vrot.lane.b32.xlu0 %v450, 64
    %v452 = vpop.permute.xlu0 %451
    %v453 = vsel %vm137, %v452, 0
    %455 = vmatprep.subr.mxu0 %v93
    %456 = vmatpush1.msra.mxu0 %v92
    %457 = vmatprep.subr.mxu0 %v95
    %458 = vmatpush1.msra.mxu0 %v94
    %459 = vmatprep.subr.mxu0 %v97
    %460 = vmatpush1.msra.mxu0 %v96
    %461 = vmatprep.subr.mxu0 %v99
    %462 = vmatpush1.msra.mxu0 %v98
    %463 = vmatprep.subr.mxu0 %v101
    %464 = vmatpush1.msra.mxu0 %v100
    %465 = vmatprep.subr.mxu0 %v103
    %466 = vmatpush1.msra.mxu0 %v102
    %467 = vmatprep.subr.mxu0 %v105
    %468 = vmatpush1.msra.mxu0 %v104
    %469 = vmatprep.subr.mxu0 %v107
    %470 = vmatpush1.msra.mxu0 %v106
    %471 = vmatprep.subr.mxu0 0.0
    %472 = vmatpush1.msra.mxu0 0.0
    %473 = vmatprep.subr.mxu0 0.0
    %474 = vmatpush1.msra.mxu0 0.0
    %475 = vmatprep.subr.mxu0 0.0
    %476 = vmatpush1.msra.mxu0 0.0
    %477 = vmatprep.subr.mxu0 0.0
    %478 = vmatpush1.msra.mxu0 0.0
    %479 = vmatprep.subr.mxu0 0.0
    %480 = vmatpush1.msra.mxu0 0.0
    %481 = vmatprep.subr.mxu0 0.0
    %482 = vmatpush1.msra.mxu0 0.0
    %483 = vmatprep.subr.mxu0 0.0
    %484 = vmatpush1.msra.mxu0 0.0
    %485 = vmatprep.subr.mxu0 0.0
    %486 = vmatpush1.msra.mxu0 0.0
    %487 = vmatprep.subr.mxu0 0.0
    %488 = vmatpush1.msra.mxu0 0.0
    %489 = vmatprep.subr.mxu0 0.0
    %490 = vmatpush1.msra.mxu0 0.0
    %491 = vmatprep.subr.mxu0 0.0
    %492 = vmatpush1.msra.mxu0 0.0
    %493 = vmatprep.subr.mxu0 0.0
    %494 = vmatpush1.msra.mxu0 0.0
    %495 = vmatprep.subr.mxu0 0.0
    %496 = vmatpush1.msra.mxu0 0.0
    %497 = vmatprep.subr.mxu0 0.0
    %498 = vmatpush1.msra.mxu0 0.0
    %499 = vmatprep.subr.mxu0 0.0
    %500 = vmatpush1.msra.mxu0 0.0
    %501 = vmatprep.subr.mxu0 0.0
    %502 = vmatpush1.msra.mxu0 0.0
    %503 = vmatprep.subr.mxu0 0.0
    %504 = vmatpush1.msra.mxu0 0.0
    %505 = vmatprep.subr.mxu0 0.0
    %506 = vmatpush1.msra.mxu0 0.0
    %507 = vmatprep.subr.mxu0 0.0
    %508 = vmatpush1.msra.mxu0 0.0
    %509 = vmatprep.subr.mxu0 0.0
    %510 = vmatpush1.msra.mxu0 0.0
    %511 = vmatprep.subr.mxu0 0.0
    %512 = vmatpush1.msra.mxu0 0.0
    %513 = vmatprep.subr.mxu0 0.0
    %514 = vmatpush1.msra.mxu0 0.0
    %515 = vmatprep.subr.mxu0 0.0
    %516 = vmatpush1.msra.mxu0 0.0
    %517 = vmatprep.subr.mxu0 0.0
    %518 = vmatpush1.msra.mxu0 0.0
    %519 = vmatprep.mubr.f32.mxu0 0.0
    %520 = vmatmul.mubr.f32.gmra.mrb[0].mxu0 %v453
    %v521 = vpop.f32.mrb[0].mxu0
    %v522 = vadd.f32 0.0, %v521
    %v523 = vpop.f32.mrb[0].mxu0
    %v524 = vadd.f32 0.0, %v523
    %525 = vdwg.mxu0
    %v527 = vrot.slane %v522, 6
    %v529 = vadd.f32 %v251, %v527
    %v530 = vxor.u32 %v529, 2147483648
    %v531 = vmul.f32 %v530, 1.442695
    %v532 = vpow.pop %v531
    %v533 = vadd.f32 %v532, 1.0
    %v534 = vrcp.pop %v533
    %v535 = vmul.f32 1.0, %v534
    %v536 = vadd.f32 %v524, %v108
    %v538 = vrot.slane %v536, 6
    %v540 = vmul.f32 %v535, %v538
    %v541 = vadd.f32 %v252, %v540
    %v542 = vtanh.pop %v541
    %v543 = vsub.f32 1.0, %v535
    %545 = vrot.lane.b32.xlu0 %v542, 64
    %v546 = vpop.permute.xlu0 %545
    %v548 = vmul.f32 %v543, %v546
    %v549 = vrot.slane %v448, 7
    %v551 = vmul.f32 %v535, %v549
    %v552 = vadd.f32 %v548, %v551
    %v554 = vrot.slane %v552, 2
    %555 = vrot.lane.b32.xlu0 %v554, 64
    %v556 = vpop.permute.xlu0 %555
    %v557 = vsel %vm137, %v556, 0
    %559 = vmatprep.subr.mxu0 %v93
    %560 = vmatpush1.msra.mxu0 %v92
    %561 = vmatprep.subr.mxu0 %v95
    %562 = vmatpush1.msra.mxu0 %v94
    %563 = vmatprep.subr.mxu0 %v97
    %564 = vmatpush1.msra.mxu0 %v96
    %565 = vmatprep.subr.mxu0 %v99
    %566 = vmatpush1.msra.mxu0 %v98
    %567 = vmatprep.subr.mxu0 %v101
    %568 = vmatpush1.msra.mxu0 %v100
    %569 = vmatprep.subr.mxu0 %v103
    %570 = vmatpush1.msra.mxu0 %v102
    %571 = vmatprep.subr.mxu0 %v105
    %572 = vmatpush1.msra.mxu0 %v104
    %573 = vmatprep.subr.mxu0 %v107
    %574 = vmatpush1.msra.mxu0 %v106
    %575 = vmatprep.subr.mxu0 0.0
    %576 = vmatpush1.msra.mxu0 0.0
    %577 = vmatprep.subr.mxu0 0.0
    %578 = vmatpush1.msra.mxu0 0.0
    %579 = vmatprep.subr.mxu0 0.0
    %580 = vmatpush1.msra.mxu0 0.0
    %581 = vmatprep.subr.mxu0 0.0
    %582 = vmatpush1.msra.mxu0 0.0
    %583 = vmatprep.subr.mxu0 0.0
    %584 = vmatpush1.msra.mxu0 0.0
    %585 = vmatprep.subr.mxu0 0.0
    %586 = vmatpush1.msra.mxu0 0.0
    %587 = vmatprep.subr.mxu0 0.0
    %588 = vmatpush1.msra.mxu0 0.0
    %589 = vmatprep.subr.mxu0 0.0
    %590 = vmatpush1.msra.mxu0 0.0
    %591 = vmatprep.subr.mxu0 0.0
    %592 = vmatpush1.msra.mxu0 0.0
    %593 = vmatprep.subr.mxu0 0.0
    %594 = vmatpush1.msra.mxu0 0.0
    %595 = vmatprep.subr.mxu0 0.0
    %596 = vmatpush1.msra.mxu0 0.0
    %597 = vmatprep.subr.mxu0 0.0
    %598 = vmatpush1.msra.mxu0 0.0
    %599 = vmatprep.subr.mxu0 0.0
    %600 = vmatpush1.msra.mxu0 0.0
    %601 = vmatprep.subr.mxu0 0.0
    %602 = vmatpush1.msra.mxu0 0.0
    %603 = vmatprep.subr.mxu0 0.0
    %604 = vmatpush1.msra.mxu0 0.0
    %605 = vmatprep.subr.mxu0 0.0
    %606 = vmatpush1.msra.mxu0 0.0
    %607 = vmatprep.subr.mxu0 0.0
    %608 = vmatpush1.msra.mxu0 0.0
    %609 = vmatprep.subr.mxu0 0.0
    %610 = vmatpush1.msra.mxu0 0.0
    %611 = vmatprep.subr.mxu0 0.0
    %612 = vmatpush1.msra.mxu0 0.0
    %613 = vmatprep.subr.mxu0 0.0
    %614 = vmatpush1.msra.mxu0 0.0
    %615 = vmatprep.subr.mxu0 0.0
    %616 = vmatpush1.msra.mxu0 0.0
    %617 = vmatprep.subr.mxu0 0.0
    %618 = vmatpush1.msra.mxu0 0.0
    %619 = vmatprep.subr.mxu0 0.0
    %620 = vmatpush1.msra.mxu0 0.0
    %621 = vmatprep.subr.mxu0 0.0
    %622 = vmatpush1.msra.mxu0 0.0
    %623 = vmatprep.mubr.f32.mxu0 0.0
    %624 = vmatmul.mubr.f32.gmra.mrb[0].mxu0 %v557
    %v625 = vpop.f32.mrb[0].mxu0
    %v626 = vadd.f32 0.0, %v625
    %v627 = vpop.f32.mrb[0].mxu0
    %v628 = vadd.f32 0.0, %v627
    %629 = vdwg.mxu0
    %v631 = vrot.slane %v626, 5
    %v633 = vadd.f32 %v251, %v631
    %v634 = vxor.u32 %v633, 2147483648
    %v635 = vmul.f32 %v634, 1.442695
    %v636 = vpow.pop %v635
    %v637 = vadd.f32 %v636, 1.0
    %v638 = vrcp.pop %v637
    %v639 = vmul.f32 1.0, %v638
    %v640 = vadd.f32 %v628, %v108
    %v642 = vrot.slane %v640, 5
    %v644 = vmul.f32 %v639, %v642
    %v645 = vadd.f32 %v252, %v644
    %v646 = vtanh.pop %v645
    %v647 = vsub.f32 1.0, %v639
    %649 = vrot.lane.b32.xlu0 %v646, 64
    %v650 = vpop.permute.xlu0 %649
    %v652 = vmul.f32 %v647, %v650
    %v653 = vrot.slane %v552, 7
    %v655 = vmul.f32 %v639, %v653
    %v656 = vadd.f32 %v652, %v655
    %v658 = vrot.slane %v656, 3
    %659 = vrot.lane.b32.xlu0 %v658, 64
    %v660 = vpop.permute.xlu0 %659
    %v661 = vsel %vm137, %v660, 0
    %663 = vmatprep.subr.mxu0 %v93
    %664 = vmatpush1.msra.mxu0 %v92
    %665 = vmatprep.subr.mxu0 %v95
    %666 = vmatpush1.msra.mxu0 %v94
    %667 = vmatprep.subr.mxu0 %v97
    %668 = vmatpush1.msra.mxu0 %v96
    %669 = vmatprep.subr.mxu0 %v99
    %670 = vmatpush1.msra.mxu0 %v98
    %671 = vmatprep.subr.mxu0 %v101
    %672 = vmatpush1.msra.mxu0 %v100
    %673 = vmatprep.subr.mxu0 %v103
    %674 = vmatpush1.msra.mxu0 %v102
    %675 = vmatprep.subr.mxu0 %v105
    %676 = vmatpush1.msra.mxu0 %v104
    %677 = vmatprep.subr.mxu0 %v107
    %678 = vmatpush1.msra.mxu0 %v106
    %679 = vmatprep.subr.mxu0 0.0
    %680 = vmatpush1.msra.mxu0 0.0
    %681 = vmatprep.subr.mxu0 0.0
    %682 = vmatpush1.msra.mxu0 0.0
    %683 = vmatprep.subr.mxu0 0.0
    %684 = vmatpush1.msra.mxu0 0.0
    %685 = vmatprep.subr.mxu0 0.0
    %686 = vmatpush1.msra.mxu0 0.0
    %687 = vmatprep.subr.mxu0 0.0
    %688 = vmatpush1.msra.mxu0 0.0
    %689 = vmatprep.subr.mxu0 0.0
    %690 = vmatpush1.msra.mxu0 0.0
    %691 = vmatprep.subr.mxu0 0.0
    %692 = vmatpush1.msra.mxu0 0.0
    %693 = vmatprep.subr.mxu0 0.0
    %694 = vmatpush1.msra.mxu0 0.0
    %695 = vmatprep.subr.mxu0 0.0
    %696 = vmatpush1.msra.mxu0 0.0
    %697 = vmatprep.subr.mxu0 0.0
    %698 = vmatpush1.msra.mxu0 0.0
    %699 = vmatprep.subr.mxu0 0.0
    %700 = vmatpush1.msra.mxu0 0.0
    %701 = vmatprep.subr.mxu0 0.0
    %702 = vmatpush1.msra.mxu0 0.0
    %703 = vmatprep.subr.mxu0 0.0
    %704 = vmatpush1.msra.mxu0 0.0
    %705 = vmatprep.subr.mxu0 0.0
    %706 = vmatpush1.msra.mxu0 0.0
    %707 = vmatprep.subr.mxu0 0.0
    %708 = vmatpush1.msra.mxu0 0.0
    %709 = vmatprep.subr.mxu0 0.0
    %710 = vmatpush1.msra.mxu0 0.0
    %711 = vmatprep.subr.mxu0 0.0
    %712 = vmatpush1.msra.mxu0 0.0
    %713 = vmatprep.subr.mxu0 0.0
    %714 = vmatpush1.msra.mxu0 0.0
    %715 = vmatprep.subr.mxu0 0.0
    %716 = vmatpush1.msra.mxu0 0.0
    %717 = vmatprep.subr.mxu0 0.0
    %718 = vmatpush1.msra.mxu0 0.0
    %719 = vmatprep.subr.mxu0 0.0
    %720 = vmatpush1.msra.mxu0 0.0
    %721 = vmatprep.subr.mxu0 0.0
    %722 = vmatpush1.msra.mxu0 0.0
    %723 = vmatprep.subr.mxu0 0.0
    %724 = vmatpush1.msra.mxu0 0.0
    %725 = vmatprep.subr.mxu0 0.0
    %726 = vmatpush1.msra.mxu0 0.0
    %727 = vmatprep.mubr.f32.mxu0 0.0
    %728 = vmatmul.mubr.f32.gmra.mrb[0].mxu0 %v661
    %v729 = vpop.f32.mrb[0].mxu0
    %v730 = vadd.f32 0.0, %v729
    %v731 = vpop.f32.mrb[0].mxu0
    %v732 = vadd.f32 0.0, %v731
    %733 = vdwg.mxu0
    %v735 = vrot.slane %v730, 4
    %v737 = vadd.f32 %v251, %v735
    %v738 = vxor.u32 %v737, 2147483648
    %v739 = vmul.f32 %v738, 1.442695
    %v740 = vpow.pop %v739
    %v741 = vadd.f32 %v740, 1.0
    %v742 = vrcp.pop %v741
    %v743 = vmul.f32 1.0, %v742
    %v744 = vadd.f32 %v732, %v108
    %v746 = vrot.slane %v744, 4
    %v748 = vmul.f32 %v743, %v746
    %v749 = vadd.f32 %v252, %v748
    %v750 = vtanh.pop %v749
    %v751 = vsub.f32 1.0, %v743
    %753 = vrot.lane.b32.xlu0 %v750, 64
    %v754 = vpop.permute.xlu0 %753
    %v756 = vmul.f32 %v751, %v754
    %v757 = vrot.slane %v656, 7
    %v759 = vmul.f32 %v743, %v757
    %v760 = vadd.f32 %v756, %v759
    %v762 = vrot.slane %v760, 4
    %763 = vrot.lane.b32.xlu0 %v762, 64
    %v764 = vpop.permute.xlu0 %763
    %v765 = vsel %vm137, %v764, 0
    %767 = vmatprep.subr.mxu0 %v93
    %768 = vmatpush1.msra.mxu0 %v92
    %769 = vmatprep.subr.mxu0 %v95
    %770 = vmatpush1.msra.mxu0 %v94
    %771 = vmatprep.subr.mxu0 %v97
    %772 = vmatpush1.msra.mxu0 %v96
    %773 = vmatprep.subr.mxu0 %v99
    %774 = vmatpush1.msra.mxu0 %v98
    %775 = vmatprep.subr.mxu0 %v101
    %776 = vmatpush1.msra.mxu0 %v100
    %777 = vmatprep.subr.mxu0 %v103
    %778 = vmatpush1.msra.mxu0 %v102
    %779 = vmatprep.subr.mxu0 %v105
    %780 = vmatpush1.msra.mxu0 %v104
    %781 = vmatprep.subr.mxu0 %v107
    %782 = vmatpush1.msra.mxu0 %v106
    %783 = vmatprep.subr.mxu0 0.0
    %784 = vmatpush1.msra.mxu0 0.0
    %785 = vmatprep.subr.mxu0 0.0
    %786 = vmatpush1.msra.mxu0 0.0
    %787 = vmatprep.subr.mxu0 0.0
    %788 = vmatpush1.msra.mxu0 0.0
    %789 = vmatprep.subr.mxu0 0.0
    %790 = vmatpush1.msra.mxu0 0.0
    %791 = vmatprep.subr.mxu0 0.0
    %792 = vmatpush1.msra.mxu0 0.0
    %793 = vmatprep.subr.mxu0 0.0
    %794 = vmatpush1.msra.mxu0 0.0
    %795 = vmatprep.subr.mxu0 0.0
    %796 = vmatpush1.msra.mxu0 0.0
    %797 = vmatprep.subr.mxu0 0.0
    %798 = vmatpush1.msra.mxu0 0.0
    %799 = vmatprep.subr.mxu0 0.0
    %800 = vmatpush1.msra.mxu0 0.0
    %801 = vmatprep.subr.mxu0 0.0
    %802 = vmatpush1.msra.mxu0 0.0
    %803 = vmatprep.subr.mxu0 0.0
    %804 = vmatpush1.msra.mxu0 0.0
    %805 = vmatprep.subr.mxu0 0.0
    %806 = vmatpush1.msra.mxu0 0.0
    %807 = vmatprep.subr.mxu0 0.0
    %808 = vmatpush1.msra.mxu0 0.0
    %809 = vmatprep.subr.mxu0 0.0
    %810 = vmatpush1.msra.mxu0 0.0
    %811 = vmatprep.subr.mxu0 0.0
    %812 = vmatpush1.msra.mxu0 0.0
    %813 = vmatprep.subr.mxu0 0.0
    %814 = vmatpush1.msra.mxu0 0.0
    %815 = vmatprep.subr.mxu0 0.0
    %816 = vmatpush1.msra.mxu0 0.0
    %817 = vmatprep.subr.mxu0 0.0
    %818 = vmatpush1.msra.mxu0 0.0
    %819 = vmatprep.subr.mxu0 0.0
    %820 = vmatpush1.msra.mxu0 0.0
    %821 = vmatprep.subr.mxu0 0.0
    %822 = vmatpush1.msra.mxu0 0.0
    %823 = vmatprep.subr.mxu0 0.0
    %824 = vmatpush1.msra.mxu0 0.0
    %825 = vmatprep.subr.mxu0 0.0
    %826 = vmatpush1.msra.mxu0 0.0
    %827 = vmatprep.subr.mxu0 0.0
    %828 = vmatpush1.msra.mxu0 0.0
    %829 = vmatprep.subr.mxu0 0.0
    %830 = vmatpush1.msra.mxu0 0.0
    %831 = vmatprep.mubr.f32.mxu0 0.0
    %832 = vmatmul.mubr.f32.gmra.mrb[0].mxu0 %v765
    %v833 = vpop.f32.mrb[0].mxu0
    %v834 = vadd.f32 0.0, %v833
    %v835 = vpop.f32.mrb[0].mxu0
    %v836 = vadd.f32 0.0, %v835
    %837 = vdwg.mxu0
    %v839 = vrot.slane %v834, 3
    %v841 = vadd.f32 %v251, %v839
    %v842 = vxor.u32 %v841, 2147483648
    %v843 = vmul.f32 %v842, 1.442695
    %v844 = vpow.pop %v843
    %v845 = vadd.f32 %v844, 1.0
    %v846 = vrcp.pop %v845
    %v847 = vmul.f32 1.0, %v846
    %v848 = vadd.f32 %v836, %v108
    %v850 = vrot.slane %v848, 3
    %v852 = vmul.f32 %v847, %v850
    %v853 = vadd.f32 %v252, %v852
    %v854 = vtanh.pop %v853
    %v855 = vsub.f32 1.0, %v847
    %857 = vrot.lane.b32.xlu0 %v854, 64
    %v858 = vpop.permute.xlu0 %857
    %v860 = vmul.f32 %v855, %v858
    %v861 = vrot.slane %v760, 7
    %v863 = vmul.f32 %v847, %v861
    %v864 = vadd.f32 %v860, %v863
    %v866 = vrot.slane %v864, 5
    %867 = vrot.lane.b32.xlu0 %v866, 64
    %v868 = vpop.permute.xlu0 %867
    %v869 = vsel %vm137, %v868, 0
    %871 = vmatprep.subr.mxu0 %v93
    %872 = vmatpush1.msra.mxu0 %v92
    %873 = vmatprep.subr.mxu0 %v95
    %874 = vmatpush1.msra.mxu0 %v94
    %875 = vmatprep.subr.mxu0 %v97
    %876 = vmatpush1.msra.mxu0 %v96
    %877 = vmatprep.subr.mxu0 %v99
    %878 = vmatpush1.msra.mxu0 %v98
    %879 = vmatprep.subr.mxu0 %v101
    %880 = vmatpush1.msra.mxu0 %v100
    %881 = vmatprep.subr.mxu0 %v103
    %882 = vmatpush1.msra.mxu0 %v102
    %883 = vmatprep.subr.mxu0 %v105
    %884 = vmatpush1.msra.mxu0 %v104
    %885 = vmatprep.subr.mxu0 %v107
    %886 = vmatpush1.msra.mxu0 %v106
    %887 = vmatprep.subr.mxu0 0.0
    %888 = vmatpush1.msra.mxu0 0.0
    %889 = vmatprep.subr.mxu0 0.0
    %890 = vmatpush1.msra.mxu0 0.0
    %891 = vmatprep.subr.mxu0 0.0
    %892 = vmatpush1.msra.mxu0 0.0
    %893 = vmatprep.subr.mxu0 0.0
    %894 = vmatpush1.msra.mxu0 0.0
    %895 = vmatprep.subr.mxu0 0.0
    %896 = vmatpush1.msra.mxu0 0.0
    %897 = vmatprep.subr.mxu0 0.0
    %898 = vmatpush1.msra.mxu0 0.0
    %899 = vmatprep.subr.mxu0 0.0
    %900 = vmatpush1.msra.mxu0 0.0
    %901 = vmatprep.subr.mxu0 0.0
    %902 = vmatpush1.msra.mxu0 0.0
    %903 = vmatprep.subr.mxu0 0.0
    %904 = vmatpush1.msra.mxu0 0.0
    %905 = vmatprep.subr.mxu0 0.0
    %906 = vmatpush1.msra.mxu0 0.0
    %907 = vmatprep.subr.mxu0 0.0
    %908 = vmatpush1.msra.mxu0 0.0
    %909 = vmatprep.subr.mxu0 0.0
    %910 = vmatpush1.msra.mxu0 0.0
    %911 = vmatprep.subr.mxu0 0.0
    %912 = vmatpush1.msra.mxu0 0.0
    %913 = vmatprep.subr.mxu0 0.0
    %914 = vmatpush1.msra.mxu0 0.0
    %915 = vmatprep.subr.mxu0 0.0
    %916 = vmatpush1.msra.mxu0 0.0
    %917 = vmatprep.subr.mxu0 0.0
    %918 = vmatpush1.msra.mxu0 0.0
    %919 = vmatprep.subr.mxu0 0.0
    %920 = vmatpush1.msra.mxu0 0.0
    %921 = vmatprep.subr.mxu0 0.0
    %922 = vmatpush1.msra.mxu0 0.0
    %923 = vmatprep.subr.mxu0 0.0
    %924 = vmatpush1.msra.mxu0 0.0
    %925 = vmatprep.subr.mxu0 0.0
    %926 = vmatpush1.msra.mxu0 0.0
    %927 = vmatprep.subr.mxu0 0.0
    %928 = vmatpush1.msra.mxu0 0.0
    %929 = vmatprep.subr.mxu0 0.0
    %930 = vmatpush1.msra.mxu0 0.0
    %931 = vmatprep.subr.mxu0 0.0
    %932 = vmatpush1.msra.mxu0 0.0
    %933 = vmatprep.subr.mxu0 0.0
    %934 = vmatpush1.msra.mxu0 0.0
    %935 = vmatprep.mubr.f32.mxu0 0.0
    %936 = vmatmul.mubr.f32.gmra.mrb[0].mxu0 %v869
    %v937 = vpop.f32.mrb[0].mxu0
    %v938 = vadd.f32 0.0, %v937
    %v939 = vpop.f32.mrb[0].mxu0
    %v940 = vadd.f32 0.0, %v939
    %941 = vdwg.mxu0
    %v943 = vrot.slane %v938, 2
    %v945 = vadd.f32 %v251, %v943
    %v946 = vxor.u32 %v945, 2147483648
    %v947 = vmul.f32 %v946, 1.442695
    %v948 = vpow.pop %v947
    %v949 = vadd.f32 %v948, 1.0
    %v950 = vrcp.pop %v949
    %v951 = vmul.f32 1.0, %v950
    %v952 = vadd.f32 %v940, %v108
    %v954 = vrot.slane %v952, 2
    %v956 = vmul.f32 %v951, %v954
    %v957 = vadd.f32 %v252, %v956
    %v958 = vtanh.pop %v957
    %v959 = vsub.f32 1.0, %v951
    %961 = vrot.lane.b32.xlu0 %v958, 64
    %v962 = vpop.permute.xlu0 %961
    %v964 = vmul.f32 %v959, %v962
    %v965 = vrot.slane %v864, 7
    %v967 = vmul.f32 %v951, %v965
    %v968 = vadd.f32 %v964, %v967
    %v970 = vrot.slane %v968, 6
    %971 = vrot.lane.b32.xlu0 %v970, 64
    %v972 = vpop.permute.xlu0 %971
    %v973 = vsel %vm137, %v972, 0
    %975 = vmatprep.subr.mxu0 %v93
    %976 = vmatpush1.msra.mxu0 %v92
    %977 = vmatprep.subr.mxu0 %v95
    %978 = vmatpush1.msra.mxu0 %v94
    %979 = vmatprep.subr.mxu0 %v97
    %980 = vmatpush1.msra.mxu0 %v96
    %981 = vmatprep.subr.mxu0 %v99
    %982 = vmatpush1.msra.mxu0 %v98
    %983 = vmatprep.subr.mxu0 %v101
    %984 = vmatpush1.msra.mxu0 %v100
    %985 = vmatprep.subr.mxu0 %v103
    %986 = vmatpush1.msra.mxu0 %v102
    %987 = vmatprep.subr.mxu0 %v105
    %988 = vmatpush1.msra.mxu0 %v104
    %989 = vmatprep.subr.mxu0 %v107
    %990 = vmatpush1.msra.mxu0 %v106
    %991 = vmatprep.subr.mxu0 0.0
    %992 = vmatpush1.msra.mxu0 0.0
    %993 = vmatprep.subr.mxu0 0.0
    %994 = vmatpush1.msra.mxu0 0.0
    %995 = vmatprep.subr.mxu0 0.0
    %996 = vmatpush1.msra.mxu0 0.0
    %997 = vmatprep.subr.mxu0 0.0
    %998 = vmatpush1.msra.mxu0 0.0
    %999 = vmatprep.subr.mxu0 0.0
    %1000 = vmatpush1.msra.mxu0 0.0
    %1001 = vmatprep.subr.mxu0 0.0
    %1002 = vmatpush1.msra.mxu0 0.0
    %1003 = vmatprep.subr.mxu0 0.0
    %1004 = vmatpush1.msra.mxu0 0.0
    %1005 = vmatprep.subr.mxu0 0.0
    %1006 = vmatpush1.msra.mxu0 0.0
    %1007 = vmatprep.subr.mxu0 0.0
    %1008 = vmatpush1.msra.mxu0 0.0
    %1009 = vmatprep.subr.mxu0 0.0
    %1010 = vmatpush1.msra.mxu0 0.0
    %1011 = vmatprep.subr.mxu0 0.0
    %1012 = vmatpush1.msra.mxu0 0.0
    %1013 = vmatprep.subr.mxu0 0.0
    %1014 = vmatpush1.msra.mxu0 0.0
    %1015 = vmatprep.subr.mxu0 0.0
    %1016 = vmatpush1.msra.mxu0 0.0
    %1017 = vmatprep.subr.mxu0 0.0
    %1018 = vmatpush1.msra.mxu0 0.0
    %1019 = vmatprep.subr.mxu0 0.0
    %1020 = vmatpush1.msra.mxu0 0.0
    %1021 = vmatprep.subr.mxu0 0.0
    %1022 = vmatpush1.msra.mxu0 0.0
    %1023 = vmatprep.subr.mxu0 0.0
    %1024 = vmatpush1.msra.mxu0 0.0
    %1025 = vmatprep.subr.mxu0 0.0
    %1026 = vmatpush1.msra.mxu0 0.0
    %1027 = vmatprep.subr.mxu0 0.0
    %1028 = vmatpush1.msra.mxu0 0.0
    %1029 = vmatprep.subr.mxu0 0.0
    %1030 = vmatpush1.msra.mxu0 0.0
    %1031 = vmatprep.subr.mxu0 0.0
    %1032 = vmatpush1.msra.mxu0 0.0
    %1033 = vmatprep.subr.mxu0 0.0
    %1034 = vmatpush1.msra.mxu0 0.0
    %1035 = vmatprep.subr.mxu0 0.0
    %1036 = vmatpush1.msra.mxu0 0.0
    %1037 = vmatprep.subr.mxu0 0.0
    %1038 = vmatpush1.msra.mxu0 0.0
    %1039 = vmatprep.mubr.f32.mxu0 0.0
    %1040 = vmatmul.mubr.f32.gmra.mrb[0].mxu0 %v973
    %v1041 = vpop.f32.mrb[0].mxu0
    %v1042 = vadd.f32 0.0, %v1041
    %v1043 = vpop.f32.mrb[0].mxu0
    %v1044 = vadd.f32 0.0, %v1043
    %1045 = vdwg.mxu0
    %v1047 = vrot.slane %v1042, 1
    %v1049 = vadd.f32 %v251, %v1047
    %v1050 = vxor.u32 %v1049, 2147483648
    %v1051 = vmul.f32 %v1050, 1.442695
    %v1052 = vpow.pop %v1051
    %v1053 = vadd.f32 %v1052, 1.0
    %v1054 = vrcp.pop %v1053
    %v1055 = vmul.f32 1.0, %v1054
    %v1056 = vadd.f32 %v1044, %v108
    %v1058 = vrot.slane %v1056, 1
    %v1060 = vmul.f32 %v1055, %v1058
    %v1061 = vadd.f32 %v252, %v1060
    %v1062 = vtanh.pop %v1061
    %v1063 = vsub.f32 1.0, %v1055
    %1065 = vrot.lane.b32.xlu0 %v1062, 64
    %v1066 = vpop.permute.xlu0 %1065
    %v1068 = vmul.f32 %v1063, %v1066
    %v1069 = vrot.slane %v968, 7
    %v1071 = vmul.f32 %v1055, %v1069
    %v1072 = vadd.f32 %v1068, %v1071
    %v1073 = vsel %vm230, %v345, %v448
    %v1074 = vsel %vm233, %v1073, %v552
    %v1075 = vsel %vm236, %v1074, %v656
    %v1076 = vsel %vm239, %v1075, %v760
    %v1077 = vsel %vm242, %v1076, %v864
    %v1078 = vsel %vm245, %v1077, %v968
    %v1079 = vsel %vm248, %v1078, %v1072
    %v1081 = vrot.slane %v1079, 7
    %v1083 = vrot.slane %v1079, 5
    %v1085 = vrot.slane %v1079, 3
    %v1087 = vrot.slane %v1079, 1
    %v1089 = vsel %vm230, %v1081, %v1083
    %v1090 = vsel %vm233, %v1089, %v1085
    %v1091 = vsel %vm236, %v1090, %v1087
    %v1092 = vsel %vm239, %v1091, %v1081
    %v1093 = vsel %vm242, %v1092, %v1083
    %v1094 = vsel %vm245, %v1093, %v1085
    %v1095 = vsel %vm248, %v1094, %v1087
    %1096 = vrot.lane.b32.xlu0 %v1079, 64
    %v1097 = vpop.permute.xlu0 %1096
    %1100 = vrot.lane.b32.xlu0 %v1095, 64
    %v1101 = vpop.permute.xlu0 %1100
    %v1103 = vsel %vm73, %v1097, %v1101
    %s1104 = scalar_lea.vmem [#allocation5], 128
    %v1105 = vld [vmem:[%s1104] sm:$0xff]
    %v1106 = vld [vmem:[%s1104 + $0x8] sm:$0xff]
    %v1107 = vld [vmem:[%s1104 + $0x10] sm:$0xff]
    %v1108 = vld [vmem:[%s1104 + $0x18] sm:$0xff]
    %v1109 = vld [vmem:[%s1104 + $0x20] sm:$0xff]
    %v1110 = vld [vmem:[%s1104 + $0x28] sm:$0xff]
    %v1111 = vld [vmem:[%s1104 + $0x30] sm:$0xff]
    %v1112 = vld [vmem:[%s1104 + $0x38] sm:$0xff]
    %v1113 = vld [vmem:[%s1104 + $0x40] sm:$0xff]
    %v1114 = vld [vmem:[%s1104 + $0x48] sm:$0xff]
    %v1115 = vld [vmem:[%s1104 + $0x50] sm:$0xff]
    %v1116 = vld [vmem:[%s1104 + $0x58] sm:$0xff]
    %v1117 = vld [vmem:[%s1104 + $0x60] sm:$0xff]
    %v1118 = vld [vmem:[%s1104 + $0x68] sm:$0xff]
    %v1119 = vld [vmem:[%s1104 + $0x70] sm:$0xff]
    %v1120 = vld [vmem:[%s1104 + $0x78] sm:$0xff]
    %s1121 = scalar_lea.vmem %s4, 1
    %v1122 = vld [vmem:[%s1121] sm:$0x1]
    %s1123 = scalar_lea.vmem [#allocation2], 128
    %v1124 = vld [vmem:[%s1123] sm:$0xff]
    %v1125 = vld [vmem:[%s1123 + $0x8] sm:$0xff]
    %v1126 = vld [vmem:[%s1123 + $0x10] sm:$0xff]
    %v1127 = vld [vmem:[%s1123 + $0x18] sm:$0xff]
    %v1128 = vld [vmem:[%s1123 + $0x20] sm:$0xff]
    %v1129 = vld [vmem:[%s1123 + $0x28] sm:$0xff]
    %v1130 = vld [vmem:[%s1123 + $0x30] sm:$0xff]
    %v1131 = vld [vmem:[%s1123 + $0x38] sm:$0xff]
    %v1132 = vld [vmem:[%s1123 + $0x40] sm:$0xff]
    %v1133 = vld [vmem:[%s1123 + $0x48] sm:$0xff]
    %v1134 = vld [vmem:[%s1123 + $0x50] sm:$0xff]
    %v1135 = vld [vmem:[%s1123 + $0x58] sm:$0xff]
    %v1136 = vld [vmem:[%s1123 + $0x60] sm:$0xff]
    %v1137 = vld [vmem:[%s1123 + $0x68] sm:$0xff]
    %v1138 = vld [vmem:[%s1123 + $0x70] sm:$0xff]
    %v1139 = vld [vmem:[%s1123 + $0x78] sm:$0xff]
    %s1140 = scalar_lea.vmem %s3, 2
    %v1141 = vld [vmem:[%s1140] sm:$0x3]
    %v1143 = vlaneseq
    %v1144 = vshrl.u32 %v1143, 7
    %v1145 = vsub.s32 0, %v1144
    %v1146 = vrot.slane %v1141, %v1145
    %v1147 = vlaneseq
    %v1148 = vshrl.u32 %v1147, 7
    %v1149 = vsub.s32 1, %v1148
    %v1150 = vrot.slane %v1141, %v1149
    %v1154 = vsel %vm137, %v1103, 0
    %1156 = vmatprep.subr.mxu0 %v1125
    %1157 = vmatpush1.msra.mxu0 %v1124
    %1158 = vmatprep.subr.mxu0 %v1127
    %1159 = vmatpush1.msra.mxu0 %v1126
    %1160 = vmatprep.subr.mxu0 %v1129
    %1161 = vmatpush1.msra.mxu0 %v1128
    %1162 = vmatprep.subr.mxu0 %v1131
    %1163 = vmatpush1.msra.mxu0 %v1130
    %1164 = vmatprep.subr.mxu0 %v1133
    %1165 = vmatpush1.msra.mxu0 %v1132
    %1166 = vmatprep.subr.mxu0 %v1135
    %1167 = vmatpush1.msra.mxu0 %v1134
    %1168 = vmatprep.subr.mxu0 %v1137
    %1169 = vmatpush1.msra.mxu0 %v1136
    %1170 = vmatprep.subr.mxu0 %v1139
    %1171 = vmatpush1.msra.mxu0 %v1138
    %1172 = vmatprep.subr.mxu0 0.0
    %1173 = vmatpush1.msra.mxu0 0.0
    %1174 = vmatprep.subr.mxu0 0.0
    %1175 = vmatpush1.msra.mxu0 0.0
    %1176 = vmatprep.subr.mxu0 0.0
    %1177 = vmatpush1.msra.mxu0 0.0
    %1178 = vmatprep.subr.mxu0 0.0
    %1179 = vmatpush1.msra.mxu0 0.0
    %1180 = vmatprep.subr.mxu0 0.0
    %1181 = vmatpush1.msra.mxu0 0.0
    %1182 = vmatprep.subr.mxu0 0.0
    %1183 = vmatpush1.msra.mxu0 0.0
    %1184 = vmatprep.subr.mxu0 0.0
    %1185 = vmatpush1.msra.mxu0 0.0
    %1186 = vmatprep.subr.mxu0 0.0
    %1187 = vmatpush1.msra.mxu0 0.0
    %1188 = vmatprep.subr.mxu0 0.0
    %1189 = vmatpush1.msra.mxu0 0.0
    %1190 = vmatprep.subr.mxu0 0.0
    %1191 = vmatpush1.msra.mxu0 0.0
    %1192 = vmatprep.subr.mxu0 0.0
    %1193 = vmatpush1.msra.mxu0 0.0
    %1194 = vmatprep.subr.mxu0 0.0
    %1195 = vmatpush1.msra.mxu0 0.0
    %1196 = vmatprep.subr.mxu0 0.0
    %1197 = vmatpush1.msra.mxu0 0.0
    %1198 = vmatprep.subr.mxu0 0.0
    %1199 = vmatpush1.msra.mxu0 0.0
    %1200 = vmatprep.subr.mxu0 0.0
    %1201 = vmatpush1.msra.mxu0 0.0
    %1202 = vmatprep.subr.mxu0 0.0
    %1203 = vmatpush1.msra.mxu0 0.0
    %1204 = vmatprep.subr.mxu0 0.0
    %1205 = vmatpush1.msra.mxu0 0.0
    %1206 = vmatprep.subr.mxu0 0.0
    %1207 = vmatpush1.msra.mxu0 0.0
    %1208 = vmatprep.subr.mxu0 0.0
    %1209 = vmatpush1.msra.mxu0 0.0
    %1210 = vmatprep.subr.mxu0 0.0
    %1211 = vmatpush1.msra.mxu0 0.0
    %1212 = vmatprep.subr.mxu0 0.0
    %1213 = vmatpush1.msra.mxu0 0.0
    %1214 = vmatprep.subr.mxu0 0.0
    %1215 = vmatpush1.msra.mxu0 0.0
    %1216 = vmatprep.subr.mxu0 0.0
    %1217 = vmatpush1.msra.mxu0 0.0
    %1218 = vmatprep.subr.mxu0 0.0
    %1219 = vmatpush1.msra.mxu0 0.0
    %1220 = vmatprep.mubr.f32.mxu0 0.0
    %1221 = vmatmul.mubr.f32.gmra.mrb[0].mxu0 %v1154
    %v1222 = vpop.f32.mrb[0].mxu0
    %v1223 = vadd.f32 %v1146, %v1222
    %v1224 = vpop.f32.mrb[0].mxu0
    %v1225 = vadd.f32 %v1150, %v1224
    %1226 = vdwg.mxu0
    %v1229 = vrot.slane %v1223, 7
    %v1230 = vrot.slane %v1225, 7
    %v1233 = vrot.slane %v1223, 5
    %v1234 = vrot.slane %v1225, 5
    %v1237 = vrot.slane %v1223, 3
    %v1238 = vrot.slane %v1225, 3
    %v1241 = vrot.slane %v1223, 1
    %v1242 = vrot.slane %v1225, 1
    %v1245 = vsel %vm230, %v1229, %v1233
    %v1246 = vsel %vm230, %v1230, %v1234
    %v1247 = vsel %vm233, %v1245, %v1237
    %v1248 = vsel %vm233, %v1246, %v1238
    %v1249 = vsel %vm236, %v1247, %v1241
    %v1250 = vsel %vm236, %v1248, %v1242
    %v1251 = vsel %vm239, %v1249, %v1229
    %v1252 = vsel %vm239, %v1250, %v1230
    %v1253 = vsel %vm242, %v1251, %v1233
    %v1254 = vsel %vm242, %v1252, %v1234
    %v1255 = vsel %vm245, %v1253, %v1237
    %v1256 = vsel %vm245, %v1254, %v1238
    %v1257 = vsel %vm248, %v1255, %v1241
    %v1258 = vsel %vm248, %v1256, %v1242
    %v1259 = vsel %vm89, %v1223, %v1257
    %v1260 = vsel %vm90, %v1225, %v1258
    %1261 = vmatprep.subr.mxu0 %v1106
    %1262 = vmatpush1.msra.mxu0 %v1105
    %1263 = vmatprep.subr.mxu0 %v1108
    %1264 = vmatpush1.msra.mxu0 %v1107
    %1265 = vmatprep.subr.mxu0 %v1110
    %1266 = vmatpush1.msra.mxu0 %v1109
    %1267 = vmatprep.subr.mxu0 %v1112
    %1268 = vmatpush1.msra.mxu0 %v1111
    %1269 = vmatprep.subr.mxu0 %v1114
    %1270 = vmatpush1.msra.mxu0 %v1113
    %1271 = vmatprep.subr.mxu0 %v1116
    %1272 = vmatpush1.msra.mxu0 %v1115
    %1273 = vmatprep.subr.mxu0 %v1118
    %1274 = vmatpush1.msra.mxu0 %v1117
    %1275 = vmatprep.subr.mxu0 %v1120
    %1276 = vmatpush1.msra.mxu0 %v1119
    %1277 = vmatprep.subr.mxu0 0.0
    %1278 = vmatpush1.msra.mxu0 0.0
    %1279 = vmatprep.subr.mxu0 0.0
    %1280 = vmatpush1.msra.mxu0 0.0
    %1281 = vmatprep.subr.mxu0 0.0
    %1282 = vmatpush1.msra.mxu0 0.0
    %1283 = vmatprep.subr.mxu0 0.0
    %1284 = vmatpush1.msra.mxu0 0.0
    %1285 = vmatprep.subr.mxu0 0.0
    %1286 = vmatpush1.msra.mxu0 0.0
    %1287 = vmatprep.subr.mxu0 0.0
    %1288 = vmatpush1.msra.mxu0 0.0
    %1289 = vmatprep.subr.mxu0 0.0
    %1290 = vmatpush1.msra.mxu0 0.0
    %1291 = vmatprep.subr.mxu0 0.0
    %1292 = vmatpush1.msra.mxu0 0.0
    %1293 = vmatprep.subr.mxu0 0.0
    %1294 = vmatpush1.msra.mxu0 0.0
    %1295 = vmatprep.subr.mxu0 0.0
    %1296 = vmatpush1.msra.mxu0 0.0
    %1297 = vmatprep.subr.mxu0 0.0
    %1298 = vmatpush1.msra.mxu0 0.0
    %1299 = vmatprep.subr.mxu0 0.0
    %1300 = vmatpush1.msra.mxu0 0.0
    %1301 = vmatprep.subr.mxu0 0.0
    %1302 = vmatpush1.msra.mxu0 0.0
    %1303 = vmatprep.subr.mxu0 0.0
    %1304 = vmatpush1.msra.mxu0 0.0
    %1305 = vmatprep.subr.mxu0 0.0
    %1306 = vmatpush1.msra.mxu0 0.0
    %1307 = vmatprep.subr.mxu0 0.0
    %1308 = vmatpush1.msra.mxu0 0.0
    %1309 = vmatprep.subr.mxu0 0.0
    %1310 = vmatpush1.msra.mxu0 0.0
    %1311 = vmatprep.subr.mxu0 0.0
    %1312 = vmatpush1.msra.mxu0 0.0
    %1313 = vmatprep.subr.mxu0 0.0
    %1314 = vmatpush1.msra.mxu0 0.0
    %1315 = vmatprep.subr.mxu0 0.0
    %1316 = vmatpush1.msra.mxu0 0.0
    %1317 = vmatprep.subr.mxu0 0.0
    %1318 = vmatpush1.msra.mxu0 0.0
    %1319 = vmatprep.subr.mxu0 0.0
    %1320 = vmatpush1.msra.mxu0 0.0
    %1321 = vmatprep.subr.mxu0 0.0
    %1322 = vmatpush1.msra.mxu0 0.0
    %1323 = vmatprep.subr.mxu0 0.0
    %1324 = vmatpush1.msra.mxu0 0.0
    %1325 = vmatprep.mubr.f32.mxu0 0.0
    %1326 = vmatmul.mubr.f32.gmra.mrb[0].mxu0 %v254
    %v1327 = vpop.f32.mrb[0].mxu0
    %v1328 = vadd.f32 0.0, %v1327
    %v1329 = vpop.f32.mrb[0].mxu0
    %v1330 = vadd.f32 0.0, %v1329
    %1331 = vdwg.mxu0
    %v1332 = vadd.f32 %v1259, %v1328
    %v1333 = vxor.u32 %v1332, 2147483648
    %v1334 = vmul.f32 %v1333, 1.442695
    %v1335 = vpow.pop %v1334
    %v1336 = vadd.f32 %v1335, 1.0
    %v1337 = vrcp.pop %v1336
    %v1338 = vmul.f32 1.0, %v1337
    %v1339 = vadd.f32 %v1330, %v1122
    %v1340 = vmul.f32 %v1338, %v1339
    %v1341 = vadd.f32 %v1260, %v1340
    %v1342 = vtanh.pop %v1341
    %v1343 = vsub.f32 1.0, %v1338
    %1345 = vrot.lane.b32.xlu0 %v1342, 64
    %v1346 = vpop.permute.xlu0 %1345
    %v1348 = vmul.f32 %v1343, %v1346
    %v1349 = vmul.f32 %v1338, 0.0
    %v1350 = vadd.f32 %v1348, %v1349
    %1352 = vrot.lane.b32.xlu0 %v1350, 64
    %v1353 = vpop.permute.xlu0 %1352
    %v1354 = vsel %vm137, %v1353, 0
    %1356 = vmatprep.subr.mxu0 %v1106
    %1357 = vmatpush1.msra.mxu0 %v1105
    %1358 = vmatprep.subr.mxu0 %v1108
    %1359 = vmatpush1.msra.mxu0 %v1107
    %1360 = vmatprep.subr.mxu0 %v1110
    %1361 = vmatpush1.msra.mxu0 %v1109
    %1362 = vmatprep.subr.mxu0 %v1112
    %1363 = vmatpush1.msra.mxu0 %v1111
    %1364 = vmatprep.subr.mxu0 %v1114
    %1365 = vmatpush1.msra.mxu0 %v1113
    %1366 = vmatprep.subr.mxu0 %v1116
    %1367 = vmatpush1.msra.mxu0 %v1115
    %1368 = vmatprep.subr.mxu0 %v1118
    %1369 = vmatpush1.msra.mxu0 %v1117
    %1370 = vmatprep.subr.mxu0 %v1120
    %1371 = vmatpush1.msra.mxu0 %v1119
    %1372 = vmatprep.subr.mxu0 0.0
    %1373 = vmatpush1.msra.mxu0 0.0
    %1374 = vmatprep.subr.mxu0 0.0
    %1375 = vmatpush1.msra.mxu0 0.0
    %1376 = vmatprep.subr.mxu0 0.0
    %1377 = vmatpush1.msra.mxu0 0.0
    %1378 = vmatprep.subr.mxu0 0.0
    %1379 = vmatpush1.msra.mxu0 0.0
    %1380 = vmatprep.subr.mxu0 0.0
    %1381 = vmatpush1.msra.mxu0 0.0
    %1382 = vmatprep.subr.mxu0 0.0
    %1383 = vmatpush1.msra.mxu0 0.0
    %1384 = vmatprep.subr.mxu0 0.0
    %1385 = vmatpush1.msra.mxu0 0.0
    %1386 = vmatprep.subr.mxu0 0.0
    %1387 = vmatpush1.msra.mxu0 0.0
    %1388 = vmatprep.subr.mxu0 0.0
    %1389 = vmatpush1.msra.mxu0 0.0
    %1390 = vmatprep.subr.mxu0 0.0
    %1391 = vmatpush1.msra.mxu0 0.0
    %1392 = vmatprep.subr.mxu0 0.0
    %1393 = vmatpush1.msra.mxu0 0.0
    %1394 = vmatprep.subr.mxu0 0.0
    %1395 = vmatpush1.msra.mxu0 0.0
    %1396 = vmatprep.subr.mxu0 0.0
    %1397 = vmatpush1.msra.mxu0 0.0
    %1398 = vmatprep.subr.mxu0 0.0
    %1399 = vmatpush1.msra.mxu0 0.0
    %1400 = vmatprep.subr.mxu0 0.0
    %1401 = vmatpush1.msra.mxu0 0.0
    %1402 = vmatprep.subr.mxu0 0.0
    %1403 = vmatpush1.msra.mxu0 0.0
    %1404 = vmatprep.subr.mxu0 0.0
    %1405 = vmatpush1.msra.mxu0 0.0
    %1406 = vmatprep.subr.mxu0 0.0
    %1407 = vmatpush1.msra.mxu0 0.0
    %1408 = vmatprep.subr.mxu0 0.0
    %1409 = vmatpush1.msra.mxu0 0.0
    %1410 = vmatprep.subr.mxu0 0.0
    %1411 = vmatpush1.msra.mxu0 0.0
    %1412 = vmatprep.subr.mxu0 0.0
    %1413 = vmatpush1.msra.mxu0 0.0
    %1414 = vmatprep.subr.mxu0 0.0
    %1415 = vmatpush1.msra.mxu0 0.0
    %1416 = vmatprep.subr.mxu0 0.0
    %1417 = vmatpush1.msra.mxu0 0.0
    %1418 = vmatprep.subr.mxu0 0.0
    %1419 = vmatpush1.msra.mxu0 0.0
    %1420 = vmatprep.mubr.f32.mxu0 0.0
    %1421 = vmatmul.mubr.f32.gmra.mrb[0].mxu0 %v1354
    %v1422 = vpop.f32.mrb[0].mxu0
    %v1423 = vadd.f32 0.0, %v1422
    %v1424 = vpop.f32.mrb[0].mxu0
    %v1425 = vadd.f32 0.0, %v1424
    %1426 = vdwg.mxu0
    %v1428 = vrot.slane %v1423, 7
    %v1430 = vadd.f32 %v1259, %v1428
    %v1431 = vxor.u32 %v1430, 2147483648
    %v1432 = vmul.f32 %v1431, 1.442695
    %v1433 = vpow.pop %v1432
    %v1434 = vadd.f32 %v1433, 1.0
    %v1435 = vrcp.pop %v1434
    %v1436 = vmul.f32 1.0, %v1435
    %v1437 = vadd.f32 %v1425, %v1122
    %v1439 = vrot.slane %v1437, 7
    %v1441 = vmul.f32 %v1436, %v1439
    %v1442 = vadd.f32 %v1260, %v1441
    %v1443 = vtanh.pop %v1442
    %v1444 = vsub.f32 1.0, %v1436
    %1446 = vrot.lane.b32.xlu0 %v1443, 64
    %v1447 = vpop.permute.xlu0 %1446
    %v1449 = vmul.f32 %v1444, %v1447
    %v1450 = vrot.slane %v1350, 7
    %v1452 = vmul.f32 %v1436, %v1450
    %v1453 = vadd.f32 %v1449, %v1452
    %v1455 = vrot.slane %v1453, 1
    %1456 = vrot.lane.b32.xlu0 %v1455, 64
    %v1457 = vpop.permute.xlu0 %1456
    %v1458 = vsel %vm137, %v1457, 0
    %1460 = vmatprep.subr.mxu0 %v1106
    %1461 = vmatpush1.msra.mxu0 %v1105
    %1462 = vmatprep.subr.mxu0 %v1108
    %1463 = vmatpush1.msra.mxu0 %v1107
    %1464 = vmatprep.subr.mxu0 %v1110
    %1465 = vmatpush1.msra.mxu0 %v1109
    %1466 = vmatprep.subr.mxu0 %v1112
    %1467 = vmatpush1.msra.mxu0 %v1111
    %1468 = vmatprep.subr.mxu0 %v1114
    %1469 = vmatpush1.msra.mxu0 %v1113
    %1470 = vmatprep.subr.mxu0 %v1116
    %1471 = vmatpush1.msra.mxu0 %v1115
    %1472 = vmatprep.subr.mxu0 %v1118
    %1473 = vmatpush1.msra.mxu0 %v1117
    %1474 = vmatprep.subr.mxu0 %v1120
    %1475 = vmatpush1.msra.mxu0 %v1119
    %1476 = vmatprep.subr.mxu0 0.0
    %1477 = vmatpush1.msra.mxu0 0.0
    %1478 = vmatprep.subr.mxu0 0.0
    %1479 = vmatpush1.msra.mxu0 0.0
    %1480 = vmatprep.subr.mxu0 0.0
    %1481 = vmatpush1.msra.mxu0 0.0
    %1482 = vmatprep.subr.mxu0 0.0
    %1483 = vmatpush1.msra.mxu0 0.0
    %1484 = vmatprep.subr.mxu0 0.0
    %1485 = vmatpush1.msra.mxu0 0.0
    %1486 = vmatprep.subr.mxu0 0.0
    %1487 = vmatpush1.msra.mxu0 0.0
    %1488 = vmatprep.subr.mxu0 0.0
    %1489 = vmatpush1.msra.mxu0 0.0
    %1490 = vmatprep.subr.mxu0 0.0
    %1491 = vmatpush1.msra.mxu0 0.0
    %1492 = vmatprep.subr.mxu0 0.0
    %1493 = vmatpush1.msra.mxu0 0.0
    %1494 = vmatprep.subr.mxu0 0.0
    %1495 = vmatpush1.msra.mxu0 0.0
    %1496 = vmatprep.subr.mxu0 0.0
    %1497 = vmatpush1.msra.mxu0 0.0
    %1498 = vmatprep.subr.mxu0 0.0
    %1499 = vmatpush1.msra.mxu0 0.0
    %1500 = vmatprep.subr.mxu0 0.0
    %1501 = vmatpush1.msra.mxu0 0.0
    %1502 = vmatprep.subr.mxu0 0.0
    %1503 = vmatpush1.msra.mxu0 0.0
    %1504 = vmatprep.subr.mxu0 0.0
    %1505 = vmatpush1.msra.mxu0 0.0
    %1506 = vmatprep.subr.mxu0 0.0
    %1507 = vmatpush1.msra.mxu0 0.0
    %1508 = vmatprep.subr.mxu0 0.0
    %1509 = vmatpush1.msra.mxu0 0.0
    %1510 = vmatprep.subr.mxu0 0.0
    %1511 = vmatpush1.msra.mxu0 0.0
    %1512 = vmatprep.subr.mxu0 0.0
    %1513 = vmatpush1.msra.mxu0 0.0
    %1514 = vmatprep.subr.mxu0 0.0
    %1515 = vmatpush1.msra.mxu0 0.0
    %1516 = vmatprep.subr.mxu0 0.0
    %1517 = vmatpush1.msra.mxu0 0.0
    %1518 = vmatprep.subr.mxu0 0.0
    %1519 = vmatpush1.msra.mxu0 0.0
    %1520 = vmatprep.subr.mxu0 0.0
    %1521 = vmatpush1.msra.mxu0 0.0
    %1522 = vmatprep.subr.mxu0 0.0
    %1523 = vmatpush1.msra.mxu0 0.0
    %1524 = vmatprep.mubr.f32.mxu0 0.0
    %1525 = vmatmul.mubr.f32.gmra.mrb[0].mxu0 %v1458
    %v1526 = vpop.f32.mrb[0].mxu0
    %v1527 = vadd.f32 0.0, %v1526
    %v1528 = vpop.f32.mrb[0].mxu0
    %v1529 = vadd.f32 0.0, %v1528
    %1530 = vdwg.mxu0
    %v1532 = vrot.slane %v1527, 6
    %v1534 = vadd.f32 %v1259, %v1532
    %v1535 = vxor.u32 %v1534, 2147483648
    %v1536 = vmul.f32 %v1535, 1.442695
    %v1537 = vpow.pop %v1536
    %v1538 = vadd.f32 %v1537, 1.0
    %v1539 = vrcp.pop %v1538
    %v1540 = vmul.f32 1.0, %v1539
    %v1541 = vadd.f32 %v1529, %v1122
    %v1543 = vrot.slane %v1541, 6
    %v1545 = vmul.f32 %v1540, %v1543
    %v1546 = vadd.f32 %v1260, %v1545
    %v1547 = vtanh.pop %v1546
    %v1548 = vsub.f32 1.0, %v1540
    %1550 = vrot.lane.b32.xlu0 %v1547, 64
    %v1551 = vpop.permute.xlu0 %1550
    %v1553 = vmul.f32 %v1548, %v1551
    %v1554 = vrot.slane %v1453, 7
    %v1556 = vmul.f32 %v1540, %v1554
    %v1557 = vadd.f32 %v1553, %v1556
    %v1559 = vrot.slane %v1557, 2
    %1560 = vrot.lane.b32.xlu0 %v1559, 64
    %v1561 = vpop.permute.xlu0 %1560
    %v1562 = vsel %vm137, %v1561, 0
    %1564 = vmatprep.subr.mxu0 %v1106
    %1565 = vmatpush1.msra.mxu0 %v1105
    %1566 = vmatprep.subr.mxu0 %v1108
    %1567 = vmatpush1.msra.mxu0 %v1107
    %1568 = vmatprep.subr.mxu0 %v1110
    %1569 = vmatpush1.msra.mxu0 %v1109
    %1570 = vmatprep.subr.mxu0 %v1112
    %1571 = vmatpush1.msra.mxu0 %v1111
    %1572 = vmatprep.subr.mxu0 %v1114
    %1573 = vmatpush1.msra.mxu0 %v1113
    %1574 = vmatprep.subr.mxu0 %v1116
    %1575 = vmatpush1.msra.mxu0 %v1115
    %1576 = vmatprep.subr.mxu0 %v1118
    %1577 = vmatpush1.msra.mxu0 %v1117
    %1578 = vmatprep.subr.mxu0 %v1120
    %1579 = vmatpush1.msra.mxu0 %v1119
    %1580 = vmatprep.subr.mxu0 0.0
    %1581 = vmatpush1.msra.mxu0 0.0
    %1582 = vmatprep.subr.mxu0 0.0
    %1583 = vmatpush1.msra.mxu0 0.0
    %1584 = vmatprep.subr.mxu0 0.0
    %1585 = vmatpush1.msra.mxu0 0.0
    %1586 = vmatprep.subr.mxu0 0.0
    %1587 = vmatpush1.msra.mxu0 0.0
    %1588 = vmatprep.subr.mxu0 0.0
    %1589 = vmatpush1.msra.mxu0 0.0
    %1590 = vmatprep.subr.mxu0 0.0
    %1591 = vmatpush1.msra.mxu0 0.0
    %1592 = vmatprep.subr.mxu0 0.0
    %1593 = vmatpush1.msra.mxu0 0.0
    %1594 = vmatprep.subr.mxu0 0.0
    %1595 = vmatpush1.msra.mxu0 0.0
    %1596 = vmatprep.subr.mxu0 0.0
    %1597 = vmatpush1.msra.mxu0 0.0
    %1598 = vmatprep.subr.mxu0 0.0
    %1599 = vmatpush1.msra.mxu0 0.0
    %1600 = vmatprep.subr.mxu0 0.0
    %1601 = vmatpush1.msra.mxu0 0.0
    %1602 = vmatprep.subr.mxu0 0.0
    %1603 = vmatpush1.msra.mxu0 0.0
    %1604 = vmatprep.subr.mxu0 0.0
    %1605 = vmatpush1.msra.mxu0 0.0
    %1606 = vmatprep.subr.mxu0 0.0
    %1607 = vmatpush1.msra.mxu0 0.0
    %1608 = vmatprep.subr.mxu0 0.0
    %1609 = vmatpush1.msra.mxu0 0.0
    %1610 = vmatprep.subr.mxu0 0.0
    %1611 = vmatpush1.msra.mxu0 0.0
    %1612 = vmatprep.subr.mxu0 0.0
    %1613 = vmatpush1.msra.mxu0 0.0
    %1614 = vmatprep.subr.mxu0 0.0
    %1615 = vmatpush1.msra.mxu0 0.0
    %1616 = vmatprep.subr.mxu0 0.0
    %1617 = vmatpush1.msra.mxu0 0.0
    %1618 = vmatprep.subr.mxu0 0.0
    %1619 = vmatpush1.msra.mxu0 0.0
    %1620 = vmatprep.subr.mxu0 0.0
    %1621 = vmatpush1.msra.mxu0 0.0
    %1622 = vmatprep.subr.mxu0 0.0
    %1623 = vmatpush1.msra.mxu0 0.0
    %1624 = vmatprep.subr.mxu0 0.0
    %1625 = vmatpush1.msra.mxu0 0.0
    %1626 = vmatprep.subr.mxu0 0.0
    %1627 = vmatpush1.msra.mxu0 0.0
    %1628 = vmatprep.mubr.f32.mxu0 0.0
    %1629 = vmatmul.mubr.f32.gmra.mrb[0].mxu0 %v1562
    %v1630 = vpop.f32.mrb[0].mxu0
    %v1631 = vadd.f32 0.0, %v1630
    %v1632 = vpop.f32.mrb[0].mxu0
    %v1633 = vadd.f32 0.0, %v1632
    %1634 = vdwg.mxu0
    %v1636 = vrot.slane %v1631, 5
    %v1638 = vadd.f32 %v1259, %v1636
    %v1639 = vxor.u32 %v1638, 2147483648
    %v1640 = vmul.f32 %v1639, 1.442695
    %v1641 = vpow.pop %v1640
    %v1642 = vadd.f32 %v1641, 1.0
    %v1643 = vrcp.pop %v1642
    %v1644 = vmul.f32 1.0, %v1643
    %v1645 = vadd.f32 %v1633, %v1122
    %v1647 = vrot.slane %v1645, 5
    %v1649 = vmul.f32 %v1644, %v1647
    %v1650 = vadd.f32 %v1260, %v1649
    %v1651 = vtanh.pop %v1650
    %v1652 = vsub.f32 1.0, %v1644
    %1654 = vrot.lane.b32.xlu0 %v1651, 64
    %v1655 = vpop.permute.xlu0 %1654
    %v1657 = vmul.f32 %v1652, %v1655
    %v1658 = vrot.slane %v1557, 7
    %v1660 = vmul.f32 %v1644, %v1658
    %v1661 = vadd.f32 %v1657, %v1660
    %v1663 = vrot.slane %v1661, 3
    %1664 = vrot.lane.b32.xlu0 %v1663, 64
    %v1665 = vpop.permute.xlu0 %1664
    %v1666 = vsel %vm137, %v1665, 0
    %1668 = vmatprep.subr.mxu0 %v1106
    %1669 = vmatpush1.msra.mxu0 %v1105
    %1670 = vmatprep.subr.mxu0 %v1108
    %1671 = vmatpush1.msra.mxu0 %v1107
    %1672 = vmatprep.subr.mxu0 %v1110
    %1673 = vmatpush1.msra.mxu0 %v1109
    %1674 = vmatprep.subr.mxu0 %v1112
    %1675 = vmatpush1.msra.mxu0 %v1111
    %1676 = vmatprep.subr.mxu0 %v1114
    %1677 = vmatpush1.msra.mxu0 %v1113
    %1678 = vmatprep.subr.mxu0 %v1116
    %1679 = vmatpush1.msra.mxu0 %v1115
    %1680 = vmatprep.subr.mxu0 %v1118
    %1681 = vmatpush1.msra.mxu0 %v1117
    %1682 = vmatprep.subr.mxu0 %v1120
    %1683 = vmatpush1.msra.mxu0 %v1119
    %1684 = vmatprep.subr.mxu0 0.0
    %1685 = vmatpush1.msra.mxu0 0.0
    %1686 = vmatprep.subr.mxu0 0.0
    %1687 = vmatpush1.msra.mxu0 0.0
    %1688 = vmatprep.subr.mxu0 0.0
    %1689 = vmatpush1.msra.mxu0 0.0
    %1690 = vmatprep.subr.mxu0 0.0
    %1691 = vmatpush1.msra.mxu0 0.0
    %1692 = vmatprep.subr.mxu0 0.0
    %1693 = vmatpush1.msra.mxu0 0.0
    %1694 = vmatprep.subr.mxu0 0.0
    %1695 = vmatpush1.msra.mxu0 0.0
    %1696 = vmatprep.subr.mxu0 0.0
    %1697 = vmatpush1.msra.mxu0 0.0
    %1698 = vmatprep.subr.mxu0 0.0
    %1699 = vmatpush1.msra.mxu0 0.0
    %1700 = vmatprep.subr.mxu0 0.0
    %1701 = vmatpush1.msra.mxu0 0.0
    %1702 = vmatprep.subr.mxu0 0.0
    %1703 = vmatpush1.msra.mxu0 0.0
    %1704 = vmatprep.subr.mxu0 0.0
    %1705 = vmatpush1.msra.mxu0 0.0
    %1706 = vmatprep.subr.mxu0 0.0
    %1707 = vmatpush1.msra.mxu0 0.0
    %1708 = vmatprep.subr.mxu0 0.0
    %1709 = vmatpush1.msra.mxu0 0.0
    %1710 = vmatprep.subr.mxu0 0.0
    %1711 = vmatpush1.msra.mxu0 0.0
    %1712 = vmatprep.subr.mxu0 0.0
    %1713 = vmatpush1.msra.mxu0 0.0
    %1714 = vmatprep.subr.mxu0 0.0
    %1715 = vmatpush1.msra.mxu0 0.0
    %1716 = vmatprep.subr.mxu0 0.0
    %1717 = vmatpush1.msra.mxu0 0.0
    %1718 = vmatprep.subr.mxu0 0.0
    %1719 = vmatpush1.msra.mxu0 0.0
    %1720 = vmatprep.subr.mxu0 0.0
    %1721 = vmatpush1.msra.mxu0 0.0
    %1722 = vmatprep.subr.mxu0 0.0
    %1723 = vmatpush1.msra.mxu0 0.0
    %1724 = vmatprep.subr.mxu0 0.0
    %1725 = vmatpush1.msra.mxu0 0.0
    %1726 = vmatprep.subr.mxu0 0.0
    %1727 = vmatpush1.msra.mxu0 0.0
    %1728 = vmatprep.subr.mxu0 0.0
    %1729 = vmatpush1.msra.mxu0 0.0
    %1730 = vmatprep.subr.mxu0 0.0
    %1731 = vmatpush1.msra.mxu0 0.0
    %1732 = vmatprep.mubr.f32.mxu0 0.0
    %1733 = vmatmul.mubr.f32.gmra.mrb[0].mxu0 %v1666
    %v1734 = vpop.f32.mrb[0].mxu0
    %v1735 = vadd.f32 0.0, %v1734
    %v1736 = vpop.f32.mrb[0].mxu0
    %v1737 = vadd.f32 0.0, %v1736
    %1738 = vdwg.mxu0
    %v1740 = vrot.slane %v1735, 4
    %v1742 = vadd.f32 %v1259, %v1740
    %v1743 = vxor.u32 %v1742, 2147483648
    %v1744 = vmul.f32 %v1743, 1.442695
    %v1745 = vpow.pop %v1744
    %v1746 = vadd.f32 %v1745, 1.0
    %v1747 = vrcp.pop %v1746
    %v1748 = vmul.f32 1.0, %v1747
    %v1749 = vadd.f32 %v1737, %v1122
    %v1751 = vrot.slane %v1749, 4
    %v1753 = vmul.f32 %v1748, %v1751
    %v1754 = vadd.f32 %v1260, %v1753
    %v1755 = vtanh.pop %v1754
    %v1756 = vsub.f32 1.0, %v1748
    %1758 = vrot.lane.b32.xlu0 %v1755, 64
    %v1759 = vpop.permute.xlu0 %1758
    %v1761 = vmul.f32 %v1756, %v1759
    %v1762 = vrot.slane %v1661, 7
    %v1764 = vmul.f32 %v1748, %v1762
    %v1765 = vadd.f32 %v1761, %v1764
    %v1767 = vrot.slane %v1765, 4
    %1768 = vrot.lane.b32.xlu0 %v1767, 64
    %v1769 = vpop.permute.xlu0 %1768
    %v1770 = vsel %vm137, %v1769, 0
    %1772 = vmatprep.subr.mxu0 %v1106
    %1773 = vmatpush1.msra.mxu0 %v1105
    %1774 = vmatprep.subr.mxu0 %v1108
    %1775 = vmatpush1.msra.mxu0 %v1107
    %1776 = vmatprep.subr.mxu0 %v1110
    %1777 = vmatpush1.msra.mxu0 %v1109
    %1778 = vmatprep.subr.mxu0 %v1112
    %1779 = vmatpush1.msra.mxu0 %v1111
    %1780 = vmatprep.subr.mxu0 %v1114
    %1781 = vmatpush1.msra.mxu0 %v1113
    %1782 = vmatprep.subr.mxu0 %v1116
    %1783 = vmatpush1.msra.mxu0 %v1115
    %1784 = vmatprep.subr.mxu0 %v1118
    %1785 = vmatpush1.msra.mxu0 %v1117
    %1786 = vmatprep.subr.mxu0 %v1120
    %1787 = vmatpush1.msra.mxu0 %v1119
    %1788 = vmatprep.subr.mxu0 0.0
    %1789 = vmatpush1.msra.mxu0 0.0
    %1790 = vmatprep.subr.mxu0 0.0
    %1791 = vmatpush1.msra.mxu0 0.0
    %1792 = vmatprep.subr.mxu0 0.0
    %1793 = vmatpush1.msra.mxu0 0.0
    %1794 = vmatprep.subr.mxu0 0.0
    %1795 = vmatpush1.msra.mxu0 0.0
    %1796 = vmatprep.subr.mxu0 0.0
    %1797 = vmatpush1.msra.mxu0 0.0
    %1798 = vmatprep.subr.mxu0 0.0
    %1799 = vmatpush1.msra.mxu0 0.0
    %1800 = vmatprep.subr.mxu0 0.0
    %1801 = vmatpush1.msra.mxu0 0.0
    %1802 = vmatprep.subr.mxu0 0.0
    %1803 = vmatpush1.msra.mxu0 0.0
    %1804 = vmatprep.subr.mxu0 0.0
    %1805 = vmatpush1.msra.mxu0 0.0
    %1806 = vmatprep.subr.mxu0 0.0
    %1807 = vmatpush1.msra.mxu0 0.0
    %1808 = vmatprep.subr.mxu0 0.0
    %1809 = vmatpush1.msra.mxu0 0.0
    %1810 = vmatprep.subr.mxu0 0.0
    %1811 = vmatpush1.msra.mxu0 0.0
    %1812 = vmatprep.subr.mxu0 0.0
    %1813 = vmatpush1.msra.mxu0 0.0
    %1814 = vmatprep.subr.mxu0 0.0
    %1815 = vmatpush1.msra.mxu0 0.0
    %1816 = vmatprep.subr.mxu0 0.0
    %1817 = vmatpush1.msra.mxu0 0.0
    %1818 = vmatprep.subr.mxu0 0.0
    %1819 = vmatpush1.msra.mxu0 0.0
    %1820 = vmatprep.subr.mxu0 0.0
    %1821 = vmatpush1.msra.mxu0 0.0
    %1822 = vmatprep.subr.mxu0 0.0
    %1823 = vmatpush1.msra.mxu0 0.0
    %1824 = vmatprep.subr.mxu0 0.0
    %1825 = vmatpush1.msra.mxu0 0.0
    %1826 = vmatprep.subr.mxu0 0.0
    %1827 = vmatpush1.msra.mxu0 0.0
    %1828 = vmatprep.subr.mxu0 0.0
    %1829 = vmatpush1.msra.mxu0 0.0
    %1830 = vmatprep.subr.mxu0 0.0
    %1831 = vmatpush1.msra.mxu0 0.0
    %1832 = vmatprep.subr.mxu0 0.0
    %1833 = vmatpush1.msra.mxu0 0.0
    %1834 = vmatprep.subr.mxu0 0.0
    %1835 = vmatpush1.msra.mxu0 0.0
    %1836 = vmatprep.mubr.f32.mxu0 0.0
    %1837 = vmatmul.mubr.f32.gmra.mrb[0].mxu0 %v1770
    %v1838 = vpop.f32.mrb[0].mxu0
    %v1839 = vadd.f32 0.0, %v1838
    %v1840 = vpop.f32.mrb[0].mxu0
    %v1841 = vadd.f32 0.0, %v1840
    %1842 = vdwg.mxu0
    %v1844 = vrot.slane %v1839, 3
    %v1846 = vadd.f32 %v1259, %v1844
    %v1847 = vxor.u32 %v1846, 2147483648
    %v1848 = vmul.f32 %v1847, 1.442695
    %v1849 = vpow.pop %v1848
    %v1850 = vadd.f32 %v1849, 1.0
    %v1851 = vrcp.pop %v1850
    %v1852 = vmul.f32 1.0, %v1851
    %v1853 = vadd.f32 %v1841, %v1122
    %v1855 = vrot.slane %v1853, 3
    %v1857 = vmul.f32 %v1852, %v1855
    %v1858 = vadd.f32 %v1260, %v1857
    %v1859 = vtanh.pop %v1858
    %v1860 = vsub.f32 1.0, %v1852
    %1862 = vrot.lane.b32.xlu0 %v1859, 64
    %v1863 = vpop.permute.xlu0 %1862
    %v1865 = vmul.f32 %v1860, %v1863
    %v1866 = vrot.slane %v1765, 7
    %v1868 = vmul.f32 %v1852, %v1866
    %v1869 = vadd.f32 %v1865, %v1868
    %v1871 = vrot.slane %v1869, 5
    %1872 = vrot.lane.b32.xlu0 %v1871, 64
    %v1873 = vpop.permute.xlu0 %1872
    %v1874 = vsel %vm137, %v1873, 0
    %1876 = vmatprep.subr.mxu0 %v1106
    %1877 = vmatpush1.msra.mxu0 %v1105
    %1878 = vmatprep.subr.mxu0 %v1108
    %1879 = vmatpush1.msra.mxu0 %v1107
    %1880 = vmatprep.subr.mxu0 %v1110
    %1881 = vmatpush1.msra.mxu0 %v1109
    %1882 = vmatprep.subr.mxu0 %v1112
    %1883 = vmatpush1.msra.mxu0 %v1111
    %1884 = vmatprep.subr.mxu0 %v1114
    %1885 = vmatpush1.msra.mxu0 %v1113
    %1886 = vmatprep.subr.mxu0 %v1116
    %1887 = vmatpush1.msra.mxu0 %v1115
    %1888 = vmatprep.subr.mxu0 %v1118
    %1889 = vmatpush1.msra.mxu0 %v1117
    %1890 = vmatprep.subr.mxu0 %v1120
    %1891 = vmatpush1.msra.mxu0 %v1119
    %1892 = vmatprep.subr.mxu0 0.0
    %1893 = vmatpush1.msra.mxu0 0.0
    %1894 = vmatprep.subr.mxu0 0.0
    %1895 = vmatpush1.msra.mxu0 0.0
    %1896 = vmatprep.subr.mxu0 0.0
    %1897 = vmatpush1.msra.mxu0 0.0
    %1898 = vmatprep.subr.mxu0 0.0
    %1899 = vmatpush1.msra.mxu0 0.0
    %1900 = vmatprep.subr.mxu0 0.0
    %1901 = vmatpush1.msra.mxu0 0.0
    %1902 = vmatprep.subr.mxu0 0.0
    %1903 = vmatpush1.msra.mxu0 0.0
    %1904 = vmatprep.subr.mxu0 0.0
    %1905 = vmatpush1.msra.mxu0 0.0
    %1906 = vmatprep.subr.mxu0 0.0
    %1907 = vmatpush1.msra.mxu0 0.0
    %1908 = vmatprep.subr.mxu0 0.0
    %1909 = vmatpush1.msra.mxu0 0.0
    %1910 = vmatprep.subr.mxu0 0.0
    %1911 = vmatpush1.msra.mxu0 0.0
    %1912 = vmatprep.subr.mxu0 0.0
    %1913 = vmatpush1.msra.mxu0 0.0
    %1914 = vmatprep.subr.mxu0 0.0
    %1915 = vmatpush1.msra.mxu0 0.0
    %1916 = vmatprep.subr.mxu0 0.0
    %1917 = vmatpush1.msra.mxu0 0.0
    %1918 = vmatprep.subr.mxu0 0.0
    %1919 = vmatpush1.msra.mxu0 0.0
    %1920 = vmatprep.subr.mxu0 0.0
    %1921 = vmatpush1.msra.mxu0 0.0
    %1922 = vmatprep.subr.mxu0 0.0
    %1923 = vmatpush1.msra.mxu0 0.0
    %1924 = vmatprep.subr.mxu0 0.0
    %1925 = vmatpush1.msra.mxu0 0.0
    %1926 = vmatprep.subr.mxu0 0.0
    %1927 = vmatpush1.msra.mxu0 0.0
    %1928 = vmatprep.subr.mxu0 0.0
    %1929 = vmatpush1.msra.mxu0 0.0
    %1930 = vmatprep.subr.mxu0 0.0
    %1931 = vmatpush1.msra.mxu0 0.0
    %1932 = vmatprep.subr.mxu0 0.0
    %1933 = vmatpush1.msra.mxu0 0.0
    %1934 = vmatprep.subr.mxu0 0.0
    %1935 = vmatpush1.msra.mxu0 0.0
    %1936 = vmatprep.subr.mxu0 0.0
    %1937 = vmatpush1.msra.mxu0 0.0
    %1938 = vmatprep.subr.mxu0 0.0
    %1939 = vmatpush1.msra.mxu0 0.0
    %1940 = vmatprep.mubr.f32.mxu0 0.0
    %1941 = vmatmul.mubr.f32.gmra.mrb[0].mxu0 %v1874
    %v1942 = vpop.f32.mrb[0].mxu0
    %v1943 = vadd.f32 0.0, %v1942
    %v1944 = vpop.f32.mrb[0].mxu0
    %v1945 = vadd.f32 0.0, %v1944
    %1946 = vdwg.mxu0
    %v1948 = vrot.slane %v1943, 2
    %v1950 = vadd.f32 %v1259, %v1948
    %v1951 = vxor.u32 %v1950, 2147483648
    %v1952 = vmul.f32 %v1951, 1.442695
    %v1953 = vpow.pop %v1952
    %v1954 = vadd.f32 %v1953, 1.0
    %v1955 = vrcp.pop %v1954
    %v1956 = vmul.f32 1.0, %v1955
    %v1957 = vadd.f32 %v1945, %v1122
    %v1959 = vrot.slane %v1957, 2
    %v1961 = vmul.f32 %v1956, %v1959
    %v1962 = vadd.f32 %v1260, %v1961
    %v1963 = vtanh.pop %v1962
    %v1964 = vsub.f32 1.0, %v1956
    %1966 = vrot.lane.b32.xlu0 %v1963, 64
    %v1967 = vpop.permute.xlu0 %1966
    %v1969 = vmul.f32 %v1964, %v1967
    %v1970 = vrot.slane %v1869, 7
    %v1972 = vmul.f32 %v1956, %v1970
    %v1973 = vadd.f32 %v1969, %v1972
    %v1975 = vrot.slane %v1973, 6
    %1976 = vrot.lane.b32.xlu0 %v1975, 64
    %v1977 = vpop.permute.xlu0 %1976
    %v1978 = vsel %vm137, %v1977, 0
    %1980 = vmatprep.subr.mxu0 %v1106
    %1981 = vmatpush1.msra.mxu0 %v1105
    %1982 = vmatprep.subr.mxu0 %v1108
    %1983 = vmatpush1.msra.mxu0 %v1107
    %1984 = vmatprep.subr.mxu0 %v1110
    %1985 = vmatpush1.msra.mxu0 %v1109
    %1986 = vmatprep.subr.mxu0 %v1112
    %1987 = vmatpush1.msra.mxu0 %v1111
    %1988 = vmatprep.subr.mxu0 %v1114
    %1989 = vmatpush1.msra.mxu0 %v1113
    %1990 = vmatprep.subr.mxu0 %v1116
    %1991 = vmatpush1.msra.mxu0 %v1115
    %1992 = vmatprep.subr.mxu0 %v1118
    %1993 = vmatpush1.msra.mxu0 %v1117
    %1994 = vmatprep.subr.mxu0 %v1120
    %1995 = vmatpush1.msra.mxu0 %v1119
    %1996 = vmatprep.subr.mxu0 0.0
    %1997 = vmatpush1.msra.mxu0 0.0
    %1998 = vmatprep.subr.mxu0 0.0
    %1999 = vmatpush1.msra.mxu0 0.0
    %2000 = vmatprep.subr.mxu0 0.0
    %2001 = vmatpush1.msra.mxu0 0.0
    %2002 = vmatprep.subr.mxu0 0.0
    %2003 = vmatpush1.msra.mxu0 0.0
    %2004 = vmatprep.subr.mxu0 0.0
    %2005 = vmatpush1.msra.mxu0 0.0
    %2006 = vmatprep.subr.mxu0 0.0
    %2007 = vmatpush1.msra.mxu0 0.0
    %2008 = vmatprep.subr.mxu0 0.0
    %2009 = vmatpush1.msra.mxu0 0.0
    %2010 = vmatprep.subr.mxu0 0.0
    %2011 = vmatpush1.msra.mxu0 0.0
    %2012 = vmatprep.subr.mxu0 0.0
    %2013 = vmatpush1.msra.mxu0 0.0
    %2014 = vmatprep.subr.mxu0 0.0
    %2015 = vmatpush1.msra.mxu0 0.0
    %2016 = vmatprep.subr.mxu0 0.0
    %2017 = vmatpush1.msra.mxu0 0.0
    %2018 = vmatprep.subr.mxu0 0.0
    %2019 = vmatpush1.msra.mxu0 0.0
    %2020 = vmatprep.subr.mxu0 0.0
    %2021 = vmatpush1.msra.mxu0 0.0
    %2022 = vmatprep.subr.mxu0 0.0
    %2023 = vmatpush1.msra.mxu0 0.0
    %2024 = vmatprep.subr.mxu0 0.0
    %2025 = vmatpush1.msra.mxu0 0.0
    %2026 = vmatprep.subr.mxu0 0.0
    %2027 = vmatpush1.msra.mxu0 0.0
    %2028 = vmatprep.subr.mxu0 0.0
    %2029 = vmatpush1.msra.mxu0 0.0
    %2030 = vmatprep.subr.mxu0 0.0
    %2031 = vmatpush1.msra.mxu0 0.0
    %2032 = vmatprep.subr.mxu0 0.0
    %2033 = vmatpush1.msra.mxu0 0.0
    %2034 = vmatprep.subr.mxu0 0.0
    %2035 = vmatpush1.msra.mxu0 0.0
    %2036 = vmatprep.subr.mxu0 0.0
    %2037 = vmatpush1.msra.mxu0 0.0
    %2038 = vmatprep.subr.mxu0 0.0
    %2039 = vmatpush1.msra.mxu0 0.0
    %2040 = vmatprep.subr.mxu0 0.0
    %2041 = vmatpush1.msra.mxu0 0.0
    %2042 = vmatprep.subr.mxu0 0.0
    %2043 = vmatpush1.msra.mxu0 0.0
    %2044 = vmatprep.mubr.f32.mxu0 0.0
    %2045 = vmatmul.mubr.f32.gmra.mrb[0].mxu0 %v1978
    %v2046 = vpop.f32.mrb[0].mxu0
    %v2047 = vadd.f32 0.0, %v2046
    %v2048 = vpop.f32.mrb[0].mxu0
    %v2049 = vadd.f32 0.0, %v2048
    %2050 = vdwg.mxu0
    %v2052 = vrot.slane %v2047, 1
    %v2054 = vadd.f32 %v1259, %v2052
    %v2055 = vxor.u32 %v2054, 2147483648
    %v2056 = vmul.f32 %v2055, 1.442695
    %v2057 = vpow.pop %v2056
    %v2058 = vadd.f32 %v2057, 1.0
    %v2059 = vrcp.pop %v2058
    %v2060 = vmul.f32 1.0, %v2059
    %v2061 = vadd.f32 %v2049, %v1122
    %v2063 = vrot.slane %v2061, 1
    %v2065 = vmul.f32 %v2060, %v2063
    %v2066 = vadd.f32 %v1260, %v2065
    %v2067 = vtanh.pop %v2066
    %v2068 = vsub.f32 1.0, %v2060
    %2070 = vrot.lane.b32.xlu0 %v2067, 64
    %v2071 = vpop.permute.xlu0 %2070
    %v2073 = vmul.f32 %v2068, %v2071
    %v2074 = vrot.slane %v1973, 7
    %v2076 = vmul.f32 %v2060, %v2074
    %v2077 = vadd.f32 %v2073, %v2076
    %v2078 = vsel %vm230, %v1350, %v1453
    %v2079 = vsel %vm233, %v2078, %v1557
    %v2080 = vsel %vm236, %v2079, %v1661
    %v2081 = vsel %vm239, %v2080, %v1765
    %v2082 = vsel %vm242, %v2081, %v1869
    %v2083 = vsel %vm245, %v2082, %v1973
    %v2084 = vsel %vm248, %v2083, %v2077
    %v2086 = vrot.slane %v2084, 7
    %v2088 = vrot.slane %v2084, 5
    %v2090 = vrot.slane %v2084, 3
    %v2092 = vrot.slane %v2084, 1
    %v2094 = vsel %vm230, %v2086, %v2088
    %v2095 = vsel %vm233, %v2094, %v2090
    %v2096 = vsel %vm236, %v2095, %v2092
    %v2097 = vsel %vm239, %v2096, %v2086
    %v2098 = vsel %vm242, %v2097, %v2088
    %v2099 = vsel %vm245, %v2098, %v2090
    %v2100 = vsel %vm248, %v2099, %v2092
    %2101 = vrot.lane.b32.xlu0 %v2084, 64
    %v2102 = vpop.permute.xlu0 %2101
    %2105 = vrot.lane.b32.xlu0 %v2100, 64
    %v2106 = vpop.permute.xlu0 %2105
    %v2108 = vsel %vm73, %v2102, %v2106
    %v2109 = vld [vmem:[%s5] sm:$0xff]
    %v2110 = vld [vmem:[%s5 + $0x8] sm:$0xff]
    %v2111 = vld [vmem:[%s5 + $0x10] sm:$0xff]
    %v2112 = vld [vmem:[%s5 + $0x18] sm:$0xff]
    %v2113 = vld [vmem:[%s5 + $0x20] sm:$0xff]
    %v2114 = vld [vmem:[%s5 + $0x28] sm:$0xff]
    %v2115 = vld [vmem:[%s5 + $0x30] sm:$0xff]
    %v2116 = vld [vmem:[%s5 + $0x38] sm:$0xff]
    %v2117 = vld [vmem:[%s6] sm:$0x1]
    %v2119 = vlaneseq
    %v2120 = vshrl.u32 %v2119, 7
    %v2121 = vsub.s32 0, %v2120
    %v2122 = vrot.slane %v2117, %v2121
    %v2125 = vsel %vm137, %v2108, 0
    %2127 = vmatprep.subr.mxu0 0.0
    %2128 = vmatpush1.msra.mxu0 %v2109
    %2129 = vmatprep.subr.mxu0 0.0
    %2130 = vmatpush1.msra.mxu0 %v2110
    %2131 = vmatprep.subr.mxu0 0.0
    %2132 = vmatpush1.msra.mxu0 %v2111
    %2133 = vmatprep.subr.mxu0 0.0
    %2134 = vmatpush1.msra.mxu0 %v2112
    %2135 = vmatprep.subr.mxu0 0.0
    %2136 = vmatpush1.msra.mxu0 %v2113
    %2137 = vmatprep.subr.mxu0 0.0
    %2138 = vmatpush1.msra.mxu0 %v2114
    %2139 = vmatprep.subr.mxu0 0.0
    %2140 = vmatpush1.msra.mxu0 %v2115
    %2141 = vmatprep.subr.mxu0 0.0
    %2142 = vmatpush1.msra.mxu0 %v2116
    %2143 = vmatprep.subr.mxu0 0.0
    %2144 = vmatpush1.msra.mxu0 0.0
    %2145 = vmatprep.subr.mxu0 0.0
    %2146 = vmatpush1.msra.mxu0 0.0
    %2147 = vmatprep.subr.mxu0 0.0
    %2148 = vmatpush1.msra.mxu0 0.0
    %2149 = vmatprep.subr.mxu0 0.0
    %2150 = vmatpush1.msra.mxu0 0.0
    %2151 = vmatprep.subr.mxu0 0.0
    %2152 = vmatpush1.msra.mxu0 0.0
    %2153 = vmatprep.subr.mxu0 0.0
    %2154 = vmatpush1.msra.mxu0 0.0
    %2155 = vmatprep.subr.mxu0 0.0
    %2156 = vmatpush1.msra.mxu0 0.0
    %2157 = vmatprep.subr.mxu0 0.0
    %2158 = vmatpush1.msra.mxu0 0.0
    %2159 = vmatprep.subr.mxu0 0.0
    %2160 = vmatpush1.msra.mxu0 0.0
    %2161 = vmatprep.subr.mxu0 0.0
    %2162 = vmatpush1.msra.mxu0 0.0
    %2163 = vmatprep.subr.mxu0 0.0
    %2164 = vmatpush1.msra.mxu0 0.0
    %2165 = vmatprep.subr.mxu0 0.0
    %2166 = vmatpush1.msra.mxu0 0.0
    %2167 = vmatprep.subr.mxu0 0.0
    %2168 = vmatpush1.msra.mxu0 0.0
    %2169 = vmatprep.subr.mxu0 0.0
    %2170 = vmatpush1.msra.mxu0 0.0
    %2171 = vmatprep.subr.mxu0 0.0
    %2172 = vmatpush1.msra.mxu0 0.0
    %2173 = vmatprep.subr.mxu0 0.0
    %2174 = vmatpush1.msra.mxu0 0.0
    %2175 = vmatprep.subr.mxu0 0.0
    %2176 = vmatpush1.msra.mxu0 0.0
    %2177 = vmatprep.subr.mxu0 0.0
    %2178 = vmatpush1.msra.mxu0 0.0
    %2179 = vmatprep.subr.mxu0 0.0
    %2180 = vmatpush1.msra.mxu0 0.0
    %2181 = vmatprep.subr.mxu0 0.0
    %2182 = vmatpush1.msra.mxu0 0.0
    %2183 = vmatprep.subr.mxu0 0.0
    %2184 = vmatpush1.msra.mxu0 0.0
    %2185 = vmatprep.subr.mxu0 0.0
    %2186 = vmatpush1.msra.mxu0 0.0
    %2187 = vmatprep.subr.mxu0 0.0
    %2188 = vmatpush1.msra.mxu0 0.0
    %2189 = vmatprep.subr.mxu0 0.0
    %2190 = vmatpush1.msra.mxu0 0.0
    %2191 = vmatprep.mubr.f32.mxu0 0.0
    %2192 = vmatmul.mubr.f32.gmra.mrb[0].mxu0 %v2125
    %v2193 = vpop.f32.mrb[0].mxu0
    %v2194 = vadd.f32 %v2122, %v2193
    %v2195 = vpop.f32.mrb[0].mxu0
    %2196 = vdwg.mxu0
    %v2197 = vmax.f32 %v2194, 0.0
    %v2198 = vld [vmem:[%s7] sm:$0xff]
    %v2199 = vld [vmem:[%s7 + $0x8] sm:$0xff]
    %v2200 = vld [vmem:[%s7 + $0x10] sm:$0xff]
    %v2201 = vld [vmem:[%s7 + $0x18] sm:$0xff]
    %v2202 = vld [vmem:[%s8] sm:$0x1]
    %v2204 = vlaneseq
    %v2205 = vshrl.u32 %v2204, 7
    %v2206 = vsub.s32 0, %v2205
    %v2207 = vrot.slane %v2202, %v2206
    %vm2209 = vcmask 261120
    %v2211 = vsel %vm2209, %v2197, 0
    %2213 = vmatprep.subr.mxu0 0.0
    %2214 = vmatpush1.msra.mxu0 %v2198
    %2215 = vmatprep.subr.mxu0 0.0
    %2216 = vmatpush1.msra.mxu0 %v2199
    %2217 = vmatprep.subr.mxu0 0.0
    %2218 = vmatpush1.msra.mxu0 %v2200
    %2219 = vmatprep.subr.mxu0 0.0
    %2220 = vmatpush1.msra.mxu0 %v2201
    %2221 = vmatprep.subr.mxu0 0.0
    %2222 = vmatpush1.msra.mxu0 0.0
    %2223 = vmatprep.subr.mxu0 0.0
    %2224 = vmatpush1.msra.mxu0 0.0
    %2225 = vmatprep.subr.mxu0 0.0
    %2226 = vmatpush1.msra.mxu0 0.0
    %2227 = vmatprep.subr.mxu0 0.0
    %2228 = vmatpush1.msra.mxu0 0.0
    %2229 = vmatprep.subr.mxu0 0.0
    %2230 = vmatpush1.msra.mxu0 0.0
    %2231 = vmatprep.subr.mxu0 0.0
    %2232 = vmatpush1.msra.mxu0 0.0
    %2233 = vmatprep.subr.mxu0 0.0
    %2234 = vmatpush1.msra.mxu0 0.0
    %2235 = vmatprep.subr.mxu0 0.0
    %2236 = vmatpush1.msra.mxu0 0.0
    %2237 = vmatprep.subr.mxu0 0.0
    %2238 = vmatpush1.msra.mxu0 0.0
    %2239 = vmatprep.subr.mxu0 0.0
    %2240 = vmatpush1.msra.mxu0 0.0
    %2241 = vmatprep.subr.mxu0 0.0
    %2242 = vmatpush1.msra.mxu0 0.0
    %2243 = vmatprep.subr.mxu0 0.0
    %2244 = vmatpush1.msra.mxu0 0.0
    %2245 = vmatprep.subr.mxu0 0.0
    %2246 = vmatpush1.msra.mxu0 0.0
    %2247 = vmatprep.subr.mxu0 0.0
    %2248 = vmatpush1.msra.mxu0 0.0
    %2249 = vmatprep.subr.mxu0 0.0
    %2250 = vmatpush1.msra.mxu0 0.0
    %2251 = vmatprep.subr.mxu0 0.0
    %2252 = vmatpush1.msra.mxu0 0.0
    %2253 = vmatprep.subr.mxu0 0.0
    %2254 = vmatpush1.msra.mxu0 0.0
    %2255 = vmatprep.subr.mxu0 0.0
    %2256 = vmatpush1.msra.mxu0 0.0
    %2257 = vmatprep.subr.mxu0 0.0
    %2258 = vmatpush1.msra.mxu0 0.0
    %2259 = vmatprep.subr.mxu0 0.0
    %2260 = vmatpush1.msra.mxu0 0.0
    %2261 = vmatprep.subr.mxu0 0.0
    %2262 = vmatpush1.msra.mxu0 0.0
    %2263 = vmatprep.subr.mxu0 0.0
    %2264 = vmatpush1.msra.mxu0 0.0
    %2265 = vmatprep.subr.mxu0 0.0
    %2266 = vmatpush1.msra.mxu0 0.0
    %2267 = vmatprep.subr.mxu0 0.0
    %2268 = vmatpush1.msra.mxu0 0.0
    %2269 = vmatprep.subr.mxu0 0.0
    %2270 = vmatpush1.msra.mxu0 0.0
    %2271 = vmatprep.subr.mxu0 0.0
    %2272 = vmatpush1.msra.mxu0 0.0
    %2273 = vmatprep.subr.mxu0 0.0
    %2274 = vmatpush1.msra.mxu0 0.0
    %2275 = vmatprep.subr.mxu0 0.0
    %2276 = vmatpush1.msra.mxu0 0.0
    %2277 = vmatprep.mubr.f32.mxu0 0.0
    %2278 = vmatmul.mubr.f32.gmra.mrb[0].mxu0 %v2211
    %v2279 = vpop.f32.mrb[0].mxu0
    %v2280 = vadd.f32 %v2207, %v2279
    %v2281 = vpop.f32.mrb[0].mxu0
    %2282 = vdwg.mxu0
    %v2283 = vld [vmem:[%s9] sm:$0xff]
    %2284 = vset.pattern.permute.xlu0 0
    %2285 = vperm.xlu0 %2284, %v2283
    %v2286 = vpop.permute.xlu0 %2285
    %vm2287 = vcmp.eq.s32.totalorder %v71, %v2286
    %v2288 = vsel %vm2287, 1, 0
    %v2289 = vcvt.s32.f32 %v2288
    %vm2290 = vcmask 15360
    %v2291 = vsel %vm2290, %v2280, -inf
    %2292 = vmax.xlane.f32.xlu0 %v2291
    %v2293 = vpop.xlane.xlu0 %2292
    %v2294 = vsub.f32 %v2280, %v2293
    %v2295 = vmul.f32 %v2294, 1.442695
    %v2296 = vpow.pop %v2295
    %v2297 = vsel %vm2290, %v2296, 0.0
    %2298 = vadd.xlane.f32.xlu0 %v2297
    %v2299 = vpop.xlane.xlu0 %2298
    %v2300 = vlog2.pop %v2299
    %v2301 = vmul.f32 %v2300, 0.6931472
    %v2302 = vadd.f32 %v2293, %v2301
    %v2303 = vmul.f32 %v2280, %v2289
    %v2304 = vsel %vm2290, %v2303, 0.0
    %2305 = vadd.xlane.f32.xlu0 %v2304
    %v2306 = vpop.xlane.xlu0 %2305
    %v2307 = vsub.f32 %v2302, %v2306
    %vm2308 = vcmask 7168
    %v2309 = vsel %vm2308, %v2307, 0.0
    %2310 = vadd.xlane.f32.xlu0 %v2309
    %v2311 = vpop.xlane.xlu0 %2310
    %v2312 = vrot.slane %v2311, 4
    %v2313 = vadd.f32 %v2311, %v2312
    %v2314 = vrot.slane %v2313, 2
    %v2315 = vadd.f32 %v2313, %v2314
    %v2316 = vrot.slane %v2315, 1
    %v2317 = vadd.f32 %v2315, %v2316
    %s2318 = vtos %v2317
    %v2319 = vstv %s2318
    %v2320 = vrcp.pop 8.0
    %v2321 = vmul.f32 %v2319, %v2320
    %vm2322 = vcmask 0
    %2323 = vst.msk [vmem:[#allocation7] sm:$0x1] %vm2322, %v2321
    %v2324 = vld [vmem:[%s10] sm:$0x3]
    %v2326 = vsel %vm2290, %v2289, 0
    %v2329 = vsel %vm233, %v2324, 0
    %2331 = vmatprep.subr.mxu0 0.0
    %2332 = vmatpush1.msra.mxu0 %v2329
    %2333 = vmatprep.subr.mxu0 0.0
    %2334 = vmatpush1.msra.mxu0 0.0
    %2335 = vmatprep.subr.mxu0 0.0
    %2336 = vmatpush1.msra.mxu0 0.0
    %2337 = vmatprep.subr.mxu0 0.0
    %2338 = vmatpush1.msra.mxu0 0.0
    %2339 = vmatprep.subr.mxu0 0.0
    %2340 = vmatpush1.msra.mxu0 0.0
    %2341 = vmatprep.subr.mxu0 0.0
    %2342 = vmatpush1.msra.mxu0 0.0
    %2343 = vmatprep.subr.mxu0 0.0
    %2344 = vmatpush1.msra.mxu0 0.0
    %2345 = vmatprep.subr.mxu0 0.0
    %2346 = vmatpush1.msra.mxu0 0.0
    %2347 = vmatprep.subr.mxu0 0.0
    %2348 = vmatpush1.msra.mxu0 0.0
    %2349 = vmatprep.subr.mxu0 0.0
    %2350 = vmatpush1.msra.mxu0 0.0
    %2351 = vmatprep.subr.mxu0 0.0
    %2352 = vmatpush1.msra.mxu0 0.0
    %2353 = vmatprep.subr.mxu0 0.0
    %2354 = vmatpush1.msra.mxu0 0.0
    %2355 = vmatprep.subr.mxu0 0.0
    %2356 = vmatpush1.msra.mxu0 0.0
    %2357 = vmatprep.subr.mxu0 0.0
    %2358 = vmatpush1.msra.mxu0 0.0
    %2359 = vmatprep.subr.mxu0 0.0
    %2360 = vmatpush1.msra.mxu0 0.0
    %2361 = vmatprep.subr.mxu0 0.0
    %2362 = vmatpush1.msra.mxu0 0.0
    %2363 = vmatprep.subr.mxu0 0.0
    %2364 = vmatpush1.msra.mxu0 0.0
    %2365 = vmatprep.subr.mxu0 0.0
    %2366 = vmatpush1.msra.mxu0 0.0
    %2367 = vmatprep.subr.mxu0 0.0
    %2368 = vmatpush1.msra.mxu0 0.0
    %2369 = vmatprep.subr.mxu0 0.0
    %2370 = vmatpush1.msra.mxu0 0.0
    %2371 = vmatprep.subr.mxu0 0.0
    %2372 = vmatpush1.msra.mxu0 0.0
    %2373 = vmatprep.subr.mxu0 0.0
    %2374 = vmatpush1.msra.mxu0 0.0
    %2375 = vmatprep.subr.mxu0 0.0
    %2376 = vmatpush1.msra.mxu0 0.0
    %2377 = vmatprep.subr.mxu0 0.0
    %2378 = vmatpush1.msra.mxu0 0.0
    %2379 = vmatprep.subr.mxu0 0.0
    %2380 = vmatpush1.msra.mxu0 0.0
    %2381 = vmatprep.subr.mxu0 0.0
    %2382 = vmatpush1.msra.mxu0 0.0
    %2383 = vmatprep.subr.mxu0 0.0
    %2384 = vmatpush1.msra.mxu0 0.0
    %2385 = vmatprep.subr.mxu0 0.0
    %2386 = vmatpush1.msra.mxu0 0.0
    %2387 = vmatprep.subr.mxu0 0.0
    %2388 = vmatpush1.msra.mxu0 0.0
    %2389 = vmatprep.subr.mxu0 0.0
    %2390 = vmatpush1.msra.mxu0 0.0
    %2391 = vmatprep.subr.mxu0 0.0
    %2392 = vmatpush1.msra.mxu0 0.0
    %2393 = vmatprep.subr.mxu0 0.0
    %2394 = vmatpush1.msra.mxu0 0.0
    %2395 = vmatprep.mubr.f32.mxu0 0.0
    %2396 = vmatmul.mubr.f32.gmra.mrb[0].mxu0 %v2326
    %v2397 = vpop.f32.mrb[0].mxu0
    %v2398 = vadd.f32 0.0, %v2397
    %v2399 = vpop.f32.mrb[0].mxu0
    %2400 = vdwg.mxu0
    %vm2401 = vcmask 64512
    %2402 = vst.msk [vmem:[#allocation8] sm:$0xff] %vm2401, %v2398
    // Predicated region
    $region54: #{cl_specific_rnn_forward.1} parent=1 // pred_check
      _
    $region55: #{cl_specific_rnn_forward.1} parent=1 // pred_check_branch
      %2404 = sbr.rel (0) target = $region57
    $region56: #{cl_specific_rnn_forward.1} parent=1 // pred_region
      %s2406 = ssub.s32 16, 16
      %2407 = vsyncadd [#allocation4], %s2406
      %s2409 = sshll.u32 [#allocation7], 4
      %s2410 = int_to_ptr.vmem [resolvable:$true] %s2409
      %2412 = dma.vmem_to_hbm [thread:$0]  %s2410, 16, %s11, [#allocation4]
    $region57: #{cl_specific_rnn_forward.1} parent=1 // pred_fallthru
      _
    // Predicated region
    $region58: #{cl_specific_rnn_forward.1} parent=1 // pred_check
      _
    $region59: #{cl_specific_rnn_forward.1} parent=1 // pred_check_branch
      %2414 = sbr.rel (0) target = $region61
    $region60: #{cl_specific_rnn_forward.1} parent=1 // pred_region
      %s2416 = ssub.s32 128, 128
      %2417 = vsyncadd [#allocation9], %s2416
      %s2419 = sshll.u32 [#allocation8], 4
      %s2420 = int_to_ptr.vmem [resolvable:$true] %s2419
      %2422 = dma.vmem_to_hbm [thread:$0]  %s2420, 128, %s12, [#allocation9]
    $region61: #{cl_specific_rnn_forward.1} parent=1 // pred_fallthru
      _
    // Predicated region
    $region62: #{cl_specific_rnn_forward.1} parent=1 // pred_check
      _
    $region63: #{cl_specific_rnn_forward.1} parent=1 // pred_check_branch
      %2424 = sbr.rel (0) target = $region65
    $region64: #{cl_specific_rnn_forward.1} parent=1 // pred_region
      %2425 = dma.done [#allocation4], 16
    $region65: #{cl_specific_rnn_forward.1} parent=1 // pred_fallthru
      _
    // Predicated region
    $region66: #{cl_specific_rnn_forward.1} parent=1 // pred_check
      _
    $region67: #{cl_specific_rnn_forward.1} parent=1 // pred_check_branch
      %2427 = sbr.rel (0) target = $region69
    $region68: #{cl_specific_rnn_forward.1} parent=1 // pred_region
      %2428 = dma.done [#allocation9], 128
    $region69: #{cl_specific_rnn_forward.1} parent=1 // pred_fallthru
      _
    %2429 = vsyncpa [#allocation3], 1
    %2430 = vsyncpa [#allocation6], 1
    %2431 = vsyncpa [#allocation4], 1
    %2432 = vsyncpa [#allocation9], 1

</llo_original>
